<compile_context>
chip_gen: v5e
topology: v5e:2x2
jax: 0.10.0
libtpu: 0.0.40
codegen_flags: <defaults>
</compile_context>

<pallas_src>
import functools

import jax
import jax.numpy as jnp
from jax import lax
from jax.experimental import pallas as pl
from jax.experimental.pallas import tpu as pltpu


ROWS_PER_TILE = 8          # output rows per grid step (sublane quantum)
LANE = 128                 # TPU lane width


def _round_up(x, m):
    return ((x + m - 1) // m) * m


# ---------------------------------------------------------------------------
# Kernel 1: fused conv3x3(+bias) + ReLU + global average pool
#   x_ref   : (Hrows, Cin, Wq) bf16   padded input rows of this batch element (resident)
#   w_ref   : (9, Cf, Cin)     bf16   conv taps, tap k = 3*di + dj
#   s1_ref  : (Wq, Wq)         f32    exact shift-left-by-1 matrix (0/1 entries)
#   b_ref   : (Cf, 1)          f32    conv bias
#   m_ref   : (TH, Wq)         f32    validity mask for this row tile
#   out_ref : (1, Cf, 1)       f32    pooled features for this batch element
#   acc_ref : (Cf, 1)          f32    VMEM accumulator (persists across row tiles)
# ---------------------------------------------------------------------------
def _conv3x3_relu_pool_kernel(x_ref, w_ref, s1_ref, b_ref, m_ref,
                              out_ref, acc_ref, *, rows_per_tile, inv_hw):
    s = pl.program_id(1)

    @pl.when(s == 0)
    def _init():
        acc_ref[...] = jnp.zeros_like(acc_ref)

    row0 = s * rows_per_tile
    n_feat = w_ref.shape[1]
    wq = x_ref.shape[-1]

    bias = b_ref[...]            # (Cf, 1)
    mask = m_ref[...]            # (TH, Wq)
    shift1 = s1_ref[...]         # (A @ shift1)[:, w] == A[:, w + 1]

    dn = (((1,), (0,)), ((), ()))  # plain (M, K) @ (K, N)

    partial = jnp.zeros((n_feat, 1), jnp.float32)
    for t in range(rows_per_tile):
        # A_dj[:, w] = sum_{di, c} W[di, dj, c, :] * x_pad[row0 + t + di, c, w]
        a0 = jnp.zeros((n_feat, wq), jnp.float32)
        a1 = jnp.zeros((n_feat, wq), jnp.float32)
        a2 = jnp.zeros((n_feat, wq), jnp.float32)
        for di in range(3):
            xrow = x_ref[row0 + t + di]           # (Cin, Wq) bf16, dynamic leading index
            a0 = a0 + lax.dot_general(w_ref[3 * di + 0], xrow, dn,
                                      preferred_element_type=jnp.float32)
            a1 = a1 + lax.dot_general(w_ref[3 * di + 1], xrow, dn,
                                      preferred_element_type=jnp.float32)
            a2 = a2 + lax.dot_general(w_ref[3 * di + 2], xrow, dn,
                                      preferred_element_type=jnp.float32)
        # conv output at column w is A0[:, w] + A1[:, w+1] + A2[:, w+2]; realize the
        # +1/+2 column shifts exactly via the 0/1 shift matrix on the MXU.
        inner = a1 + lax.dot_general(a2, shift1, dn, preferred_element_type=jnp.float32)
        pre = a0 + lax.dot_general(inner, shift1, dn, preferred_element_type=jnp.float32)

        act = jnp.maximum(pre + bias, 0.0)        # conv + bias + ReLU, f32
        act = act * mask[t:t + 1, :]              # zero out padded rows / columns
        partial = partial + jnp.sum(act, axis=1, keepdims=True)

    acc_ref[...] += partial

    @pl.when(s == pl.num_programs(1) - 1)
    def _finalize():
        out_ref[...] = (acc_ref[...] * inv_hw).reshape(1, n_feat, 1).astype(out_ref.dtype)


def conv3x3_relu_pool(x_nchw, conv_w_hwio, conv_b):
    """NCHW image -> (B, Cf) pooled ReLU(conv3x3(x) + b); conv/ReLU/pool fused in Pallas."""
    B, Cin, H, W = x_nchw.shape
    Cf = conv_w_hwio.shape[-1]
    Hp, Wp = H + 2, W + 2
    Wq = _round_up(Wp, LANE)
    th = ROWS_PER_TILE
    h_ceil = _round_up(H, th)
    hrows = h_ceil + 2

    # padded input in (B, rows, Cin, lane-padded width) layout, bf16
    x_pad = jnp.pad(x_nchw, ((0, 0), (0, 0), (1, 1), (1, 1)))
    x_pad = jnp.pad(x_pad, ((0, 0), (0, 0), (0, hrows - Hp), (0, Wq - Wp)))
    x_dev = jnp.transpose(x_pad, (0, 2, 1, 3)).astype(jnp.bfloat16)      # (B, hrows, Cin, Wq)

    # conv taps (9, Cf, Cin) bf16, bias (Cf, 1) f32
    w9 = jnp.transpose(conv_w_hwio, (0, 1, 3, 2)).reshape(9, Cf, Cin).astype(jnp.bfloat16)
    bias_col = conv_b.reshape(Cf, 1).astype(jnp.float32)

    # exact shift-left-by-1 matrix (ones at [w+1, w]) and validity mask
    shift1 = jnp.eye(Wq, k=-1, dtype=jnp.float32)                        # (Wq, Wq)
    mask = ((jnp.arange(h_ceil)[:, None] < H) &
            (jnp.arange(Wq)[None, :] < W)).astype(jnp.float32)           # (h_ceil, Wq)

    kernel = functools.partial(_conv3x3_relu_pool_kernel,
                               rows_per_tile=th, inv_hw=1.0 / float(H * W))
    pooled = pl.pallas_call(
        kernel,
        out_shape=jax.ShapeDtypeStruct((B, Cf, 1), jnp.float32),
        grid=(B, h_ceil // th),
        in_specs=[
            pl.BlockSpec((None, hrows, Cin, Wq), lambda b, s: (b, 0, 0, 0)),
            pl.BlockSpec((9, Cf, Cin), lambda b, s: (0, 0, 0)),
            pl.BlockSpec((Wq, Wq), lambda b, s: (0, 0)),
            pl.BlockSpec((Cf, 1), lambda b, s: (0, 0)),
            pl.BlockSpec((th, Wq), lambda b, s: (s, 0)),
        ],
        out_specs=pl.BlockSpec((1, Cf, 1), lambda b, s: (b, 0, 0)),
        scratch_shapes=[pltpu.VMEM((Cf, 1), jnp.float32)],
        compiler_params=pltpu.CompilerParams(
            dimension_semantics=("parallel", "arbitrary"),
            vmem_limit_bytes=32 * 1024 * 1024,
        ),
    )(x_dev, w9, shift1, bias_col, mask)
    return pooled.reshape(B, Cf)


# ---------------------------------------------------------------------------
# Kernel 2: Linear head + (MSE | MAE) loss on the tiny pooled tensor
# ---------------------------------------------------------------------------
def _head_loss_kernel(p_ref, w_ref, b_ref, t_ref, logits_ref, loss_ref,
                      *, loss_type, inv_cnt):
    logits = jnp.dot(p_ref[...], w_ref[...],
                     preferred_element_type=jnp.float32) + b_ref[...]
    logits_ref[...] = logits.astype(logits_ref.dtype)
    diff = logits - t_ref[...]            # padded columns are exactly zero
    if loss_type == "mse":
        loss_ref[0, 0] = jnp.sum(diff * diff) * inv_cnt
    else:  # "mae"
        loss_ref[0, 0] = jnp.sum(jnp.abs(diff)) * inv_cnt


def head_and_loss(pooled, head_w, head_b, targets, loss_type="mse"):
    B, Cf = pooled.shape
    n_classes = head_w.shape[1]
    n_pad = _round_up(n_classes, LANE)    # lane-dense logits store
    w_pad = jnp.zeros((Cf, n_pad), jnp.float32).at[:, :n_classes].set(head_w)
    b_pad = jnp.zeros((1, n_pad), jnp.float32).at[0, :n_classes].set(head_b)
    t_pad = jnp.zeros((B, n_pad), jnp.float32).at[:, :n_classes].set(targets)

    kernel = functools.partial(_head_loss_kernel, loss_type=loss_type,
                               inv_cnt=1.0 / float(B * n_classes))
    logits_pad, loss = pl.pallas_call(
        kernel,
        out_shape=(jax.ShapeDtypeStruct((B, n_pad), jnp.float32),
                   jax.ShapeDtypeStruct((1, 1), jnp.float32)),
        grid=(1,),
        in_specs=[
            pl.BlockSpec((B, Cf), lambda i: (0, 0)),
            pl.BlockSpec((Cf, n_pad), lambda i: (0, 0)),
            pl.BlockSpec((1, n_pad), lambda i: (0, 0)),
            pl.BlockSpec((B, n_pad), lambda i: (0, 0)),
        ],
        out_specs=(
            pl.BlockSpec((B, n_pad), lambda i: (0, 0)),
            pl.BlockSpec(memory_space=pltpu.MemorySpace.SMEM),
        ),
        compiler_params=pltpu.CompilerParams(dimension_semantics=("arbitrary",)),
    )(pooled, w_pad, b_pad, t_pad)
    return logits_pad[:, :n_classes], loss[0, 0]


# ---------------------------------------------------------------------------
# Net.forward equivalent (eval mode, calculate_loss=True)
# ---------------------------------------------------------------------------
def net_forward(params, batch, loss_type="mse"):
    x_nchw = batch["input"]                       # (B, Cin, H, W), PyTorch layout
    targets = batch["target"].astype(jnp.float32)

    # backbone stem (conv3x3 + ReLU) fused with AdaptiveAvgPool2d(1)
    pooled = conv3x3_relu_pool(x_nchw, params["conv_w"], params["conv_b"])

    # TODO(synk): cfg.drop_out dropout is training-only; eval forward is identity.
    logits, loss = head_and_loss(pooled, params["head_w"], params["head_b"],
                                 targets, loss_type=loss_type)
    return {"logits": logits, "target": targets, "loss": loss}


if __name__ == "__main__":
    B, Cin, H, W = 2, 4, 16, 16
    Cf = 32            # backbone.num_features
    n_classes = 3      # len(cfg.classes)

    key = jax.random.PRNGKey(0)
    k_x, k_t, k_cw, k_cb, k_hw, k_hb = jax.random.split(key, 6)
    x = jax.random.normal(k_x, (B, Cin, H, W), jnp.float32)
    targets = jax.random.normal(k_t, (B, n_classes), jnp.float32)
    params = {
        "conv_w": jax.random.normal(k_cw, (3, 3, Cin, Cf), jnp.float32) * 0.1,  # HWIO
        "conv_b": jax.random.normal(k_cb, (Cf,), jnp.float32) * 0.1,
        "head_w": jax.random.normal(k_hw, (Cf, n_classes), jnp.float32) * 0.1,
        "head_b": jax.random.normal(k_hb, (n_classes,), jnp.float32) * 0.1,
    }
    batch = {"input": x, "target": targets}

    outputs = net_forward(params, batch, loss_type="mse")
    jax.block_until_ready(outputs["loss"])
    jax.block_until_ready(outputs["logits"])
    assert outputs["logits"].shape == (B, n_classes)
    assert outputs["loss"].shape == ()

    # correctness check against a pure-JAX f32 reference (loose tol for bf16 conv inputs)
    feats = lax.conv_general_dilated(
        x, params["conv_w"], window_strides=(1, 1), padding="SAME",
        dimension_numbers=("NCHW", "HWIO", "NCHW"))
    feats = jnp.maximum(feats + params["conv_b"][None, :, None, None], 0.0)
    ref_pooled = feats.mean(axis=(2, 3))
    ref_logits = ref_pooled @ params["head_w"] + params["head_b"]
    ref_loss = jnp.mean((ref_logits - targets) ** 2)
    assert jnp.allclose(outputs["logits"], ref_logits, rtol=5e-2, atol=5e-2)
    assert jnp.allclose(outputs["loss"], ref_loss, rtol=5e-2, atol=5e-2)

    print("KERNEL_OK")
</pallas_src>

<mosaic_0001>
module attributes {stable_mosaic.version = 11 : i64} {
  func.func @_conv3x3_relu_pool_kernel(%arg0: i32, %arg1: i32, %arg2: memref<1x18x4x128xbf16, #tpu.memory_space<vmem>>, %arg3: memref<9x32x4xbf16, #tpu.memory_space<vmem>>, %arg4: memref<128x128xf32, #tpu.memory_space<vmem>>, %arg5: memref<32x1xf32, #tpu.memory_space<vmem>>, %arg6: memref<8x128xf32, #tpu.memory_space<vmem>>, %arg7: memref<1x32x1xf32, #tpu.memory_space<vmem>>, %arg8: memref<32x1xf32, #tpu.memory_space<vmem>>) attributes {dimension_semantics = [#tpu.dimension_semantics<parallel>, #tpu.dimension_semantics<arbitrary>], iteration_bounds = array<i64: 2, 2>, scalar_prefetch = 0 : i64, scratch_operands = 1 : i64, tpu.core_type = #tpu.core_type<tc>, window_params = [{transform_indices = @transform_0, window_bounds = array<i64: 1, 18, 4, 128>}, {pipeline_mode = #tpu.pipeline_mode<synchronous>, transform_indices = @transform_1, window_bounds = array<i64: 9, 32, 4>}, {pipeline_mode = #tpu.pipeline_mode<synchronous>, transform_indices = @transform_2, window_bounds = array<i64: 128, 128>}, {pipeline_mode = #tpu.pipeline_mode<synchronous>, transform_indices = @transform_3, window_bounds = array<i64: 32, 1>}, {transform_indices = @transform_4, window_bounds = array<i64: 8, 128>}, {transform_indices = @transform_5, window_bounds = array<i64: 1, 32, 1>}]} {
    %c0_i32 = arith.constant 0 : i32
    %0 = arith.cmpi eq, %arg1, %c0_i32 : i32
    %1 = arith.extui %0 : i1 to i32
    %c0_i32_0 = arith.constant 0 : i32
    %2 = arith.cmpi ne, %1, %c0_i32_0 : i32
    scf.if %2 {
      %cst_461 = arith.constant 0.000000e+00 : f32
      %558 = vector.broadcast %cst_461 : f32 to vector<32x1xf32>
      %c0_462 = arith.constant 0 : index
      %c0_463 = arith.constant 0 : index
      %559 = vector.load %arg8[%c0_462, %c0_463] : memref<32x1xf32, #tpu.memory_space<vmem>>, vector<32x1xf32>
      tpu.vector_store %arg8[%c0_462, %c0_463], %558 {strides = array<i32>} : memref<32x1xf32, #tpu.memory_space<vmem>>, vector<32x1xf32>,
    } else {
    }
    %c8_i32 = arith.constant 8 : i32
    %3 = arith.muli %arg1, %c8_i32 : i32
    %c0 = arith.constant 0 : index
    %c0_1 = arith.constant 0 : index
    %4 = vector.load %arg5[%c0, %c0_1] : memref<32x1xf32, #tpu.memory_space<vmem>>, vector<32x1xf32>
    %c0_2 = arith.constant 0 : index
    %c0_3 = arith.constant 0 : index
    %5 = vector.load %arg6[%c0_2, %c0_3] : memref<8x128xf32, #tpu.memory_space<vmem>>, vector<8x128xf32>
    %c0_4 = arith.constant 0 : index
    %c0_5 = arith.constant 0 : index
    %6 = vector.load %arg4[%c0_4, %c0_5] : memref<128x128xf32, #tpu.memory_space<vmem>>, vector<128x128xf32>
    %cst = arith.constant 0.000000e+00 : f32
    %7 = vector.broadcast %cst : f32 to vector<32x1xf32>
    %cst_6 = arith.constant 0.000000e+00 : f32
    %8 = vector.broadcast %cst_6 : f32 to vector<32x128xf32>
    %cst_7 = arith.constant 0.000000e+00 : f32
    %9 = vector.broadcast %cst_7 : f32 to vector<32x128xf32>
    %cst_8 = arith.constant 0.000000e+00 : f32
    %10 = vector.broadcast %cst_8 : f32 to vector<32x128xf32>
    %c0_i32_9 = arith.constant 0 : i32
    %11 = arith.addi %3, %c0_i32_9 : i32
    %c0_i32_10 = arith.constant 0 : i32
    %12 = arith.addi %11, %c0_i32_10 : i32
    %c0_11 = arith.constant 0 : index
    %13 = arith.index_cast %12 : i32 to index
    %c0_12 = arith.constant 0 : index
    %c0_13 = arith.constant 0 : index
    %14 = vector.load %arg2[%c0_11, %13, %c0_12, %c0_13] : memref<1x18x4x128xbf16, #tpu.memory_space<vmem>>, vector<1x1x4x128xbf16>
    %15 = vector.shape_cast %14 : vector<1x1x4x128xbf16> to vector<4x128xbf16>
    %c0_14 = arith.constant 0 : index
    %c0_15 = arith.constant 0 : index
    %c0_16 = arith.constant 0 : index
    %16 = vector.load %arg3[%c0_14, %c0_15, %c0_16] : memref<9x32x4xbf16, #tpu.memory_space<vmem>>, vector<1x32x4xbf16>
    %17 = vector.shape_cast %16 : vector<1x32x4xbf16> to vector<32x4xbf16>
    %cst_17 = arith.constant dense<0.000000e+00> : vector<32x128xf32>
    %18 = tpu.matmul %17, %15, %cst_17 {dimension_numbers = #tpu.dot_dimension_numbers<[1], [0], [0], [1], [0, 0, 1, 1], [], []>} : vector<32x4xbf16>, vector<4x128xbf16>, vector<32x128xf32> -> vector<32x128xf32>
    %19 = arith.addf %8, %18 : vector<32x128xf32>
    %c1 = arith.constant 1 : index
    %c0_18 = arith.constant 0 : index
    %c0_19 = arith.constant 0 : index
    %20 = vector.load %arg3[%c1, %c0_18, %c0_19] : memref<9x32x4xbf16, #tpu.memory_space<vmem>>, vector<1x32x4xbf16>
    %21 = vector.shape_cast %20 : vector<1x32x4xbf16> to vector<32x4xbf16>
    %cst_20 = arith.constant dense<0.000000e+00> : vector<32x128xf32>
    %22 = tpu.matmul %21, %15, %cst_20 {dimension_numbers = #tpu.dot_dimension_numbers<[1], [0], [0], [1], [0, 0, 1, 1], [], []>} : vector<32x4xbf16>, vector<4x128xbf16>, vector<32x128xf32> -> vector<32x128xf32>
    %23 = arith.addf %9, %22 : vector<32x128xf32>
    %c2 = arith.constant 2 : index
    %c0_21 = arith.constant 0 : index
    %c0_22 = arith.constant 0 : index
    %24 = vector.load %arg3[%c2, %c0_21, %c0_22] : memref<9x32x4xbf16, #tpu.memory_space<vmem>>, vector<1x32x4xbf16>
    %25 = vector.shape_cast %24 : vector<1x32x4xbf16> to vector<32x4xbf16>
    %cst_23 = arith.constant dense<0.000000e+00> : vector<32x128xf32>
    %26 = tpu.matmul %25, %15, %cst_23 {dimension_numbers = #tpu.dot_dimension_numbers<[1], [0], [0], [1], [0, 0, 1, 1], [], []>} : vector<32x4xbf16>, vector<4x128xbf16>, vector<32x128xf32> -> vector<32x128xf32>
    %27 = arith.addf %10, %26 : vector<32x128xf32>
    %c0_i32_24 = arith.constant 0 : i32
    %28 = arith.addi %3, %c0_i32_24 : i32
    %c1_i32 = arith.constant 1 : i32
    %29 = arith.addi %28, %c1_i32 : i32
    %c0_25 = arith.constant 0 : index
    %30 = arith.index_cast %29 : i32 to index
    %c0_26 = arith.constant 0 : index
    %c0_27 = arith.constant 0 : index
    %31 = vector.load %arg2[%c0_25, %30, %c0_26, %c0_27] : memref<1x18x4x128xbf16, #tpu.memory_space<vmem>>, vector<1x1x4x128xbf16>
    %32 = vector.shape_cast %31 : vector<1x1x4x128xbf16> to vector<4x128xbf16>
    %c3 = arith.constant 3 : index
    %c0_28 = arith.constant 0 : index
    %c0_29 = arith.constant 0 : index
    %33 = vector.load %arg3[%c3, %c0_28, %c0_29] : memref<9x32x4xbf16, #tpu.memory_space<vmem>>, vector<1x32x4xbf16>
    %34 = vector.shape_cast %33 : vector<1x32x4xbf16> to vector<32x4xbf16>
    %cst_30 = arith.constant dense<0.000000e+00> : vector<32x128xf32>
    %35 = tpu.matmul %34, %32, %cst_30 {dimension_numbers = #tpu.dot_dimension_numbers<[1], [0], [0], [1], [0, 0, 1, 1], [], []>} : vector<32x4xbf16>, vector<4x128xbf16>, vector<32x128xf32> -> vector<32x128xf32>
    %36 = arith.addf %19, %35 : vector<32x128xf32>
    %c4 = arith.constant 4 : index
    %c0_31 = arith.constant 0 : index
    %c0_32 = arith.constant 0 : index
    %37 = vector.load %arg3[%c4, %c0_31, %c0_32] : memref<9x32x4xbf16, #tpu.memory_space<vmem>>, vector<1x32x4xbf16>
    %38 = vector.shape_cast %37 : vector<1x32x4xbf16> to vector<32x4xbf16>
    %cst_33 = arith.constant dense<0.000000e+00> : vector<32x128xf32>
    %39 = tpu.matmul %38, %32, %cst_33 {dimension_numbers = #tpu.dot_dimension_numbers<[1], [0], [0], [1], [0, 0, 1, 1], [], []>} : vector<32x4xbf16>, vector<4x128xbf16>, vector<32x128xf32> -> vector<32x128xf32>
    %40 = arith.addf %23, %39 : vector<32x128xf32>
    %c5 = arith.constant 5 : index
    %c0_34 = arith.constant 0 : index
    %c0_35 = arith.constant 0 : index
    %41 = vector.load %arg3[%c5, %c0_34, %c0_35] : memref<9x32x4xbf16, #tpu.memory_space<vmem>>, vector<1x32x4xbf16>
    %42 = vector.shape_cast %41 : vector<1x32x4xbf16> to vector<32x4xbf16>
    %cst_36 = arith.constant dense<0.000000e+00> : vector<32x128xf32>
    %43 = tpu.matmul %42, %32, %cst_36 {dimension_numbers = #tpu.dot_dimension_numbers<[1], [0], [0], [1], [0, 0, 1, 1], [], []>} : vector<32x4xbf16>, vector<4x128xbf16>, vector<32x128xf32> -> vector<32x128xf32>
    %44 = arith.addf %27, %43 : vector<32x128xf32>
    %c0_i32_37 = arith.constant 0 : i32
    %45 = arith.addi %3, %c0_i32_37 : i32
    %c2_i32 = arith.constant 2 : i32
    %46 = arith.addi %45, %c2_i32 : i32
    %c0_38 = arith.constant 0 : index
    %47 = arith.index_cast %46 : i32 to index
    %c0_39 = arith.constant 0 : index
    %c0_40 = arith.constant 0 : index
    %48 = vector.load %arg2[%c0_38, %47, %c0_39, %c0_40] : memref<1x18x4x128xbf16, #tpu.memory_space<vmem>>, vector<1x1x4x128xbf16>
    %49 = vector.shape_cast %48 : vector<1x1x4x128xbf16> to vector<4x128xbf16>
    %c6 = arith.constant 6 : index
    %c0_41 = arith.constant 0 : index
    %c0_42 = arith.constant 0 : index
    %50 = vector.load %arg3[%c6, %c0_41, %c0_42] : memref<9x32x4xbf16, #tpu.memory_space<vmem>>, vector<1x32x4xbf16>
    %51 = vector.shape_cast %50 : vector<1x32x4xbf16> to vector<32x4xbf16>
    %cst_43 = arith.constant dense<0.000000e+00> : vector<32x128xf32>
    %52 = tpu.matmul %51, %49, %cst_43 {dimension_numbers = #tpu.dot_dimension_numbers<[1], [0], [0], [1], [0, 0, 1, 1], [], []>} : vector<32x4xbf16>, vector<4x128xbf16>, vector<32x128xf32> -> vector<32x128xf32>
    %53 = arith.addf %36, %52 : vector<32x128xf32>
    %c7 = arith.constant 7 : index
    %c0_44 = arith.constant 0 : index
    %c0_45 = arith.constant 0 : index
    %54 = vector.load %arg3[%c7, %c0_44, %c0_45] : memref<9x32x4xbf16, #tpu.memory_space<vmem>>, vector<1x32x4xbf16>
    %55 = vector.shape_cast %54 : vector<1x32x4xbf16> to vector<32x4xbf16>
    %cst_46 = arith.constant dense<0.000000e+00> : vector<32x128xf32>
    %56 = tpu.matmul %55, %49, %cst_46 {dimension_numbers = #tpu.dot_dimension_numbers<[1], [0], [0], [1], [0, 0, 1, 1], [], []>} : vector<32x4xbf16>, vector<4x128xbf16>, vector<32x128xf32> -> vector<32x128xf32>
    %57 = arith.addf %40, %56 : vector<32x128xf32>
    %c8 = arith.constant 8 : index
    %c0_47 = arith.constant 0 : index
    %c0_48 = arith.constant 0 : index
    %58 = vector.load %arg3[%c8, %c0_47, %c0_48] : memref<9x32x4xbf16, #tpu.memory_space<vmem>>, vector<1x32x4xbf16>
    %59 = vector.shape_cast %58 : vector<1x32x4xbf16> to vector<32x4xbf16>
    %cst_49 = arith.constant dense<0.000000e+00> : vector<32x128xf32>
    %60 = tpu.matmul %59, %49, %cst_49 {dimension_numbers = #tpu.dot_dimension_numbers<[1], [0], [0], [1], [0, 0, 1, 1], [], []>} : vector<32x4xbf16>, vector<4x128xbf16>, vector<32x128xf32> -> vector<32x128xf32>
    %61 = arith.addf %44, %60 : vector<32x128xf32>
    %cst_50 = arith.constant dense<0.000000e+00> : vector<32x128xf32>
    %62 = tpu.matmul %61, %6, %cst_50 {dimension_numbers = #tpu.dot_dimension_numbers<[1], [0], [0], [1], [0, 0, 1, 1], [], []>} : vector<32x128xf32>, vector<128x128xf32>, vector<32x128xf32> -> vector<32x128xf32>
    %63 = arith.addf %57, %62 : vector<32x128xf32>
    %cst_51 = arith.constant dense<0.000000e+00> : vector<32x128xf32>
    %64 = tpu.matmul %63, %6, %cst_51 {dimension_numbers = #tpu.dot_dimension_numbers<[1], [0], [0], [1], [0, 0, 1, 1], [], []>} : vector<32x128xf32>, vector<128x128xf32>, vector<32x128xf32> -> vector<32x128xf32>
    %65 = arith.addf %53, %64 : vector<32x128xf32>
    %66 = vector.broadcast %4 : vector<32x1xf32> to vector<32x128xf32>
    %67 = arith.addf %65, %66 : vector<32x128xf32>
    %cst_52 = arith.constant 0.000000e+00 : f32
    %68 = vector.broadcast %cst_52 : f32 to vector<32x128xf32>
    %69 = arith.maximumf %67, %68 : vector<32x128xf32>
    %70 = vector.extract_strided_slice %5 {offsets = [0, 0], sizes = [1, 128], strides = [1, 1]} : vector<8x128xf32> to vector<1x128xf32>
    %71 = vector.broadcast %70 : vector<1x128xf32> to vector<32x128xf32>
    %72 = arith.mulf %69, %71 : vector<32x128xf32>
    %cst_53 = arith.constant dense<0.000000e+00> : vector<32xf32>
    %73 = vector.multi_reduction <add>, %72, %cst_53 [1] : vector<32x128xf32> to vector<32xf32>
    %74 = vector.shape_cast %73 : vector<32xf32> to vector<32x1xf32>
    %75 = arith.addf %7, %74 : vector<32x1xf32>
    %cst_54 = arith.constant 0.000000e+00 : f32
    %76 = vector.broadcast %cst_54 : f32 to vector<32x128xf32>
    %cst_55 = arith.constant 0.000000e+00 : f32
    %77 = vector.broadcast %cst_55 : f32 to vector<32x128xf32>
    %cst_56 = arith.constant 0.000000e+00 : f32
    %78 = vector.broadcast %cst_56 : f32 to vector<32x128xf32>
    %c1_i32_57 = arith.constant 1 : i32
    %79 = arith.addi %3, %c1_i32_57 : i32
    %c0_i32_58 = arith.constant 0 : i32
    %80 = arith.addi %79, %c0_i32_58 : i32
    %c0_59 = arith.constant 0 : index
    %81 = arith.index_cast %80 : i32 to index
    %c0_60 = arith.constant 0 : index
    %c0_61 = arith.constant 0 : index
    %82 = vector.load %arg2[%c0_59, %81, %c0_60, %c0_61] : memref<1x18x4x128xbf16, #tpu.memory_space<vmem>>, vector<1x1x4x128xbf16>
    %83 = vector.shape_cast %82 : vector<1x1x4x128xbf16> to vector<4x128xbf16>
    %c0_62 = arith.constant 0 : index
    %c0_63 = arith.constant 0 : index
    %c0_64 = arith.constant 0 : index
    %84 = vector.load %arg3[%c0_62, %c0_63, %c0_64] : memref<9x32x4xbf16, #tpu.memory_space<vmem>>, vector<1x32x4xbf16>
    %85 = vector.shape_cast %84 : vector<1x32x4xbf16> to vector<32x4xbf16>
    %cst_65 = arith.constant dense<0.000000e+00> : vector<32x128xf32>
    %86 = tpu.matmul %85, %83, %cst_65 {dimension_numbers = #tpu.dot_dimension_numbers<[1], [0], [0], [1], [0, 0, 1, 1], [], []>} : vector<32x4xbf16>, vector<4x128xbf16>, vector<32x128xf32> -> vector<32x128xf32>
    %87 = arith.addf %76, %86 : vector<32x128xf32>
    %c1_66 = arith.constant 1 : index
    %c0_67 = arith.constant 0 : index
    %c0_68 = arith.constant 0 : index
    %88 = vector.load %arg3[%c1_66, %c0_67, %c0_68] : memref<9x32x4xbf16, #tpu.memory_space<vmem>>, vector<1x32x4xbf16>
    %89 = vector.shape_cast %88 : vector<1x32x4xbf16> to vector<32x4xbf16>
    %cst_69 = arith.constant dense<0.000000e+00> : vector<32x128xf32>
    %90 = tpu.matmul %89, %83, %cst_69 {dimension_numbers = #tpu.dot_dimension_numbers<[1], [0], [0], [1], [0, 0, 1, 1], [], []>} : vector<32x4xbf16>, vector<4x128xbf16>, vector<32x128xf32> -> vector<32x128xf32>
    %91 = arith.addf %77, %90 : vector<32x128xf32>
    %c2_70 = arith.constant 2 : index
    %c0_71 = arith.constant 0 : index
    %c0_72 = arith.constant 0 : index
    %92 = vector.load %arg3[%c2_70, %c0_71, %c0_72] : memref<9x32x4xbf16, #tpu.memory_space<vmem>>, vector<1x32x4xbf16>
    %93 = vector.shape_cast %92 : vector<1x32x4xbf16> to vector<32x4xbf16>
    %cst_73 = arith.constant dense<0.000000e+00> : vector<32x128xf32>
    %94 = tpu.matmul %93, %83, %cst_73 {dimension_numbers = #tpu.dot_dimension_numbers<[1], [0], [0], [1], [0, 0, 1, 1], [], []>} : vector<32x4xbf16>, vector<4x128xbf16>, vector<32x128xf32> -> vector<32x128xf32>
    %95 = arith.addf %78, %94 : vector<32x128xf32>
    %c1_i32_74 = arith.constant 1 : i32
    %96 = arith.addi %3, %c1_i32_74 : i32
    %c1_i32_75 = arith.constant 1 : i32
    %97 = arith.addi %96, %c1_i32_75 : i32
    %c0_76 = arith.constant 0 : index
    %98 = arith.index_cast %97 : i32 to index
    %c0_77 = arith.constant 0 : index
    %c0_78 = arith.constant 0 : index
    %99 = vector.load %arg2[%c0_76, %98, %c0_77, %c0_78] : memref<1x18x4x128xbf16, #tpu.memory_space<vmem>>, vector<1x1x4x128xbf16>
    %100 = vector.shape_cast %99 : vector<1x1x4x128xbf16> to vector<4x128xbf16>
    %c3_79 = arith.constant 3 : index
    %c0_80 = arith.constant 0 : index
    %c0_81 = arith.constant 0 : index
    %101 = vector.load %arg3[%c3_79, %c0_80, %c0_81] : memref<9x32x4xbf16, #tpu.memory_space<vmem>>, vector<1x32x4xbf16>
    %102 = vector.shape_cast %101 : vector<1x32x4xbf16> to vector<32x4xbf16>
    %cst_82 = arith.constant dense<0.000000e+00> : vector<32x128xf32>
    %103 = tpu.matmul %102, %100, %cst_82 {dimension_numbers = #tpu.dot_dimension_numbers<[1], [0], [0], [1], [0, 0, 1, 1], [], []>} : vector<32x4xbf16>, vector<4x128xbf16>, vector<32x128xf32> -> vector<32x128xf32>
    %104 = arith.addf %87, %103 : vector<32x128xf32>
    %c4_83 = arith.constant 4 : index
    %c0_84 = arith.constant 0 : index
    %c0_85 = arith.constant 0 : index
    %105 = vector.load %arg3[%c4_83, %c0_84, %c0_85] : memref<9x32x4xbf16, #tpu.memory_space<vmem>>, vector<1x32x4xbf16>
    %106 = vector.shape_cast %105 : vector<1x32x4xbf16> to vector<32x4xbf16>
    %cst_86 = arith.constant dense<0.000000e+00> : vector<32x128xf32>
    %107 = tpu.matmul %106, %100, %cst_86 {dimension_numbers = #tpu.dot_dimension_numbers<[1], [0], [0], [1], [0, 0, 1, 1], [], []>} : vector<32x4xbf16>, vector<4x128xbf16>, vector<32x128xf32> -> vector<32x128xf32>
    %108 = arith.addf %91, %107 : vector<32x128xf32>
    %c5_87 = arith.constant 5 : index
    %c0_88 = arith.constant 0 : index
    %c0_89 = arith.constant 0 : index
    %109 = vector.load %arg3[%c5_87, %c0_88, %c0_89] : memref<9x32x4xbf16, #tpu.memory_space<vmem>>, vector<1x32x4xbf16>
    %110 = vector.shape_cast %109 : vector<1x32x4xbf16> to vector<32x4xbf16>
    %cst_90 = arith.constant dense<0.000000e+00> : vector<32x128xf32>
    %111 = tpu.matmul %110, %100, %cst_90 {dimension_numbers = #tpu.dot_dimension_numbers<[1], [0], [0], [1], [0, 0, 1, 1], [], []>} : vector<32x4xbf16>, vector<4x128xbf16>, vector<32x128xf32> -> vector<32x128xf32>
    %112 = arith.addf %95, %111 : vector<32x128xf32>
    %c1_i32_91 = arith.constant 1 : i32
    %113 = arith.addi %3, %c1_i32_91 : i32
    %c2_i32_92 = arith.constant 2 : i32
    %114 = arith.addi %113, %c2_i32_92 : i32
    %c0_93 = arith.constant 0 : index
    %115 = arith.index_cast %114 : i32 to index
    %c0_94 = arith.constant 0 : index
    %c0_95 = arith.constant 0 : index
    %116 = vector.load %arg2[%c0_93, %115, %c0_94, %c0_95] : memref<1x18x4x128xbf16, #tpu.memory_space<vmem>>, vector<1x1x4x128xbf16>
    %117 = vector.shape_cast %116 : vector<1x1x4x128xbf16> to vector<4x128xbf16>
    %c6_96 = arith.constant 6 : index
    %c0_97 = arith.constant 0 : index
    %c0_98 = arith.constant 0 : index
    %118 = vector.load %arg3[%c6_96, %c0_97, %c0_98] : memref<9x32x4xbf16, #tpu.memory_space<vmem>>, vector<1x32x4xbf16>
    %119 = vector.shape_cast %118 : vector<1x32x4xbf16> to vector<32x4xbf16>
    %cst_99 = arith.constant dense<0.000000e+00> : vector<32x128xf32>
    %120 = tpu.matmul %119, %117, %cst_99 {dimension_numbers = #tpu.dot_dimension_numbers<[1], [0], [0], [1], [0, 0, 1, 1], [], []>} : vector<32x4xbf16>, vector<4x128xbf16>, vector<32x128xf32> -> vector<32x128xf32>
    %121 = arith.addf %104, %120 : vector<32x128xf32>
    %c7_100 = arith.constant 7 : index
    %c0_101 = arith.constant 0 : index
    %c0_102 = arith.constant 0 : index
    %122 = vector.load %arg3[%c7_100, %c0_101, %c0_102] : memref<9x32x4xbf16, #tpu.memory_space<vmem>>, vector<1x32x4xbf16>
    %123 = vector.shape_cast %122 : vector<1x32x4xbf16> to vector<32x4xbf16>
    %cst_103 = arith.constant dense<0.000000e+00> : vector<32x128xf32>
    %124 = tpu.matmul %123, %117, %cst_103 {dimension_numbers = #tpu.dot_dimension_numbers<[1], [0], [0], [1], [0, 0, 1, 1], [], []>} : vector<32x4xbf16>, vector<4x128xbf16>, vector<32x128xf32> -> vector<32x128xf32>
    %125 = arith.addf %108, %124 : vector<32x128xf32>
    %c8_104 = arith.constant 8 : index
    %c0_105 = arith.constant 0 : index
    %c0_106 = arith.constant 0 : index
    %126 = vector.load %arg3[%c8_104, %c0_105, %c0_106] : memref<9x32x4xbf16, #tpu.memory_space<vmem>>, vector<1x32x4xbf16>
    %127 = vector.shape_cast %126 : vector<1x32x4xbf16> to vector<32x4xbf16>
    %cst_107 = arith.constant dense<0.000000e+00> : vector<32x128xf32>
    %128 = tpu.matmul %127, %117, %cst_107 {dimension_numbers = #tpu.dot_dimension_numbers<[1], [0], [0], [1], [0, 0, 1, 1], [], []>} : vector<32x4xbf16>, vector<4x128xbf16>, vector<32x128xf32> -> vector<32x128xf32>
    %129 = arith.addf %112, %128 : vector<32x128xf32>
    %cst_108 = arith.constant dense<0.000000e+00> : vector<32x128xf32>
    %130 = tpu.matmul %129, %6, %cst_108 {dimension_numbers = #tpu.dot_dimension_numbers<[1], [0], [0], [1], [0, 0, 1, 1], [], []>} : vector<32x128xf32>, vector<128x128xf32>, vector<32x128xf32> -> vector<32x128xf32>
    %131 = arith.addf %125, %130 : vector<32x128xf32>
    %cst_109 = arith.constant dense<0.000000e+00> : vector<32x128xf32>
    %132 = tpu.matmul %131, %6, %cst_109 {dimension_numbers = #tpu.dot_dimension_numbers<[1], [0], [0], [1], [0, 0, 1, 1], [], []>} : vector<32x128xf32>, vector<128x128xf32>, vector<32x128xf32> -> vector<32x128xf32>
    %133 = arith.addf %121, %132 : vector<32x128xf32>
    %134 = vector.broadcast %4 : vector<32x1xf32> to vector<32x128xf32>
    %135 = arith.addf %133, %134 : vector<32x128xf32>
    %cst_110 = arith.constant 0.000000e+00 : f32
    %136 = vector.broadcast %cst_110 : f32 to vector<32x128xf32>
    %137 = arith.maximumf %135, %136 : vector<32x128xf32>
    %138 = vector.extract_strided_slice %5 {offsets = [1, 0], sizes = [1, 128], strides = [1, 1]} : vector<8x128xf32> to vector<1x128xf32>
    %139 = vector.broadcast %138 : vector<1x128xf32> to vector<32x128xf32>
    %140 = arith.mulf %137, %139 : vector<32x128xf32>
    %cst_111 = arith.constant dense<0.000000e+00> : vector<32xf32>
    %141 = vector.multi_reduction <add>, %140, %cst_111 [1] : vector<32x128xf32> to vector<32xf32>
    %142 = vector.shape_cast %141 : vector<32xf32> to vector<32x1xf32>
    %143 = arith.addf %75, %142 : vector<32x1xf32>
    %cst_112 = arith.constant 0.000000e+00 : f32
    %144 = vector.broadcast %cst_112 : f32 to vector<32x128xf32>
    %cst_113 = arith.constant 0.000000e+00 : f32
    %145 = vector.broadcast %cst_113 : f32 to vector<32x128xf32>
    %cst_114 = arith.constant 0.000000e+00 : f32
    %146 = vector.broadcast %cst_114 : f32 to vector<32x128xf32>
    %c2_i32_115 = arith.constant 2 : i32
    %147 = arith.addi %3, %c2_i32_115 : i32
    %c0_i32_116 = arith.constant 0 : i32
    %148 = arith.addi %147, %c0_i32_116 : i32
    %c0_117 = arith.constant 0 : index
    %149 = arith.index_cast %148 : i32 to index
    %c0_118 = arith.constant 0 : index
    %c0_119 = arith.constant 0 : index
    %150 = vector.load %arg2[%c0_117, %149, %c0_118, %c0_119] : memref<1x18x4x128xbf16, #tpu.memory_space<vmem>>, vector<1x1x4x128xbf16>
    %151 = vector.shape_cast %150 : vector<1x1x4x128xbf16> to vector<4x128xbf16>
    %c0_120 = arith.constant 0 : index
    %c0_121 = arith.constant 0 : index
    %c0_122 = arith.constant 0 : index
    %152 = vector.load %arg3[%c0_120, %c0_121, %c0_122] : memref<9x32x4xbf16, #tpu.memory_space<vmem>>, vector<1x32x4xbf16>
    %153 = vector.shape_cast %152 : vector<1x32x4xbf16> to vector<32x4xbf16>
    %cst_123 = arith.constant dense<0.000000e+00> : vector<32x128xf32>
    %154 = tpu.matmul %153, %151, %cst_123 {dimension_numbers = #tpu.dot_dimension_numbers<[1], [0], [0], [1], [0, 0, 1, 1], [], []>} : vector<32x4xbf16>, vector<4x128xbf16>, vector<32x128xf32> -> vector<32x128xf32>
    %155 = arith.addf %144, %154 : vector<32x128xf32>
    %c1_124 = arith.constant 1 : index
    %c0_125 = arith.constant 0 : index
    %c0_126 = arith.constant 0 : index
    %156 = vector.load %arg3[%c1_124, %c0_125, %c0_126] : memref<9x32x4xbf16, #tpu.memory_space<vmem>>, vector<1x32x4xbf16>
    %157 = vector.shape_cast %156 : vector<1x32x4xbf16> to vector<32x4xbf16>
    %cst_127 = arith.constant dense<0.000000e+00> : vector<32x128xf32>
    %158 = tpu.matmul %157, %151, %cst_127 {dimension_numbers = #tpu.dot_dimension_numbers<[1], [0], [0], [1], [0, 0, 1, 1], [], []>} : vector<32x4xbf16>, vector<4x128xbf16>, vector<32x128xf32> -> vector<32x128xf32>
    %159 = arith.addf %145, %158 : vector<32x128xf32>
    %c2_128 = arith.constant 2 : index
    %c0_129 = arith.constant 0 : index
    %c0_130 = arith.constant 0 : index
    %160 = vector.load %arg3[%c2_128, %c0_129, %c0_130] : memref<9x32x4xbf16, #tpu.memory_space<vmem>>, vector<1x32x4xbf16>
    %161 = vector.shape_cast %160 : vector<1x32x4xbf16> to vector<32x4xbf16>
    %cst_131 = arith.constant dense<0.000000e+00> : vector<32x128xf32>
    %162 = tpu.matmul %161, %151, %cst_131 {dimension_numbers = #tpu.dot_dimension_numbers<[1], [0], [0], [1], [0, 0, 1, 1], [], []>} : vector<32x4xbf16>, vector<4x128xbf16>, vector<32x128xf32> -> vector<32x128xf32>
    %163 = arith.addf %146, %162 : vector<32x128xf32>
    %c2_i32_132 = arith.constant 2 : i32
    %164 = arith.addi %3, %c2_i32_132 : i32
    %c1_i32_133 = arith.constant 1 : i32
    %165 = arith.addi %164, %c1_i32_133 : i32
    %c0_134 = arith.constant 0 : index
    %166 = arith.index_cast %165 : i32 to index
    %c0_135 = arith.constant 0 : index
    %c0_136 = arith.constant 0 : index
    %167 = vector.load %arg2[%c0_134, %166, %c0_135, %c0_136] : memref<1x18x4x128xbf16, #tpu.memory_space<vmem>>, vector<1x1x4x128xbf16>
    %168 = vector.shape_cast %167 : vector<1x1x4x128xbf16> to vector<4x128xbf16>
    %c3_137 = arith.constant 3 : index
    %c0_138 = arith.constant 0 : index
    %c0_139 = arith.constant 0 : index
    %169 = vector.load %arg3[%c3_137, %c0_138, %c0_139] : memref<9x32x4xbf16, #tpu.memory_space<vmem>>, vector<1x32x4xbf16>
    %170 = vector.shape_cast %169 : vector<1x32x4xbf16> to vector<32x4xbf16>
    %cst_140 = arith.constant dense<0.000000e+00> : vector<32x128xf32>
    %171 = tpu.matmul %170, %168, %cst_140 {dimension_numbers = #tpu.dot_dimension_numbers<[1], [0], [0], [1], [0, 0, 1, 1], [], []>} : vector<32x4xbf16>, vector<4x128xbf16>, vector<32x128xf32> -> vector<32x128xf32>
    %172 = arith.addf %155, %171 : vector<32x128xf32>
    %c4_141 = arith.constant 4 : index
    %c0_142 = arith.constant 0 : index
    %c0_143 = arith.constant 0 : index
    %173 = vector.load %arg3[%c4_141, %c0_142, %c0_143] : memref<9x32x4xbf16, #tpu.memory_space<vmem>>, vector<1x32x4xbf16>
    %174 = vector.shape_cast %173 : vector<1x32x4xbf16> to vector<32x4xbf16>
    %cst_144 = arith.constant dense<0.000000e+00> : vector<32x128xf32>
    %175 = tpu.matmul %174, %168, %cst_144 {dimension_numbers = #tpu.dot_dimension_numbers<[1], [0], [0], [1], [0, 0, 1, 1], [], []>} : vector<32x4xbf16>, vector<4x128xbf16>, vector<32x128xf32> -> vector<32x128xf32>
    %176 = arith.addf %159, %175 : vector<32x128xf32>
    %c5_145 = arith.constant 5 : index
    %c0_146 = arith.constant 0 : index
    %c0_147 = arith.constant 0 : index
    %177 = vector.load %arg3[%c5_145, %c0_146, %c0_147] : memref<9x32x4xbf16, #tpu.memory_space<vmem>>, vector<1x32x4xbf16>
    %178 = vector.shape_cast %177 : vector<1x32x4xbf16> to vector<32x4xbf16>
    %cst_148 = arith.constant dense<0.000000e+00> : vector<32x128xf32>
    %179 = tpu.matmul %178, %168, %cst_148 {dimension_numbers = #tpu.dot_dimension_numbers<[1], [0], [0], [1], [0, 0, 1, 1], [], []>} : vector<32x4xbf16>, vector<4x128xbf16>, vector<32x128xf32> -> vector<32x128xf32>
    %180 = arith.addf %163, %179 : vector<32x128xf32>
    %c2_i32_149 = arith.constant 2 : i32
    %181 = arith.addi %3, %c2_i32_149 : i32
    %c2_i32_150 = arith.constant 2 : i32
    %182 = arith.addi %181, %c2_i32_150 : i32
    %c0_151 = arith.constant 0 : index
    %183 = arith.index_cast %182 : i32 to index
    %c0_152 = arith.constant 0 : index
    %c0_153 = arith.constant 0 : index
    %184 = vector.load %arg2[%c0_151, %183, %c0_152, %c0_153] : memref<1x18x4x128xbf16, #tpu.memory_space<vmem>>, vector<1x1x4x128xbf16>
    %185 = vector.shape_cast %184 : vector<1x1x4x128xbf16> to vector<4x128xbf16>
    %c6_154 = arith.constant 6 : index
    %c0_155 = arith.constant 0 : index
    %c0_156 = arith.constant 0 : index
    %186 = vector.load %arg3[%c6_154, %c0_155, %c0_156] : memref<9x32x4xbf16, #tpu.memory_space<vmem>>, vector<1x32x4xbf16>
    %187 = vector.shape_cast %186 : vector<1x32x4xbf16> to vector<32x4xbf16>
    %cst_157 = arith.constant dense<0.000000e+00> : vector<32x128xf32>
    %188 = tpu.matmul %187, %185, %cst_157 {dimension_numbers = #tpu.dot_dimension_numbers<[1], [0], [0], [1], [0, 0, 1, 1], [], []>} : vector<32x4xbf16>, vector<4x128xbf16>, vector<32x128xf32> -> vector<32x128xf32>
    %189 = arith.addf %172, %188 : vector<32x128xf32>
    %c7_158 = arith.constant 7 : index
    %c0_159 = arith.constant 0 : index
    %c0_160 = arith.constant 0 : index
    %190 = vector.load %arg3[%c7_158, %c0_159, %c0_160] : memref<9x32x4xbf16, #tpu.memory_space<vmem>>, vector<1x32x4xbf16>
    %191 = vector.shape_cast %190 : vector<1x32x4xbf16> to vector<32x4xbf16>
    %cst_161 = arith.constant dense<0.000000e+00> : vector<32x128xf32>
    %192 = tpu.matmul %191, %185, %cst_161 {dimension_numbers = #tpu.dot_dimension_numbers<[1], [0], [0], [1], [0, 0, 1, 1], [], []>} : vector<32x4xbf16>, vector<4x128xbf16>, vector<32x128xf32> -> vector<32x128xf32>
    %193 = arith.addf %176, %192 : vector<32x128xf32>
    %c8_162 = arith.constant 8 : index
    %c0_163 = arith.constant 0 : index
    %c0_164 = arith.constant 0 : index
    %194 = vector.load %arg3[%c8_162, %c0_163, %c0_164] : memref<9x32x4xbf16, #tpu.memory_space<vmem>>, vector<1x32x4xbf16>
    %195 = vector.shape_cast %194 : vector<1x32x4xbf16> to vector<32x4xbf16>
    %cst_165 = arith.constant dense<0.000000e+00> : vector<32x128xf32>
    %196 = tpu.matmul %195, %185, %cst_165 {dimension_numbers = #tpu.dot_dimension_numbers<[1], [0], [0], [1], [0, 0, 1, 1], [], []>} : vector<32x4xbf16>, vector<4x128xbf16>, vector<32x128xf32> -> vector<32x128xf32>
    %197 = arith.addf %180, %196 : vector<32x128xf32>
    %cst_166 = arith.constant dense<0.000000e+00> : vector<32x128xf32>
    %198 = tpu.matmul %197, %6, %cst_166 {dimension_numbers = #tpu.dot_dimension_numbers<[1], [0], [0], [1], [0, 0, 1, 1], [], []>} : vector<32x128xf32>, vector<128x128xf32>, vector<32x128xf32> -> vector<32x128xf32>
    %199 = arith.addf %193, %198 : vector<32x128xf32>
    %cst_167 = arith.constant dense<0.000000e+00> : vector<32x128xf32>
    %200 = tpu.matmul %199, %6, %cst_167 {dimension_numbers = #tpu.dot_dimension_numbers<[1], [0], [0], [1], [0, 0, 1, 1], [], []>} : vector<32x128xf32>, vector<128x128xf32>, vector<32x128xf32> -> vector<32x128xf32>
    %201 = arith.addf %189, %200 : vector<32x128xf32>
    %202 = vector.broadcast %4 : vector<32x1xf32> to vector<32x128xf32>
    %203 = arith.addf %201, %202 : vector<32x128xf32>
    %cst_168 = arith.constant 0.000000e+00 : f32
    %204 = vector.broadcast %cst_168 : f32 to vector<32x128xf32>
    %205 = arith.maximumf %203, %204 : vector<32x128xf32>
    %206 = vector.extract_strided_slice %5 {offsets = [2, 0], sizes = [1, 128], strides = [1, 1]} : vector<8x128xf32> to vector<1x128xf32>
    %207 = vector.broadcast %206 : vector<1x128xf32> to vector<32x128xf32>
    %208 = arith.mulf %205, %207 : vector<32x128xf32>
    %cst_169 = arith.constant dense<0.000000e+00> : vector<32xf32>
    %209 = vector.multi_reduction <add>, %208, %cst_169 [1] : vector<32x128xf32> to vector<32xf32>
    %210 = vector.shape_cast %209 : vector<32xf32> to vector<32x1xf32>
    %211 = arith.addf %143, %210 : vector<32x1xf32>
    %cst_170 = arith.constant 0.000000e+00 : f32
    %212 = vector.broadcast %cst_170 : f32 to vector<32x128xf32>
    %cst_171 = arith.constant 0.000000e+00 : f32
    %213 = vector.broadcast %cst_171 : f32 to vector<32x128xf32>
    %cst_172 = arith.constant 0.000000e+00 : f32
    %214 = vector.broadcast %cst_172 : f32 to vector<32x128xf32>
    %c3_i32 = arith.constant 3 : i32
    %215 = arith.addi %3, %c3_i32 : i32
    %c0_i32_173 = arith.constant 0 : i32
    %216 = arith.addi %215, %c0_i32_173 : i32
    %c0_174 = arith.constant 0 : index
    %217 = arith.index_cast %216 : i32 to index
    %c0_175 = arith.constant 0 : index
    %c0_176 = arith.constant 0 : index
    %218 = vector.load %arg2[%c0_174, %217, %c0_175, %c0_176] : memref<1x18x4x128xbf16, #tpu.memory_space<vmem>>, vector<1x1x4x128xbf16>
    %219 = vector.shape_cast %218 : vector<1x1x4x128xbf16> to vector<4x128xbf16>
    %c0_177 = arith.constant 0 : index
    %c0_178 = arith.constant 0 : index
    %c0_179 = arith.constant 0 : index
    %220 = vector.load %arg3[%c0_177, %c0_178, %c0_179] : memref<9x32x4xbf16, #tpu.memory_space<vmem>>, vector<1x32x4xbf16>
    %221 = vector.shape_cast %220 : vector<1x32x4xbf16> to vector<32x4xbf16>
    %cst_180 = arith.constant dense<0.000000e+00> : vector<32x128xf32>
    %222 = tpu.matmul %221, %219, %cst_180 {dimension_numbers = #tpu.dot_dimension_numbers<[1], [0], [0], [1], [0, 0, 1, 1], [], []>} : vector<32x4xbf16>, vector<4x128xbf16>, vector<32x128xf32> -> vector<32x128xf32>
    %223 = arith.addf %212, %222 : vector<32x128xf32>
    %c1_181 = arith.constant 1 : index
    %c0_182 = arith.constant 0 : index
    %c0_183 = arith.constant 0 : index
    %224 = vector.load %arg3[%c1_181, %c0_182, %c0_183] : memref<9x32x4xbf16, #tpu.memory_space<vmem>>, vector<1x32x4xbf16>
    %225 = vector.shape_cast %224 : vector<1x32x4xbf16> to vector<32x4xbf16>
    %cst_184 = arith.constant dense<0.000000e+00> : vector<32x128xf32>
    %226 = tpu.matmul %225, %219, %cst_184 {dimension_numbers = #tpu.dot_dimension_numbers<[1], [0], [0], [1], [0, 0, 1, 1], [], []>} : vector<32x4xbf16>, vector<4x128xbf16>, vector<32x128xf32> -> vector<32x128xf32>
    %227 = arith.addf %213, %226 : vector<32x128xf32>
    %c2_185 = arith.constant 2 : index
    %c0_186 = arith.constant 0 : index
    %c0_187 = arith.constant 0 : index
    %228 = vector.load %arg3[%c2_185, %c0_186, %c0_187] : memref<9x32x4xbf16, #tpu.memory_space<vmem>>, vector<1x32x4xbf16>
    %229 = vector.shape_cast %228 : vector<1x32x4xbf16> to vector<32x4xbf16>
    %cst_188 = arith.constant dense<0.000000e+00> : vector<32x128xf32>
    %230 = tpu.matmul %229, %219, %cst_188 {dimension_numbers = #tpu.dot_dimension_numbers<[1], [0], [0], [1], [0, 0, 1, 1], [], []>} : vector<32x4xbf16>, vector<4x128xbf16>, vector<32x128xf32> -> vector<32x128xf32>
    %231 = arith.addf %214, %230 : vector<32x128xf32>
    %c3_i32_189 = arith.constant 3 : i32
    %232 = arith.addi %3, %c3_i32_189 : i32
    %c1_i32_190 = arith.constant 1 : i32
    %233 = arith.addi %232, %c1_i32_190 : i32
    %c0_191 = arith.constant 0 : index
    %234 = arith.index_cast %233 : i32 to index
    %c0_192 = arith.constant 0 : index
    %c0_193 = arith.constant 0 : index
    %235 = vector.load %arg2[%c0_191, %234, %c0_192, %c0_193] : memref<1x18x4x128xbf16, #tpu.memory_space<vmem>>, vector<1x1x4x128xbf16>
    %236 = vector.shape_cast %235 : vector<1x1x4x128xbf16> to vector<4x128xbf16>
    %c3_194 = arith.constant 3 : index
    %c0_195 = arith.constant 0 : index
    %c0_196 = arith.constant 0 : index
    %237 = vector.load %arg3[%c3_194, %c0_195, %c0_196] : memref<9x32x4xbf16, #tpu.memory_space<vmem>>, vector<1x32x4xbf16>
    %238 = vector.shape_cast %237 : vector<1x32x4xbf16> to vector<32x4xbf16>
    %cst_197 = arith.constant dense<0.000000e+00> : vector<32x128xf32>
    %239 = tpu.matmul %238, %236, %cst_197 {dimension_numbers = #tpu.dot_dimension_numbers<[1], [0], [0], [1], [0, 0, 1, 1], [], []>} : vector<32x4xbf16>, vector<4x128xbf16>, vector<32x128xf32> -> vector<32x128xf32>
    %240 = arith.addf %223, %239 : vector<32x128xf32>
    %c4_198 = arith.constant 4 : index
    %c0_199 = arith.constant 0 : index
    %c0_200 = arith.constant 0 : index
    %241 = vector.load %arg3[%c4_198, %c0_199, %c0_200] : memref<9x32x4xbf16, #tpu.memory_space<vmem>>, vector<1x32x4xbf16>
    %242 = vector.shape_cast %241 : vector<1x32x4xbf16> to vector<32x4xbf16>
    %cst_201 = arith.constant dense<0.000000e+00> : vector<32x128xf32>
    %243 = tpu.matmul %242, %236, %cst_201 {dimension_numbers = #tpu.dot_dimension_numbers<[1], [0], [0], [1], [0, 0, 1, 1], [], []>} : vector<32x4xbf16>, vector<4x128xbf16>, vector<32x128xf32> -> vector<32x128xf32>
    %244 = arith.addf %227, %243 : vector<32x128xf32>
    %c5_202 = arith.constant 5 : index
    %c0_203 = arith.constant 0 : index
    %c0_204 = arith.constant 0 : index
    %245 = vector.load %arg3[%c5_202, %c0_203, %c0_204] : memref<9x32x4xbf16, #tpu.memory_space<vmem>>, vector<1x32x4xbf16>
    %246 = vector.shape_cast %245 : vector<1x32x4xbf16> to vector<32x4xbf16>
    %cst_205 = arith.constant dense<0.000000e+00> : vector<32x128xf32>
    %247 = tpu.matmul %246, %236, %cst_205 {dimension_numbers = #tpu.dot_dimension_numbers<[1], [0], [0], [1], [0, 0, 1, 1], [], []>} : vector<32x4xbf16>, vector<4x128xbf16>, vector<32x128xf32> -> vector<32x128xf32>
    %248 = arith.addf %231, %247 : vector<32x128xf32>
    %c3_i32_206 = arith.constant 3 : i32
    %249 = arith.addi %3, %c3_i32_206 : i32
    %c2_i32_207 = arith.constant 2 : i32
    %250 = arith.addi %249, %c2_i32_207 : i32
    %c0_208 = arith.constant 0 : index
    %251 = arith.index_cast %250 : i32 to index
    %c0_209 = arith.constant 0 : index
    %c0_210 = arith.constant 0 : index
    %252 = vector.load %arg2[%c0_208, %251, %c0_209, %c0_210] : memref<1x18x4x128xbf16, #tpu.memory_space<vmem>>, vector<1x1x4x128xbf16>
    %253 = vector.shape_cast %252 : vector<1x1x4x128xbf16> to vector<4x128xbf16>
    %c6_211 = arith.constant 6 : index
    %c0_212 = arith.constant 0 : index
    %c0_213 = arith.constant 0 : index
    %254 = vector.load %arg3[%c6_211, %c0_212, %c0_213] : memref<9x32x4xbf16, #tpu.memory_space<vmem>>, vector<1x32x4xbf16>
    %255 = vector.shape_cast %254 : vector<1x32x4xbf16> to vector<32x4xbf16>
    %cst_214 = arith.constant dense<0.000000e+00> : vector<32x128xf32>
    %256 = tpu.matmul %255, %253, %cst_214 {dimension_numbers = #tpu.dot_dimension_numbers<[1], [0], [0], [1], [0, 0, 1, 1], [], []>} : vector<32x4xbf16>, vector<4x128xbf16>, vector<32x128xf32> -> vector<32x128xf32>
    %257 = arith.addf %240, %256 : vector<32x128xf32>
    %c7_215 = arith.constant 7 : index
    %c0_216 = arith.constant 0 : index
    %c0_217 = arith.constant 0 : index
    %258 = vector.load %arg3[%c7_215, %c0_216, %c0_217] : memref<9x32x4xbf16, #tpu.memory_space<vmem>>, vector<1x32x4xbf16>
    %259 = vector.shape_cast %258 : vector<1x32x4xbf16> to vector<32x4xbf16>
    %cst_218 = arith.constant dense<0.000000e+00> : vector<32x128xf32>
    %260 = tpu.matmul %259, %253, %cst_218 {dimension_numbers = #tpu.dot_dimension_numbers<[1], [0], [0], [1], [0, 0, 1, 1], [], []>} : vector<32x4xbf16>, vector<4x128xbf16>, vector<32x128xf32> -> vector<32x128xf32>
    %261 = arith.addf %244, %260 : vector<32x128xf32>
    %c8_219 = arith.constant 8 : index
    %c0_220 = arith.constant 0 : index
    %c0_221 = arith.constant 0 : index
    %262 = vector.load %arg3[%c8_219, %c0_220, %c0_221] : memref<9x32x4xbf16, #tpu.memory_space<vmem>>, vector<1x32x4xbf16>
    %263 = vector.shape_cast %262 : vector<1x32x4xbf16> to vector<32x4xbf16>
    %cst_222 = arith.constant dense<0.000000e+00> : vector<32x128xf32>
    %264 = tpu.matmul %263, %253, %cst_222 {dimension_numbers = #tpu.dot_dimension_numbers<[1], [0], [0], [1], [0, 0, 1, 1], [], []>} : vector<32x4xbf16>, vector<4x128xbf16>, vector<32x128xf32> -> vector<32x128xf32>
    %265 = arith.addf %248, %264 : vector<32x128xf32>
    %cst_223 = arith.constant dense<0.000000e+00> : vector<32x128xf32>
    %266 = tpu.matmul %265, %6, %cst_223 {dimension_numbers = #tpu.dot_dimension_numbers<[1], [0], [0], [1], [0, 0, 1, 1], [], []>} : vector<32x128xf32>, vector<128x128xf32>, vector<32x128xf32> -> vector<32x128xf32>
    %267 = arith.addf %261, %266 : vector<32x128xf32>
    %cst_224 = arith.constant dense<0.000000e+00> : vector<32x128xf32>
    %268 = tpu.matmul %267, %6, %cst_224 {dimension_numbers = #tpu.dot_dimension_numbers<[1], [0], [0], [1], [0, 0, 1, 1], [], []>} : vector<32x128xf32>, vector<128x128xf32>, vector<32x128xf32> -> vector<32x128xf32>
    %269 = arith.addf %257, %268 : vector<32x128xf32>
    %270 = vector.broadcast %4 : vector<32x1xf32> to vector<32x128xf32>
    %271 = arith.addf %269, %270 : vector<32x128xf32>
    %cst_225 = arith.constant 0.000000e+00 : f32
    %272 = vector.broadcast %cst_225 : f32 to vector<32x128xf32>
    %273 = arith.maximumf %271, %272 : vector<32x128xf32>
    %274 = vector.extract_strided_slice %5 {offsets = [3, 0], sizes = [1, 128], strides = [1, 1]} : vector<8x128xf32> to vector<1x128xf32>
    %275 = vector.broadcast %274 : vector<1x128xf32> to vector<32x128xf32>
    %276 = arith.mulf %273, %275 : vector<32x128xf32>
    %cst_226 = arith.constant dense<0.000000e+00> : vector<32xf32>
    %277 = vector.multi_reduction <add>, %276, %cst_226 [1] : vector<32x128xf32> to vector<32xf32>
    %278 = vector.shape_cast %277 : vector<32xf32> to vector<32x1xf32>
    %279 = arith.addf %211, %278 : vector<32x1xf32>
    %cst_227 = arith.constant 0.000000e+00 : f32
    %280 = vector.broadcast %cst_227 : f32 to vector<32x128xf32>
    %cst_228 = arith.constant 0.000000e+00 : f32
    %281 = vector.broadcast %cst_228 : f32 to vector<32x128xf32>
    %cst_229 = arith.constant 0.000000e+00 : f32
    %282 = vector.broadcast %cst_229 : f32 to vector<32x128xf32>
    %c4_i32 = arith.constant 4 : i32
    %283 = arith.addi %3, %c4_i32 : i32
    %c0_i32_230 = arith.constant 0 : i32
    %284 = arith.addi %283, %c0_i32_230 : i32
    %c0_231 = arith.constant 0 : index
    %285 = arith.index_cast %284 : i32 to index
    %c0_232 = arith.constant 0 : index
    %c0_233 = arith.constant 0 : index
    %286 = vector.load %arg2[%c0_231, %285, %c0_232, %c0_233] : memref<1x18x4x128xbf16, #tpu.memory_space<vmem>>, vector<1x1x4x128xbf16>
    %287 = vector.shape_cast %286 : vector<1x1x4x128xbf16> to vector<4x128xbf16>
    %c0_234 = arith.constant 0 : index
    %c0_235 = arith.constant 0 : index
    %c0_236 = arith.constant 0 : index
    %288 = vector.load %arg3[%c0_234, %c0_235, %c0_236] : memref<9x32x4xbf16, #tpu.memory_space<vmem>>, vector<1x32x4xbf16>
    %289 = vector.shape_cast %288 : vector<1x32x4xbf16> to vector<32x4xbf16>
    %cst_237 = arith.constant dense<0.000000e+00> : vector<32x128xf32>
    %290 = tpu.matmul %289, %287, %cst_237 {dimension_numbers = #tpu.dot_dimension_numbers<[1], [0], [0], [1], [0, 0, 1, 1], [], []>} : vector<32x4xbf16>, vector<4x128xbf16>, vector<32x128xf32> -> vector<32x128xf32>
    %291 = arith.addf %280, %290 : vector<32x128xf32>
    %c1_238 = arith.constant 1 : index
    %c0_239 = arith.constant 0 : index
    %c0_240 = arith.constant 0 : index
    %292 = vector.load %arg3[%c1_238, %c0_239, %c0_240] : memref<9x32x4xbf16, #tpu.memory_space<vmem>>, vector<1x32x4xbf16>
    %293 = vector.shape_cast %292 : vector<1x32x4xbf16> to vector<32x4xbf16>
    %cst_241 = arith.constant dense<0.000000e+00> : vector<32x128xf32>
    %294 = tpu.matmul %293, %287, %cst_241 {dimension_numbers = #tpu.dot_dimension_numbers<[1], [0], [0], [1], [0, 0, 1, 1], [], []>} : vector<32x4xbf16>, vector<4x128xbf16>, vector<32x128xf32> -> vector<32x128xf32>
    %295 = arith.addf %281, %294 : vector<32x128xf32>
    %c2_242 = arith.constant 2 : index
    %c0_243 = arith.constant 0 : index
    %c0_244 = arith.constant 0 : index
    %296 = vector.load %arg3[%c2_242, %c0_243, %c0_244] : memref<9x32x4xbf16, #tpu.memory_space<vmem>>, vector<1x32x4xbf16>
    %297 = vector.shape_cast %296 : vector<1x32x4xbf16> to vector<32x4xbf16>
    %cst_245 = arith.constant dense<0.000000e+00> : vector<32x128xf32>
    %298 = tpu.matmul %297, %287, %cst_245 {dimension_numbers = #tpu.dot_dimension_numbers<[1], [0], [0], [1], [0, 0, 1, 1], [], []>} : vector<32x4xbf16>, vector<4x128xbf16>, vector<32x128xf32> -> vector<32x128xf32>
    %299 = arith.addf %282, %298 : vector<32x128xf32>
    %c4_i32_246 = arith.constant 4 : i32
    %300 = arith.addi %3, %c4_i32_246 : i32
    %c1_i32_247 = arith.constant 1 : i32
    %301 = arith.addi %300, %c1_i32_247 : i32
    %c0_248 = arith.constant 0 : index
    %302 = arith.index_cast %301 : i32 to index
    %c0_249 = arith.constant 0 : index
    %c0_250 = arith.constant 0 : index
    %303 = vector.load %arg2[%c0_248, %302, %c0_249, %c0_250] : memref<1x18x4x128xbf16, #tpu.memory_space<vmem>>, vector<1x1x4x128xbf16>
    %304 = vector.shape_cast %303 : vector<1x1x4x128xbf16> to vector<4x128xbf16>
    %c3_251 = arith.constant 3 : index
    %c0_252 = arith.constant 0 : index
    %c0_253 = arith.constant 0 : index
    %305 = vector.load %arg3[%c3_251, %c0_252, %c0_253] : memref<9x32x4xbf16, #tpu.memory_space<vmem>>, vector<1x32x4xbf16>
    %306 = vector.shape_cast %305 : vector<1x32x4xbf16> to vector<32x4xbf16>
    %cst_254 = arith.constant dense<0.000000e+00> : vector<32x128xf32>
    %307 = tpu.matmul %306, %304, %cst_254 {dimension_numbers = #tpu.dot_dimension_numbers<[1], [0], [0], [1], [0, 0, 1, 1], [], []>} : vector<32x4xbf16>, vector<4x128xbf16>, vector<32x128xf32> -> vector<32x128xf32>
    %308 = arith.addf %291, %307 : vector<32x128xf32>
    %c4_255 = arith.constant 4 : index
    %c0_256 = arith.constant 0 : index
    %c0_257 = arith.constant 0 : index
    %309 = vector.load %arg3[%c4_255, %c0_256, %c0_257] : memref<9x32x4xbf16, #tpu.memory_space<vmem>>, vector<1x32x4xbf16>
    %310 = vector.shape_cast %309 : vector<1x32x4xbf16> to vector<32x4xbf16>
    %cst_258 = arith.constant dense<0.000000e+00> : vector<32x128xf32>
    %311 = tpu.matmul %310, %304, %cst_258 {dimension_numbers = #tpu.dot_dimension_numbers<[1], [0], [0], [1], [0, 0, 1, 1], [], []>} : vector<32x4xbf16>, vector<4x128xbf16>, vector<32x128xf32> -> vector<32x128xf32>
    %312 = arith.addf %295, %311 : vector<32x128xf32>
    %c5_259 = arith.constant 5 : index
    %c0_260 = arith.constant 0 : index
    %c0_261 = arith.constant 0 : index
    %313 = vector.load %arg3[%c5_259, %c0_260, %c0_261] : memref<9x32x4xbf16, #tpu.memory_space<vmem>>, vector<1x32x4xbf16>
    %314 = vector.shape_cast %313 : vector<1x32x4xbf16> to vector<32x4xbf16>
    %cst_262 = arith.constant dense<0.000000e+00> : vector<32x128xf32>
    %315 = tpu.matmul %314, %304, %cst_262 {dimension_numbers = #tpu.dot_dimension_numbers<[1], [0], [0], [1], [0, 0, 1, 1], [], []>} : vector<32x4xbf16>, vector<4x128xbf16>, vector<32x128xf32> -> vector<32x128xf32>
    %316 = arith.addf %299, %315 : vector<32x128xf32>
    %c4_i32_263 = arith.constant 4 : i32
    %317 = arith.addi %3, %c4_i32_263 : i32
    %c2_i32_264 = arith.constant 2 : i32
    %318 = arith.addi %317, %c2_i32_264 : i32
    %c0_265 = arith.constant 0 : index
    %319 = arith.index_cast %318 : i32 to index
    %c0_266 = arith.constant 0 : index
    %c0_267 = arith.constant 0 : index
    %320 = vector.load %arg2[%c0_265, %319, %c0_266, %c0_267] : memref<1x18x4x128xbf16, #tpu.memory_space<vmem>>, vector<1x1x4x128xbf16>
    %321 = vector.shape_cast %320 : vector<1x1x4x128xbf16> to vector<4x128xbf16>
    %c6_268 = arith.constant 6 : index
    %c0_269 = arith.constant 0 : index
    %c0_270 = arith.constant 0 : index
    %322 = vector.load %arg3[%c6_268, %c0_269, %c0_270] : memref<9x32x4xbf16, #tpu.memory_space<vmem>>, vector<1x32x4xbf16>
    %323 = vector.shape_cast %322 : vector<1x32x4xbf16> to vector<32x4xbf16>
    %cst_271 = arith.constant dense<0.000000e+00> : vector<32x128xf32>
    %324 = tpu.matmul %323, %321, %cst_271 {dimension_numbers = #tpu.dot_dimension_numbers<[1], [0], [0], [1], [0, 0, 1, 1], [], []>} : vector<32x4xbf16>, vector<4x128xbf16>, vector<32x128xf32> -> vector<32x128xf32>
    %325 = arith.addf %308, %324 : vector<32x128xf32>
    %c7_272 = arith.constant 7 : index
    %c0_273 = arith.constant 0 : index
    %c0_274 = arith.constant 0 : index
    %326 = vector.load %arg3[%c7_272, %c0_273, %c0_274] : memref<9x32x4xbf16, #tpu.memory_space<vmem>>, vector<1x32x4xbf16>
    %327 = vector.shape_cast %326 : vector<1x32x4xbf16> to vector<32x4xbf16>
    %cst_275 = arith.constant dense<0.000000e+00> : vector<32x128xf32>
    %328 = tpu.matmul %327, %321, %cst_275 {dimension_numbers = #tpu.dot_dimension_numbers<[1], [0], [0], [1], [0, 0, 1, 1], [], []>} : vector<32x4xbf16>, vector<4x128xbf16>, vector<32x128xf32> -> vector<32x128xf32>
    %329 = arith.addf %312, %328 : vector<32x128xf32>
    %c8_276 = arith.constant 8 : index
    %c0_277 = arith.constant 0 : index
    %c0_278 = arith.constant 0 : index
    %330 = vector.load %arg3[%c8_276, %c0_277, %c0_278] : memref<9x32x4xbf16, #tpu.memory_space<vmem>>, vector<1x32x4xbf16>
    %331 = vector.shape_cast %330 : vector<1x32x4xbf16> to vector<32x4xbf16>
    %cst_279 = arith.constant dense<0.000000e+00> : vector<32x128xf32>
    %332 = tpu.matmul %331, %321, %cst_279 {dimension_numbers = #tpu.dot_dimension_numbers<[1], [0], [0], [1], [0, 0, 1, 1], [], []>} : vector<32x4xbf16>, vector<4x128xbf16>, vector<32x128xf32> -> vector<32x128xf32>
    %333 = arith.addf %316, %332 : vector<32x128xf32>
    %cst_280 = arith.constant dense<0.000000e+00> : vector<32x128xf32>
    %334 = tpu.matmul %333, %6, %cst_280 {dimension_numbers = #tpu.dot_dimension_numbers<[1], [0], [0], [1], [0, 0, 1, 1], [], []>} : vector<32x128xf32>, vector<128x128xf32>, vector<32x128xf32> -> vector<32x128xf32>
    %335 = arith.addf %329, %334 : vector<32x128xf32>
    %cst_281 = arith.constant dense<0.000000e+00> : vector<32x128xf32>
    %336 = tpu.matmul %335, %6, %cst_281 {dimension_numbers = #tpu.dot_dimension_numbers<[1], [0], [0], [1], [0, 0, 1, 1], [], []>} : vector<32x128xf32>, vector<128x128xf32>, vector<32x128xf32> -> vector<32x128xf32>
    %337 = arith.addf %325, %336 : vector<32x128xf32>
    %338 = vector.broadcast %4 : vector<32x1xf32> to vector<32x128xf32>
    %339 = arith.addf %337, %338 : vector<32x128xf32>
    %cst_282 = arith.constant 0.000000e+00 : f32
    %340 = vector.broadcast %cst_282 : f32 to vector<32x128xf32>
    %341 = arith.maximumf %339, %340 : vector<32x128xf32>
    %342 = vector.extract_strided_slice %5 {offsets = [4, 0], sizes = [1, 128], strides = [1, 1]} : vector<8x128xf32> to vector<1x128xf32>
    %343 = vector.broadcast %342 : vector<1x128xf32> to vector<32x128xf32>
    %344 = arith.mulf %341, %343 : vector<32x128xf32>
    %cst_283 = arith.constant dense<0.000000e+00> : vector<32xf32>
    %345 = vector.multi_reduction <add>, %344, %cst_283 [1] : vector<32x128xf32> to vector<32xf32>
    %346 = vector.shape_cast %345 : vector<32xf32> to vector<32x1xf32>
    %347 = arith.addf %279, %346 : vector<32x1xf32>
    %cst_284 = arith.constant 0.000000e+00 : f32
    %348 = vector.broadcast %cst_284 : f32 to vector<32x128xf32>
    %cst_285 = arith.constant 0.000000e+00 : f32
    %349 = vector.broadcast %cst_285 : f32 to vector<32x128xf32>
    %cst_286 = arith.constant 0.000000e+00 : f32
    %350 = vector.broadcast %cst_286 : f32 to vector<32x128xf32>
    %c5_i32 = arith.constant 5 : i32
    %351 = arith.addi %3, %c5_i32 : i32
    %c0_i32_287 = arith.constant 0 : i32
    %352 = arith.addi %351, %c0_i32_287 : i32
    %c0_288 = arith.constant 0 : index
    %353 = arith.index_cast %352 : i32 to index
    %c0_289 = arith.constant 0 : index
    %c0_290 = arith.constant 0 : index
    %354 = vector.load %arg2[%c0_288, %353, %c0_289, %c0_290] : memref<1x18x4x128xbf16, #tpu.memory_space<vmem>>, vector<1x1x4x128xbf16>
    %355 = vector.shape_cast %354 : vector<1x1x4x128xbf16> to vector<4x128xbf16>
    %c0_291 = arith.constant 0 : index
    %c0_292 = arith.constant 0 : index
    %c0_293 = arith.constant 0 : index
    %356 = vector.load %arg3[%c0_291, %c0_292, %c0_293] : memref<9x32x4xbf16, #tpu.memory_space<vmem>>, vector<1x32x4xbf16>
    %357 = vector.shape_cast %356 : vector<1x32x4xbf16> to vector<32x4xbf16>
    %cst_294 = arith.constant dense<0.000000e+00> : vector<32x128xf32>
    %358 = tpu.matmul %357, %355, %cst_294 {dimension_numbers = #tpu.dot_dimension_numbers<[1], [0], [0], [1], [0, 0, 1, 1], [], []>} : vector<32x4xbf16>, vector<4x128xbf16>, vector<32x128xf32> -> vector<32x128xf32>
    %359 = arith.addf %348, %358 : vector<32x128xf32>
    %c1_295 = arith.constant 1 : index
    %c0_296 = arith.constant 0 : index
    %c0_297 = arith.constant 0 : index
    %360 = vector.load %arg3[%c1_295, %c0_296, %c0_297] : memref<9x32x4xbf16, #tpu.memory_space<vmem>>, vector<1x32x4xbf16>
    %361 = vector.shape_cast %360 : vector<1x32x4xbf16> to vector<32x4xbf16>
    %cst_298 = arith.constant dense<0.000000e+00> : vector<32x128xf32>
    %362 = tpu.matmul %361, %355, %cst_298 {dimension_numbers = #tpu.dot_dimension_numbers<[1], [0], [0], [1], [0, 0, 1, 1], [], []>} : vector<32x4xbf16>, vector<4x128xbf16>, vector<32x128xf32> -> vector<32x128xf32>
    %363 = arith.addf %349, %362 : vector<32x128xf32>
    %c2_299 = arith.constant 2 : index
    %c0_300 = arith.constant 0 : index
    %c0_301 = arith.constant 0 : index
    %364 = vector.load %arg3[%c2_299, %c0_300, %c0_301] : memref<9x32x4xbf16, #tpu.memory_space<vmem>>, vector<1x32x4xbf16>
    %365 = vector.shape_cast %364 : vector<1x32x4xbf16> to vector<32x4xbf16>
    %cst_302 = arith.constant dense<0.000000e+00> : vector<32x128xf32>
    %366 = tpu.matmul %365, %355, %cst_302 {dimension_numbers = #tpu.dot_dimension_numbers<[1], [0], [0], [1], [0, 0, 1, 1], [], []>} : vector<32x4xbf16>, vector<4x128xbf16>, vector<32x128xf32> -> vector<32x128xf32>
    %367 = arith.addf %350, %366 : vector<32x128xf32>
    %c5_i32_303 = arith.constant 5 : i32
    %368 = arith.addi %3, %c5_i32_303 : i32
    %c1_i32_304 = arith.constant 1 : i32
    %369 = arith.addi %368, %c1_i32_304 : i32
    %c0_305 = arith.constant 0 : index
    %370 = arith.index_cast %369 : i32 to index
    %c0_306 = arith.constant 0 : index
    %c0_307 = arith.constant 0 : index
    %371 = vector.load %arg2[%c0_305, %370, %c0_306, %c0_307] : memref<1x18x4x128xbf16, #tpu.memory_space<vmem>>, vector<1x1x4x128xbf16>
    %372 = vector.shape_cast %371 : vector<1x1x4x128xbf16> to vector<4x128xbf16>
    %c3_308 = arith.constant 3 : index
    %c0_309 = arith.constant 0 : index
    %c0_310 = arith.constant 0 : index
    %373 = vector.load %arg3[%c3_308, %c0_309, %c0_310] : memref<9x32x4xbf16, #tpu.memory_space<vmem>>, vector<1x32x4xbf16>
    %374 = vector.shape_cast %373 : vector<1x32x4xbf16> to vector<32x4xbf16>
    %cst_311 = arith.constant dense<0.000000e+00> : vector<32x128xf32>
    %375 = tpu.matmul %374, %372, %cst_311 {dimension_numbers = #tpu.dot_dimension_numbers<[1], [0], [0], [1], [0, 0, 1, 1], [], []>} : vector<32x4xbf16>, vector<4x128xbf16>, vector<32x128xf32> -> vector<32x128xf32>
    %376 = arith.addf %359, %375 : vector<32x128xf32>
    %c4_312 = arith.constant 4 : index
    %c0_313 = arith.constant 0 : index
    %c0_314 = arith.constant 0 : index
    %377 = vector.load %arg3[%c4_312, %c0_313, %c0_314] : memref<9x32x4xbf16, #tpu.memory_space<vmem>>, vector<1x32x4xbf16>
    %378 = vector.shape_cast %377 : vector<1x32x4xbf16> to vector<32x4xbf16>
    %cst_315 = arith.constant dense<0.000000e+00> : vector<32x128xf32>
    %379 = tpu.matmul %378, %372, %cst_315 {dimension_numbers = #tpu.dot_dimension_numbers<[1], [0], [0], [1], [0, 0, 1, 1], [], []>} : vector<32x4xbf16>, vector<4x128xbf16>, vector<32x128xf32> -> vector<32x128xf32>
    %380 = arith.addf %363, %379 : vector<32x128xf32>
    %c5_316 = arith.constant 5 : index
    %c0_317 = arith.constant 0 : index
    %c0_318 = arith.constant 0 : index
    %381 = vector.load %arg3[%c5_316, %c0_317, %c0_318] : memref<9x32x4xbf16, #tpu.memory_space<vmem>>, vector<1x32x4xbf16>
    %382 = vector.shape_cast %381 : vector<1x32x4xbf16> to vector<32x4xbf16>
    %cst_319 = arith.constant dense<0.000000e+00> : vector<32x128xf32>
    %383 = tpu.matmul %382, %372, %cst_319 {dimension_numbers = #tpu.dot_dimension_numbers<[1], [0], [0], [1], [0, 0, 1, 1], [], []>} : vector<32x4xbf16>, vector<4x128xbf16>, vector<32x128xf32> -> vector<32x128xf32>
    %384 = arith.addf %367, %383 : vector<32x128xf32>
    %c5_i32_320 = arith.constant 5 : i32
    %385 = arith.addi %3, %c5_i32_320 : i32
    %c2_i32_321 = arith.constant 2 : i32
    %386 = arith.addi %385, %c2_i32_321 : i32
    %c0_322 = arith.constant 0 : index
    %387 = arith.index_cast %386 : i32 to index
    %c0_323 = arith.constant 0 : index
    %c0_324 = arith.constant 0 : index
    %388 = vector.load %arg2[%c0_322, %387, %c0_323, %c0_324] : memref<1x18x4x128xbf16, #tpu.memory_space<vmem>>, vector<1x1x4x128xbf16>
    %389 = vector.shape_cast %388 : vector<1x1x4x128xbf16> to vector<4x128xbf16>
    %c6_325 = arith.constant 6 : index
    %c0_326 = arith.constant 0 : index
    %c0_327 = arith.constant 0 : index
    %390 = vector.load %arg3[%c6_325, %c0_326, %c0_327] : memref<9x32x4xbf16, #tpu.memory_space<vmem>>, vector<1x32x4xbf16>
    %391 = vector.shape_cast %390 : vector<1x32x4xbf16> to vector<32x4xbf16>
    %cst_328 = arith.constant dense<0.000000e+00> : vector<32x128xf32>
    %392 = tpu.matmul %391, %389, %cst_328 {dimension_numbers = #tpu.dot_dimension_numbers<[1], [0], [0], [1], [0, 0, 1, 1], [], []>} : vector<32x4xbf16>, vector<4x128xbf16>, vector<32x128xf32> -> vector<32x128xf32>
    %393 = arith.addf %376, %392 : vector<32x128xf32>
    %c7_329 = arith.constant 7 : index
    %c0_330 = arith.constant 0 : index
    %c0_331 = arith.constant 0 : index
    %394 = vector.load %arg3[%c7_329, %c0_330, %c0_331] : memref<9x32x4xbf16, #tpu.memory_space<vmem>>, vector<1x32x4xbf16>
    %395 = vector.shape_cast %394 : vector<1x32x4xbf16> to vector<32x4xbf16>
    %cst_332 = arith.constant dense<0.000000e+00> : vector<32x128xf32>
    %396 = tpu.matmul %395, %389, %cst_332 {dimension_numbers = #tpu.dot_dimension_numbers<[1], [0], [0], [1], [0, 0, 1, 1], [], []>} : vector<32x4xbf16>, vector<4x128xbf16>, vector<32x128xf32> -> vector<32x128xf32>
    %397 = arith.addf %380, %396 : vector<32x128xf32>
    %c8_333 = arith.constant 8 : index
    %c0_334 = arith.constant 0 : index
    %c0_335 = arith.constant 0 : index
    %398 = vector.load %arg3[%c8_333, %c0_334, %c0_335] : memref<9x32x4xbf16, #tpu.memory_space<vmem>>, vector<1x32x4xbf16>
    %399 = vector.shape_cast %398 : vector<1x32x4xbf16> to vector<32x4xbf16>
    %cst_336 = arith.constant dense<0.000000e+00> : vector<32x128xf32>
    %400 = tpu.matmul %399, %389, %cst_336 {dimension_numbers = #tpu.dot_dimension_numbers<[1], [0], [0], [1], [0, 0, 1, 1], [], []>} : vector<32x4xbf16>, vector<4x128xbf16>, vector<32x128xf32> -> vector<32x128xf32>
    %401 = arith.addf %384, %400 : vector<32x128xf32>
    %cst_337 = arith.constant dense<0.000000e+00> : vector<32x128xf32>
    %402 = tpu.matmul %401, %6, %cst_337 {dimension_numbers = #tpu.dot_dimension_numbers<[1], [0], [0], [1], [0, 0, 1, 1], [], []>} : vector<32x128xf32>, vector<128x128xf32>, vector<32x128xf32> -> vector<32x128xf32>
    %403 = arith.addf %397, %402 : vector<32x128xf32>
    %cst_338 = arith.constant dense<0.000000e+00> : vector<32x128xf32>
    %404 = tpu.matmul %403, %6, %cst_338 {dimension_numbers = #tpu.dot_dimension_numbers<[1], [0], [0], [1], [0, 0, 1, 1], [], []>} : vector<32x128xf32>, vector<128x128xf32>, vector<32x128xf32> -> vector<32x128xf32>
    %405 = arith.addf %393, %404 : vector<32x128xf32>
    %406 = vector.broadcast %4 : vector<32x1xf32> to vector<32x128xf32>
    %407 = arith.addf %405, %406 : vector<32x128xf32>
    %cst_339 = arith.constant 0.000000e+00 : f32
    %408 = vector.broadcast %cst_339 : f32 to vector<32x128xf32>
    %409 = arith.maximumf %407, %408 : vector<32x128xf32>
    %410 = vector.extract_strided_slice %5 {offsets = [5, 0], sizes = [1, 128], strides = [1, 1]} : vector<8x128xf32> to vector<1x128xf32>
    %411 = vector.broadcast %410 : vector<1x128xf32> to vector<32x128xf32>
    %412 = arith.mulf %409, %411 : vector<32x128xf32>
    %cst_340 = arith.constant dense<0.000000e+00> : vector<32xf32>
    %413 = vector.multi_reduction <add>, %412, %cst_340 [1] : vector<32x128xf32> to vector<32xf32>
    %414 = vector.shape_cast %413 : vector<32xf32> to vector<32x1xf32>
    %415 = arith.addf %347, %414 : vector<32x1xf32>
    %cst_341 = arith.constant 0.000000e+00 : f32
    %416 = vector.broadcast %cst_341 : f32 to vector<32x128xf32>
    %cst_342 = arith.constant 0.000000e+00 : f32
    %417 = vector.broadcast %cst_342 : f32 to vector<32x128xf32>
    %cst_343 = arith.constant 0.000000e+00 : f32
    %418 = vector.broadcast %cst_343 : f32 to vector<32x128xf32>
    %c6_i32 = arith.constant 6 : i32
    %419 = arith.addi %3, %c6_i32 : i32
    %c0_i32_344 = arith.constant 0 : i32
    %420 = arith.addi %419, %c0_i32_344 : i32
    %c0_345 = arith.constant 0 : index
    %421 = arith.index_cast %420 : i32 to index
    %c0_346 = arith.constant 0 : index
    %c0_347 = arith.constant 0 : index
    %422 = vector.load %arg2[%c0_345, %421, %c0_346, %c0_347] : memref<1x18x4x128xbf16, #tpu.memory_space<vmem>>, vector<1x1x4x128xbf16>
    %423 = vector.shape_cast %422 : vector<1x1x4x128xbf16> to vector<4x128xbf16>
    %c0_348 = arith.constant 0 : index
    %c0_349 = arith.constant 0 : index
    %c0_350 = arith.constant 0 : index
    %424 = vector.load %arg3[%c0_348, %c0_349, %c0_350] : memref<9x32x4xbf16, #tpu.memory_space<vmem>>, vector<1x32x4xbf16>
    %425 = vector.shape_cast %424 : vector<1x32x4xbf16> to vector<32x4xbf16>
    %cst_351 = arith.constant dense<0.000000e+00> : vector<32x128xf32>
    %426 = tpu.matmul %425, %423, %cst_351 {dimension_numbers = #tpu.dot_dimension_numbers<[1], [0], [0], [1], [0, 0, 1, 1], [], []>} : vector<32x4xbf16>, vector<4x128xbf16>, vector<32x128xf32> -> vector<32x128xf32>
    %427 = arith.addf %416, %426 : vector<32x128xf32>
    %c1_352 = arith.constant 1 : index
    %c0_353 = arith.constant 0 : index
    %c0_354 = arith.constant 0 : index
    %428 = vector.load %arg3[%c1_352, %c0_353, %c0_354] : memref<9x32x4xbf16, #tpu.memory_space<vmem>>, vector<1x32x4xbf16>
    %429 = vector.shape_cast %428 : vector<1x32x4xbf16> to vector<32x4xbf16>
    %cst_355 = arith.constant dense<0.000000e+00> : vector<32x128xf32>
    %430 = tpu.matmul %429, %423, %cst_355 {dimension_numbers = #tpu.dot_dimension_numbers<[1], [0], [0], [1], [0, 0, 1, 1], [], []>} : vector<32x4xbf16>, vector<4x128xbf16>, vector<32x128xf32> -> vector<32x128xf32>
    %431 = arith.addf %417, %430 : vector<32x128xf32>
    %c2_356 = arith.constant 2 : index
    %c0_357 = arith.constant 0 : index
    %c0_358 = arith.constant 0 : index
    %432 = vector.load %arg3[%c2_356, %c0_357, %c0_358] : memref<9x32x4xbf16, #tpu.memory_space<vmem>>, vector<1x32x4xbf16>
    %433 = vector.shape_cast %432 : vector<1x32x4xbf16> to vector<32x4xbf16>
    %cst_359 = arith.constant dense<0.000000e+00> : vector<32x128xf32>
    %434 = tpu.matmul %433, %423, %cst_359 {dimension_numbers = #tpu.dot_dimension_numbers<[1], [0], [0], [1], [0, 0, 1, 1], [], []>} : vector<32x4xbf16>, vector<4x128xbf16>, vector<32x128xf32> -> vector<32x128xf32>
    %435 = arith.addf %418, %434 : vector<32x128xf32>
    %c6_i32_360 = arith.constant 6 : i32
    %436 = arith.addi %3, %c6_i32_360 : i32
    %c1_i32_361 = arith.constant 1 : i32
    %437 = arith.addi %436, %c1_i32_361 : i32
    %c0_362 = arith.constant 0 : index
    %438 = arith.index_cast %437 : i32 to index
    %c0_363 = arith.constant 0 : index
    %c0_364 = arith.constant 0 : index
    %439 = vector.load %arg2[%c0_362, %438, %c0_363, %c0_364] : memref<1x18x4x128xbf16, #tpu.memory_space<vmem>>, vector<1x1x4x128xbf16>
    %440 = vector.shape_cast %439 : vector<1x1x4x128xbf16> to vector<4x128xbf16>
    %c3_365 = arith.constant 3 : index
    %c0_366 = arith.constant 0 : index
    %c0_367 = arith.constant 0 : index
    %441 = vector.load %arg3[%c3_365, %c0_366, %c0_367] : memref<9x32x4xbf16, #tpu.memory_space<vmem>>, vector<1x32x4xbf16>
    %442 = vector.shape_cast %441 : vector<1x32x4xbf16> to vector<32x4xbf16>
    %cst_368 = arith.constant dense<0.000000e+00> : vector<32x128xf32>
    %443 = tpu.matmul %442, %440, %cst_368 {dimension_numbers = #tpu.dot_dimension_numbers<[1], [0], [0], [1], [0, 0, 1, 1], [], []>} : vector<32x4xbf16>, vector<4x128xbf16>, vector<32x128xf32> -> vector<32x128xf32>
    %444 = arith.addf %427, %443 : vector<32x128xf32>
    %c4_369 = arith.constant 4 : index
    %c0_370 = arith.constant 0 : index
    %c0_371 = arith.constant 0 : index
    %445 = vector.load %arg3[%c4_369, %c0_370, %c0_371] : memref<9x32x4xbf16, #tpu.memory_space<vmem>>, vector<1x32x4xbf16>
    %446 = vector.shape_cast %445 : vector<1x32x4xbf16> to vector<32x4xbf16>
    %cst_372 = arith.constant dense<0.000000e+00> : vector<32x128xf32>
    %447 = tpu.matmul %446, %440, %cst_372 {dimension_numbers = #tpu.dot_dimension_numbers<[1], [0], [0], [1], [0, 0, 1, 1], [], []>} : vector<32x4xbf16>, vector<4x128xbf16>, vector<32x128xf32> -> vector<32x128xf32>
    %448 = arith.addf %431, %447 : vector<32x128xf32>
    %c5_373 = arith.constant 5 : index
    %c0_374 = arith.constant 0 : index
    %c0_375 = arith.constant 0 : index
    %449 = vector.load %arg3[%c5_373, %c0_374, %c0_375] : memref<9x32x4xbf16, #tpu.memory_space<vmem>>, vector<1x32x4xbf16>
    %450 = vector.shape_cast %449 : vector<1x32x4xbf16> to vector<32x4xbf16>
    %cst_376 = arith.constant dense<0.000000e+00> : vector<32x128xf32>
    %451 = tpu.matmul %450, %440, %cst_376 {dimension_numbers = #tpu.dot_dimension_numbers<[1], [0], [0], [1], [0, 0, 1, 1], [], []>} : vector<32x4xbf16>, vector<4x128xbf16>, vector<32x128xf32> -> vector<32x128xf32>
    %452 = arith.addf %435, %451 : vector<32x128xf32>
    %c6_i32_377 = arith.constant 6 : i32
    %453 = arith.addi %3, %c6_i32_377 : i32
    %c2_i32_378 = arith.constant 2 : i32
    %454 = arith.addi %453, %c2_i32_378 : i32
    %c0_379 = arith.constant 0 : index
    %455 = arith.index_cast %454 : i32 to index
    %c0_380 = arith.constant 0 : index
    %c0_381 = arith.constant 0 : index
    %456 = vector.load %arg2[%c0_379, %455, %c0_380, %c0_381] : memref<1x18x4x128xbf16, #tpu.memory_space<vmem>>, vector<1x1x4x128xbf16>
    %457 = vector.shape_cast %456 : vector<1x1x4x128xbf16> to vector<4x128xbf16>
    %c6_382 = arith.constant 6 : index
    %c0_383 = arith.constant 0 : index
    %c0_384 = arith.constant 0 : index
    %458 = vector.load %arg3[%c6_382, %c0_383, %c0_384] : memref<9x32x4xbf16, #tpu.memory_space<vmem>>, vector<1x32x4xbf16>
    %459 = vector.shape_cast %458 : vector<1x32x4xbf16> to vector<32x4xbf16>
    %cst_385 = arith.constant dense<0.000000e+00> : vector<32x128xf32>
    %460 = tpu.matmul %459, %457, %cst_385 {dimension_numbers = #tpu.dot_dimension_numbers<[1], [0], [0], [1], [0, 0, 1, 1], [], []>} : vector<32x4xbf16>, vector<4x128xbf16>, vector<32x128xf32> -> vector<32x128xf32>
    %461 = arith.addf %444, %460 : vector<32x128xf32>
    %c7_386 = arith.constant 7 : index
    %c0_387 = arith.constant 0 : index
    %c0_388 = arith.constant 0 : index
    %462 = vector.load %arg3[%c7_386, %c0_387, %c0_388] : memref<9x32x4xbf16, #tpu.memory_space<vmem>>, vector<1x32x4xbf16>
    %463 = vector.shape_cast %462 : vector<1x32x4xbf16> to vector<32x4xbf16>
    %cst_389 = arith.constant dense<0.000000e+00> : vector<32x128xf32>
    %464 = tpu.matmul %463, %457, %cst_389 {dimension_numbers = #tpu.dot_dimension_numbers<[1], [0], [0], [1], [0, 0, 1, 1], [], []>} : vector<32x4xbf16>, vector<4x128xbf16>, vector<32x128xf32> -> vector<32x128xf32>
    %465 = arith.addf %448, %464 : vector<32x128xf32>
    %c8_390 = arith.constant 8 : index
    %c0_391 = arith.constant 0 : index
    %c0_392 = arith.constant 0 : index
    %466 = vector.load %arg3[%c8_390, %c0_391, %c0_392] : memref<9x32x4xbf16, #tpu.memory_space<vmem>>, vector<1x32x4xbf16>
    %467 = vector.shape_cast %466 : vector<1x32x4xbf16> to vector<32x4xbf16>
    %cst_393 = arith.constant dense<0.000000e+00> : vector<32x128xf32>
    %468 = tpu.matmul %467, %457, %cst_393 {dimension_numbers = #tpu.dot_dimension_numbers<[1], [0], [0], [1], [0, 0, 1, 1], [], []>} : vector<32x4xbf16>, vector<4x128xbf16>, vector<32x128xf32> -> vector<32x128xf32>
    %469 = arith.addf %452, %468 : vector<32x128xf32>
    %cst_394 = arith.constant dense<0.000000e+00> : vector<32x128xf32>
    %470 = tpu.matmul %469, %6, %cst_394 {dimension_numbers = #tpu.dot_dimension_numbers<[1], [0], [0], [1], [0, 0, 1, 1], [], []>} : vector<32x128xf32>, vector<128x128xf32>, vector<32x128xf32> -> vector<32x128xf32>
    %471 = arith.addf %465, %470 : vector<32x128xf32>
    %cst_395 = arith.constant dense<0.000000e+00> : vector<32x128xf32>
    %472 = tpu.matmul %471, %6, %cst_395 {dimension_numbers = #tpu.dot_dimension_numbers<[1], [0], [0], [1], [0, 0, 1, 1], [], []>} : vector<32x128xf32>, vector<128x128xf32>, vector<32x128xf32> -> vector<32x128xf32>
    %473 = arith.addf %461, %472 : vector<32x128xf32>
    %474 = vector.broadcast %4 : vector<32x1xf32> to vector<32x128xf32>
    %475 = arith.addf %473, %474 : vector<32x128xf32>
    %cst_396 = arith.constant 0.000000e+00 : f32
    %476 = vector.broadcast %cst_396 : f32 to vector<32x128xf32>
    %477 = arith.maximumf %475, %476 : vector<32x128xf32>
    %478 = vector.extract_strided_slice %5 {offsets = [6, 0], sizes = [1, 128], strides = [1, 1]} : vector<8x128xf32> to vector<1x128xf32>
    %479 = vector.broadcast %478 : vector<1x128xf32> to vector<32x128xf32>
    %480 = arith.mulf %477, %479 : vector<32x128xf32>
    %cst_397 = arith.constant dense<0.000000e+00> : vector<32xf32>
    %481 = vector.multi_reduction <add>, %480, %cst_397 [1] : vector<32x128xf32> to vector<32xf32>
    %482 = vector.shape_cast %481 : vector<32xf32> to vector<32x1xf32>
    %483 = arith.addf %415, %482 : vector<32x1xf32>
    %cst_398 = arith.constant 0.000000e+00 : f32
    %484 = vector.broadcast %cst_398 : f32 to vector<32x128xf32>
    %cst_399 = arith.constant 0.000000e+00 : f32
    %485 = vector.broadcast %cst_399 : f32 to vector<32x128xf32>
    %cst_400 = arith.constant 0.000000e+00 : f32
    %486 = vector.broadcast %cst_400 : f32 to vector<32x128xf32>
    %c7_i32 = arith.constant 7 : i32
    %487 = arith.addi %3, %c7_i32 : i32
    %c0_i32_401 = arith.constant 0 : i32
    %488 = arith.addi %487, %c0_i32_401 : i32
    %c0_402 = arith.constant 0 : index
    %489 = arith.index_cast %488 : i32 to index
    %c0_403 = arith.constant 0 : index
    %c0_404 = arith.constant 0 : index
    %490 = vector.load %arg2[%c0_402, %489, %c0_403, %c0_404] : memref<1x18x4x128xbf16, #tpu.memory_space<vmem>>, vector<1x1x4x128xbf16>
    %491 = vector.shape_cast %490 : vector<1x1x4x128xbf16> to vector<4x128xbf16>
    %c0_405 = arith.constant 0 : index
    %c0_406 = arith.constant 0 : index
    %c0_407 = arith.constant 0 : index
    %492 = vector.load %arg3[%c0_405, %c0_406, %c0_407] : memref<9x32x4xbf16, #tpu.memory_space<vmem>>, vector<1x32x4xbf16>
    %493 = vector.shape_cast %492 : vector<1x32x4xbf16> to vector<32x4xbf16>
    %cst_408 = arith.constant dense<0.000000e+00> : vector<32x128xf32>
    %494 = tpu.matmul %493, %491, %cst_408 {dimension_numbers = #tpu.dot_dimension_numbers<[1], [0], [0], [1], [0, 0, 1, 1], [], []>} : vector<32x4xbf16>, vector<4x128xbf16>, vector<32x128xf32> -> vector<32x128xf32>
    %495 = arith.addf %484, %494 : vector<32x128xf32>
    %c1_409 = arith.constant 1 : index
    %c0_410 = arith.constant 0 : index
    %c0_411 = arith.constant 0 : index
    %496 = vector.load %arg3[%c1_409, %c0_410, %c0_411] : memref<9x32x4xbf16, #tpu.memory_space<vmem>>, vector<1x32x4xbf16>
    %497 = vector.shape_cast %496 : vector<1x32x4xbf16> to vector<32x4xbf16>
    %cst_412 = arith.constant dense<0.000000e+00> : vector<32x128xf32>
    %498 = tpu.matmul %497, %491, %cst_412 {dimension_numbers = #tpu.dot_dimension_numbers<[1], [0], [0], [1], [0, 0, 1, 1], [], []>} : vector<32x4xbf16>, vector<4x128xbf16>, vector<32x128xf32> -> vector<32x128xf32>
    %499 = arith.addf %485, %498 : vector<32x128xf32>
    %c2_413 = arith.constant 2 : index
    %c0_414 = arith.constant 0 : index
    %c0_415 = arith.constant 0 : index
    %500 = vector.load %arg3[%c2_413, %c0_414, %c0_415] : memref<9x32x4xbf16, #tpu.memory_space<vmem>>, vector<1x32x4xbf16>
    %501 = vector.shape_cast %500 : vector<1x32x4xbf16> to vector<32x4xbf16>
    %cst_416 = arith.constant dense<0.000000e+00> : vector<32x128xf32>
    %502 = tpu.matmul %501, %491, %cst_416 {dimension_numbers = #tpu.dot_dimension_numbers<[1], [0], [0], [1], [0, 0, 1, 1], [], []>} : vector<32x4xbf16>, vector<4x128xbf16>, vector<32x128xf32> -> vector<32x128xf32>
    %503 = arith.addf %486, %502 : vector<32x128xf32>
    %c7_i32_417 = arith.constant 7 : i32
    %504 = arith.addi %3, %c7_i32_417 : i32
    %c1_i32_418 = arith.constant 1 : i32
    %505 = arith.addi %504, %c1_i32_418 : i32
    %c0_419 = arith.constant 0 : index
    %506 = arith.index_cast %505 : i32 to index
    %c0_420 = arith.constant 0 : index
    %c0_421 = arith.constant 0 : index
    %507 = vector.load %arg2[%c0_419, %506, %c0_420, %c0_421] : memref<1x18x4x128xbf16, #tpu.memory_space<vmem>>, vector<1x1x4x128xbf16>
    %508 = vector.shape_cast %507 : vector<1x1x4x128xbf16> to vector<4x128xbf16>
    %c3_422 = arith.constant 3 : index
    %c0_423 = arith.constant 0 : index
    %c0_424 = arith.constant 0 : index
    %509 = vector.load %arg3[%c3_422, %c0_423, %c0_424] : memref<9x32x4xbf16, #tpu.memory_space<vmem>>, vector<1x32x4xbf16>
    %510 = vector.shape_cast %509 : vector<1x32x4xbf16> to vector<32x4xbf16>
    %cst_425 = arith.constant dense<0.000000e+00> : vector<32x128xf32>
    %511 = tpu.matmul %510, %508, %cst_425 {dimension_numbers = #tpu.dot_dimension_numbers<[1], [0], [0], [1], [0, 0, 1, 1], [], []>} : vector<32x4xbf16>, vector<4x128xbf16>, vector<32x128xf32> -> vector<32x128xf32>
    %512 = arith.addf %495, %511 : vector<32x128xf32>
    %c4_426 = arith.constant 4 : index
    %c0_427 = arith.constant 0 : index
    %c0_428 = arith.constant 0 : index
    %513 = vector.load %arg3[%c4_426, %c0_427, %c0_428] : memref<9x32x4xbf16, #tpu.memory_space<vmem>>, vector<1x32x4xbf16>
    %514 = vector.shape_cast %513 : vector<1x32x4xbf16> to vector<32x4xbf16>
    %cst_429 = arith.constant dense<0.000000e+00> : vector<32x128xf32>
    %515 = tpu.matmul %514, %508, %cst_429 {dimension_numbers = #tpu.dot_dimension_numbers<[1], [0], [0], [1], [0, 0, 1, 1], [], []>} : vector<32x4xbf16>, vector<4x128xbf16>, vector<32x128xf32> -> vector<32x128xf32>
    %516 = arith.addf %499, %515 : vector<32x128xf32>
    %c5_430 = arith.constant 5 : index
    %c0_431 = arith.constant 0 : index
    %c0_432 = arith.constant 0 : index
    %517 = vector.load %arg3[%c5_430, %c0_431, %c0_432] : memref<9x32x4xbf16, #tpu.memory_space<vmem>>, vector<1x32x4xbf16>
    %518 = vector.shape_cast %517 : vector<1x32x4xbf16> to vector<32x4xbf16>
    %cst_433 = arith.constant dense<0.000000e+00> : vector<32x128xf32>
    %519 = tpu.matmul %518, %508, %cst_433 {dimension_numbers = #tpu.dot_dimension_numbers<[1], [0], [0], [1], [0, 0, 1, 1], [], []>} : vector<32x4xbf16>, vector<4x128xbf16>, vector<32x128xf32> -> vector<32x128xf32>
    %520 = arith.addf %503, %519 : vector<32x128xf32>
    %c7_i32_434 = arith.constant 7 : i32
    %521 = arith.addi %3, %c7_i32_434 : i32
    %c2_i32_435 = arith.constant 2 : i32
    %522 = arith.addi %521, %c2_i32_435 : i32
    %c0_436 = arith.constant 0 : index
    %523 = arith.index_cast %522 : i32 to index
    %c0_437 = arith.constant 0 : index
    %c0_438 = arith.constant 0 : index
    %524 = vector.load %arg2[%c0_436, %523, %c0_437, %c0_438] : memref<1x18x4x128xbf16, #tpu.memory_space<vmem>>, vector<1x1x4x128xbf16>
    %525 = vector.shape_cast %524 : vector<1x1x4x128xbf16> to vector<4x128xbf16>
    %c6_439 = arith.constant 6 : index
    %c0_440 = arith.constant 0 : index
    %c0_441 = arith.constant 0 : index
    %526 = vector.load %arg3[%c6_439, %c0_440, %c0_441] : memref<9x32x4xbf16, #tpu.memory_space<vmem>>, vector<1x32x4xbf16>
    %527 = vector.shape_cast %526 : vector<1x32x4xbf16> to vector<32x4xbf16>
    %cst_442 = arith.constant dense<0.000000e+00> : vector<32x128xf32>
    %528 = tpu.matmul %527, %525, %cst_442 {dimension_numbers = #tpu.dot_dimension_numbers<[1], [0], [0], [1], [0, 0, 1, 1], [], []>} : vector<32x4xbf16>, vector<4x128xbf16>, vector<32x128xf32> -> vector<32x128xf32>
    %529 = arith.addf %512, %528 : vector<32x128xf32>
    %c7_443 = arith.constant 7 : index
    %c0_444 = arith.constant 0 : index
    %c0_445 = arith.constant 0 : index
    %530 = vector.load %arg3[%c7_443, %c0_444, %c0_445] : memref<9x32x4xbf16, #tpu.memory_space<vmem>>, vector<1x32x4xbf16>
    %531 = vector.shape_cast %530 : vector<1x32x4xbf16> to vector<32x4xbf16>
    %cst_446 = arith.constant dense<0.000000e+00> : vector<32x128xf32>
    %532 = tpu.matmul %531, %525, %cst_446 {dimension_numbers = #tpu.dot_dimension_numbers<[1], [0], [0], [1], [0, 0, 1, 1], [], []>} : vector<32x4xbf16>, vector<4x128xbf16>, vector<32x128xf32> -> vector<32x128xf32>
    %533 = arith.addf %516, %532 : vector<32x128xf32>
    %c8_447 = arith.constant 8 : index
    %c0_448 = arith.constant 0 : index
    %c0_449 = arith.constant 0 : index
    %534 = vector.load %arg3[%c8_447, %c0_448, %c0_449] : memref<9x32x4xbf16, #tpu.memory_space<vmem>>, vector<1x32x4xbf16>
    %535 = vector.shape_cast %534 : vector<1x32x4xbf16> to vector<32x4xbf16>
    %cst_450 = arith.constant dense<0.000000e+00> : vector<32x128xf32>
    %536 = tpu.matmul %535, %525, %cst_450 {dimension_numbers = #tpu.dot_dimension_numbers<[1], [0], [0], [1], [0, 0, 1, 1], [], []>} : vector<32x4xbf16>, vector<4x128xbf16>, vector<32x128xf32> -> vector<32x128xf32>
    %537 = arith.addf %520, %536 : vector<32x128xf32>
    %cst_451 = arith.constant dense<0.000000e+00> : vector<32x128xf32>
    %538 = tpu.matmul %537, %6, %cst_451 {dimension_numbers = #tpu.dot_dimension_numbers<[1], [0], [0], [1], [0, 0, 1, 1], [], []>} : vector<32x128xf32>, vector<128x128xf32>, vector<32x128xf32> -> vector<32x128xf32>
    %539 = arith.addf %533, %538 : vector<32x128xf32>
    %cst_452 = arith.constant dense<0.000000e+00> : vector<32x128xf32>
    %540 = tpu.matmul %539, %6, %cst_452 {dimension_numbers = #tpu.dot_dimension_numbers<[1], [0], [0], [1], [0, 0, 1, 1], [], []>} : vector<32x128xf32>, vector<128x128xf32>, vector<32x128xf32> -> vector<32x128xf32>
    %541 = arith.addf %529, %540 : vector<32x128xf32>
    %542 = vector.broadcast %4 : vector<32x1xf32> to vector<32x128xf32>
    %543 = arith.addf %541, %542 : vector<32x128xf32>
    %cst_453 = arith.constant 0.000000e+00 : f32
    %544 = vector.broadcast %cst_453 : f32 to vector<32x128xf32>
    %545 = arith.maximumf %543, %544 : vector<32x128xf32>
    %546 = vector.extract_strided_slice %5 {offsets = [7, 0], sizes = [1, 128], strides = [1, 1]} : vector<8x128xf32> to vector<1x128xf32>
    %547 = vector.broadcast %546 : vector<1x128xf32> to vector<32x128xf32>
    %548 = arith.mulf %545, %547 : vector<32x128xf32>
    %cst_454 = arith.constant dense<0.000000e+00> : vector<32xf32>
    %549 = vector.multi_reduction <add>, %548, %cst_454 [1] : vector<32x128xf32> to vector<32xf32>
    %550 = vector.shape_cast %549 : vector<32xf32> to vector<32x1xf32>
    %551 = arith.addf %483, %550 : vector<32x1xf32>
    %c0_455 = arith.constant 0 : index
    %c0_456 = arith.constant 0 : index
    %552 = vector.load %arg8[%c0_455, %c0_456] : memref<32x1xf32, #tpu.memory_space<vmem>>, vector<32x1xf32>
    %553 = arith.addf %552, %551 : vector<32x1xf32>
    %c0_457 = arith.constant 0 : index
    %c0_458 = arith.constant 0 : index
    %554 = vector.load %arg8[%c0_457, %c0_458] : memref<32x1xf32, #tpu.memory_space<vmem>>, vector<32x1xf32>
    tpu.vector_store %arg8[%c0_457, %c0_458], %553 {strides = array<i32>} : memref<32x1xf32, #tpu.memory_space<vmem>>, vector<32x1xf32>,
    %c1_i32_459 = arith.constant 1 : i32
    %555 = arith.cmpi eq, %arg1, %c1_i32_459 : i32
    %556 = arith.extui %555 : i1 to i32
    %c0_i32_460 = arith.constant 0 : i32
    %557 = arith.cmpi ne, %556, %c0_i32_460 : i32
    scf.if %557 {
      %c0_461 = arith.constant 0 : index
      %c0_462 = arith.constant 0 : index
      %558 = vector.load %arg8[%c0_461, %c0_462] : memref<32x1xf32, #tpu.memory_space<vmem>>, vector<32x1xf32>
      %cst_463 = arith.constant 3.906250e-03 : f32
      %559 = vector.broadcast %cst_463 : f32 to vector<32x1xf32>
      %560 = arith.mulf %558, %559 : vector<32x1xf32>
      %561 = vector.shape_cast %560 : vector<32x1xf32> to vector<1x32x1xf32>
      %c0_464 = arith.constant 0 : index
      %c0_465 = arith.constant 0 : index
      %c0_466 = arith.constant 0 : index
      %562 = vector.load %arg7[%c0_464, %c0_465, %c0_466] : memref<1x32x1xf32, #tpu.memory_space<vmem>>, vector<1x32x1xf32>
      tpu.vector_store %arg7[%c0_464, %c0_465, %c0_466], %561 {strides = array<i32>} : memref<1x32x1xf32, #tpu.memory_space<vmem>>, vector<1x32x1xf32>,
    } else {
    }
    return
  }
  func.func @transform_0(%arg0: i32, %arg1: i32) -> (i32, i32, i32, i32) {
    %c0_i32 = arith.constant 0 : i32
    %c0_i32_0 = arith.constant 0 : i32
    %c0_i32_1 = arith.constant 0 : i32
    %c0_i32_2 = arith.constant 0 : i32
    return %arg0, %c0_i32, %c0_i32_0, %c0_i32_1 : i32, i32, i32, i32
  }
  func.func @transform_1(%arg0: i32, %arg1: i32) -> (i32, i32, i32) {
    %c0_i32 = arith.constant 0 : i32
    %c0_i32_0 = arith.constant 0 : i32
    %c0_i32_1 = arith.constant 0 : i32
    %c0_i32_2 = arith.constant 0 : i32
    return %c0_i32, %c0_i32_0, %c0_i32_1 : i32, i32, i32
  }
  func.func @transform_2(%arg0: i32, %arg1: i32) -> (i32, i32) {
    %c0_i32 = arith.constant 0 : i32
    %c0_i32_0 = arith.constant 0 : i32
    %c0_i32_1 = arith.constant 0 : i32
    return %c0_i32, %c0_i32_0 : i32, i32
  }
  func.func @transform_3(%arg0: i32, %arg1: i32) -> (i32, i32) {
    %c0_i32 = arith.constant 0 : i32
    %c0_i32_0 = arith.constant 0 : i32
    %c0_i32_1 = arith.constant 0 : i32
    return %c0_i32, %c0_i32_0 : i32, i32
  }
  func.func @transform_4(%arg0: i32, %arg1: i32) -> (i32, i32) {
    %c0_i32 = arith.constant 0 : i32
    %c0_i32_0 = arith.constant 0 : i32
    return %arg1, %c0_i32 : i32, i32
  }
  func.func @transform_5(%arg0: i32, %arg1: i32) -> (i32, i32, i32) {
    %c0_i32 = arith.constant 0 : i32
    %c0_i32_0 = arith.constant 0 : i32
    %c0_i32_1 = arith.constant 0 : i32
    return %arg0, %c0_i32, %c0_i32_0 : i32, i32, i32
  }
}

</mosaic_0001>

<llo_original>
// kernel: tpu_custom_call.1
$region0: #{tpu_custom_call.1}
  #allocation0 [shape = 'u32[]', space=smem, size = 0x4, offset = 0x4, fixed_abs, tag = 'smem constant byte address 0x4 - core index']
  #allocation1 [shape = 'u32[72,128]{1,0:T(1,128)}', space=vmem, size = 0x9000, scoped, tag = 'internal scratch']
  #allocation2 [shape = 'f32[32,1]{1,0:T(8,128)}', space=vmem, size = 0x4000, scoped, tag = 'scratch operand']
  %s0 = inlined_call_operand.hbm [shape: bf16[2,18,4,128], index: 0, kind: input, shape index: {}]
  %s1 = inlined_call_operand.vmem [shape: bf16[9,32,4], index: 1, kind: input, shape index: {}]
  %s2 = inlined_call_operand.vmem [shape: f32[128,128], index: 2, kind: input, shape index: {}]
  %s3 = inlined_call_operand.vmem [shape: f32[32,1], index: 3, kind: input, shape index: {}]
  %s4 = inlined_call_operand.vmem [shape: f32[16,128], index: 4, kind: input, shape index: {}]
  %s5 = inlined_call_operand.vmem [shape: f32[2,32,1], index: 5, kind: output, shape index: {}]
  %s6 = sld [smem:[#allocation0]]
  $region65: #{tpu_custom_call.1} parent=0
    _
  %s8 = ssub.s32 1, %s6
  %s9 = scalar_select 0, %s8, %s6
  $region1: #{tpu_custom_call.1} parent=0
    #allocation3 [shape = 'u8[36864]{0}', space=vmem, size = 0x9000, scoped, tag = 'input window, operand 0']
    #allocation4 [shape = 's32[2]{0}', space=sflag, size = 0x8, scoped, tag = 'scoped memory for tpu_custom_call.1']
    %10 = vsyncpa [#allocation4], 0
    %s11 = scalar_lea.sflag [#allocation4], 1
    %12 = vsyncpa %s11, 0
    loop: start=0, step=1, limit=6
    $region2: #{tpu_custom_call.1} parent=1 // loop_pre_header
      _
    $region3: #{tpu_custom_call.1} parent=1 // loop_header
      %s14 = sphi 0, %s18
      %p15 = scmp.ge.s32.totalorder %s14, 6
      %s21 = sphi 0, %s33
      %s22 = sphi 0, %s29
      %s23 = sphi 0, %s21
      %s24 = sphi 0, %s22
      %s25 = sphi 0, %s23
      %s26 = sphi 0, %s24
      %s36 = sphi 0, %s38
      %s39 = sphi 0, %s36
      %s40 = sphi 0, %s39
      %s56 = sphi 0, %s40
      %s60 = sphi 0, %s60
      %s62 = sphi 0, %s60
      %s63 = sphi 0, %s62
      %s77 = sphi 0, %s63
      %s81 = sphi 0, %s81
      %s83 = sphi 0, %s81
      %s84 = sphi 0, %s83
      %s98 = sphi 0, %s84
      %s102 = sphi 0, %s102
      %s104 = sphi 0, %s102
      %s105 = sphi 0, %s104
      %s119 = sphi 0, %s105
      %s125 = sphi 0, %s127
      %s128 = sphi 0, %s125
      %s129 = sphi 0, %s128
      %s145 = sphi 0, %s129
      %s151 = sphi 0, %s153
      %s154 = sphi 0, %s151
      %s155 = sphi 0, %s154
      %s171 = sphi 0, %s155
    $region4: #{tpu_custom_call.1} parent=1 // loop_header_branch
      %17 = sbr.rel (%p15) target = $region8
    $region5: #{tpu_custom_call.1} parent=1 // loop_body
      %s19 = ssub.s32 %s14, 1
      %s20 = ssub.s32 %s14, 2
      %s27 = sadd.s32 1, %s22
      %p28 = scmp.ge.s32.totalorder %s27, 2
      %s29 = scalar_select %p28, 0, %s27
      %s30 = sadd.s32 1, %s21
      %s31 = scalar_select %p28, %s30, %s21
      %p32 = scmp.ge.s32.totalorder %s31, 2
      %s33 = scalar_select %p32, 0, %s31
      %s34 = ssub.s32 %s21, %s33
      %p35 = scmp.eq.s32.totalorder %s34, 0
      %s37 = sadd.s32 %s36, 1
      %s38 = scalar_select %p35, %s36, %s37
      %p41 = pneg %p35
      %p42 = scmp.eq.s32.totalorder %s14, 3
      %p43 = por %p41, %p42
      %p44 = scmp.ne.s32.totalorder %s36, %s39
      %p45 = scmp.eq.s32.totalorder %s14, 0
      %p46 = por %p44, %p45
      %p47 = scmp.ne.s32.totalorder %s36, %s39
      %p48 = scmp.eq.s32.totalorder %s19, 3
      %p49 = por %p47, %p48
      %p50 = scmp.ne.s32.totalorder %s39, %s40
      %p51 = scmp.eq.s32.totalorder %s19, 0
      %p52 = por %p50, %p51
      %p53 = scmp.ne.s32.totalorder %s39, %s40
      %p54 = scmp.eq.s32.totalorder %s20, 3
      %p55 = por %p53, %p54
      %p57 = scmp.ne.s32.totalorder %s40, %s56
      %p58 = scmp.eq.s32.totalorder %s20, 0
      %p59 = por %p57, %p58
      %s61 = sadd.s32 %s60, 1
      %p64 = scmp.eq.s32.totalorder %s14, 3
      %p65 = scmp.ne.s32.totalorder %s60, %s62
      %p66 = scmp.eq.s32.totalorder %s14, 0
      %p67 = por %p65, %p66
      %p68 = scmp.ne.s32.totalorder %s60, %s62
      %p69 = scmp.eq.s32.totalorder %s19, 3
      %p70 = por %p68, %p69
      %p71 = scmp.ne.s32.totalorder %s62, %s63
      %p72 = scmp.eq.s32.totalorder %s19, 0
      %p73 = por %p71, %p72
      %p74 = scmp.ne.s32.totalorder %s62, %s63
      %p75 = scmp.eq.s32.totalorder %s20, 3
      %p76 = por %p74, %p75
      %p78 = scmp.ne.s32.totalorder %s63, %s77
      %p79 = scmp.eq.s32.totalorder %s20, 0
      %p80 = por %p78, %p79
      %s82 = sadd.s32 %s81, 1
      %p85 = scmp.eq.s32.totalorder %s14, 3
      %p86 = scmp.ne.s32.totalorder %s81, %s83
      %p87 = scmp.eq.s32.totalorder %s14, 0
      %p88 = por %p86, %p87
      %p89 = scmp.ne.s32.totalorder %s81, %s83
      %p90 = scmp.eq.s32.totalorder %s19, 3
      %p91 = por %p89, %p90
      %p92 = scmp.ne.s32.totalorder %s83, %s84
      %p93 = scmp.eq.s32.totalorder %s19, 0
      %p94 = por %p92, %p93
      %p95 = scmp.ne.s32.totalorder %s83, %s84
      %p96 = scmp.eq.s32.totalorder %s20, 3
      %p97 = por %p95, %p96
      %p99 = scmp.ne.s32.totalorder %s84, %s98
      %p100 = scmp.eq.s32.totalorder %s20, 0
      %p101 = por %p99, %p100
      %s103 = sadd.s32 %s102, 1
      %p106 = scmp.eq.s32.totalorder %s14, 3
      %p107 = scmp.ne.s32.totalorder %s102, %s104
      %p108 = scmp.eq.s32.totalorder %s14, 0
      %p109 = por %p107, %p108
      %p110 = scmp.ne.s32.totalorder %s102, %s104
      %p111 = scmp.eq.s32.totalorder %s19, 3
      %p112 = por %p110, %p111
      %p113 = scmp.ne.s32.totalorder %s104, %s105
      %p114 = scmp.eq.s32.totalorder %s19, 0
      %p115 = por %p113, %p114
      %p116 = scmp.ne.s32.totalorder %s104, %s105
      %p117 = scmp.eq.s32.totalorder %s20, 3
      %p118 = por %p116, %p117
      %p120 = scmp.ne.s32.totalorder %s105, %s119
      %p121 = scmp.eq.s32.totalorder %s20, 0
      %p122 = por %p120, %p121
      %s123 = ssub.s32 %s22, %s29
      %p124 = scmp.eq.s32.totalorder %s123, 0
      %s126 = sadd.s32 %s125, 1
      %s127 = scalar_select %p124, %s125, %s126
      %p130 = pneg %p124
      %p131 = scmp.eq.s32.totalorder %s14, 3
      %p132 = por %p130, %p131
      %p133 = scmp.ne.s32.totalorder %s125, %s128
      %p134 = scmp.eq.s32.totalorder %s14, 0
      %p135 = por %p133, %p134
      %p136 = scmp.ne.s32.totalorder %s125, %s128
      %p137 = scmp.eq.s32.totalorder %s19, 3
      %p138 = por %p136, %p137
      %p139 = scmp.ne.s32.totalorder %s128, %s129
      %p140 = scmp.eq.s32.totalorder %s19, 0
      %p141 = por %p139, %p140
      %p142 = scmp.ne.s32.totalorder %s128, %s129
      %p143 = scmp.eq.s32.totalorder %s20, 3
      %p144 = por %p142, %p143
      %p146 = scmp.ne.s32.totalorder %s129, %s145
      %p147 = scmp.eq.s32.totalorder %s20, 0
      %p148 = por %p146, %p147
      %s149 = ssub.s32 %s21, %s33
      %p150 = scmp.eq.s32.totalorder %s149, 0
      %s152 = sadd.s32 %s151, 1
      %s153 = scalar_select %p150, %s151, %s152
      %p156 = pneg %p150
      %p157 = scmp.eq.s32.totalorder %s14, 3
      %p158 = por %p156, %p157
      %p159 = scmp.ne.s32.totalorder %s151, %s154
      %p160 = scmp.eq.s32.totalorder %s14, 0
      %p161 = por %p159, %p160
      %p162 = scmp.ne.s32.totalorder %s151, %s154
      %p163 = scmp.eq.s32.totalorder %s19, 3
      %p164 = por %p162, %p163
      %p165 = scmp.ne.s32.totalorder %s154, %s155
      %p166 = scmp.eq.s32.totalorder %s19, 0
      %p167 = por %p165, %p166
      %p168 = scmp.ne.s32.totalorder %s154, %s155
      %p169 = scmp.eq.s32.totalorder %s20, 3
      %p170 = por %p168, %p169
      %p172 = scmp.ne.s32.totalorder %s155, %s171
      %p173 = scmp.eq.s32.totalorder %s20, 0
      %p174 = por %p172, %p173
      %p175 = scmp.le.s32.totalorder 1, %s14
      %p176 = scmp.lt.s32.totalorder %s14, 5
      %p177 = pnand %p175, %p176
      %p178 = pneg %p177
      // Predicated region
      $region9: #{tpu_custom_call.1} parent=5 // pred_check
        _
      $region10: #{tpu_custom_call.1} parent=5 // pred_check_branch
        %180 = sbr.rel (%p177) target = $region12
      $region11: #{tpu_custom_call.1} parent=5 // pred_region
        %s181 = ssub.s32 %s14, 1
        // Predicated region
        $region13: #{tpu_custom_call.1} parent=11 // pred_check
          %p182 = pneg %p73
        $region14: #{tpu_custom_call.1} parent=11 // pred_check_branch
          %184 = sbr.rel (%p182) target = $region16
        $region15: #{tpu_custom_call.1} parent=11 // pred_region
          _
        $region16: #{tpu_custom_call.1} parent=11 // pred_fallthru
          _
        // Predicated region
        $region17: #{tpu_custom_call.1} parent=11 // pred_check
          %p185 = pneg %p94
        $region18: #{tpu_custom_call.1} parent=11 // pred_check_branch
          %187 = sbr.rel (%p185) target = $region20
        $region19: #{tpu_custom_call.1} parent=11 // pred_region
          _
        $region20: #{tpu_custom_call.1} parent=11 // pred_fallthru
          _
        // Predicated region
        $region21: #{tpu_custom_call.1} parent=11 // pred_check
          %p188 = pneg %p115
        $region22: #{tpu_custom_call.1} parent=11 // pred_check_branch
          %190 = sbr.rel (%p188) target = $region24
        $region23: #{tpu_custom_call.1} parent=11 // pred_region
          _
        $region24: #{tpu_custom_call.1} parent=11 // pred_fallthru
          _
      $region12: #{tpu_custom_call.1} parent=5 // pred_fallthru
        _
      %p191 = scmp.lt.s32.totalorder %s14, 4
      // Predicated region
      $region25: #{tpu_custom_call.1} parent=5 // pred_check
        %p192 = pneg %p191
      $region26: #{tpu_custom_call.1} parent=5 // pred_check_branch
        %194 = sbr.rel (%p192) target = $region28
      $region27: #{tpu_custom_call.1} parent=5 // pred_region
        // Predicated region
        $region29: #{tpu_custom_call.1} parent=27 // pred_check
          %p195 = pneg %p46
        $region30: #{tpu_custom_call.1} parent=27 // pred_check_branch
          %197 = sbr.rel (%p195) target = $region32
        $region31: #{tpu_custom_call.1} parent=27 // pred_region
          %s198 = sand.u32 %s36, 1
          %s199 = scalar_lea.sflag [#allocation4], %s198
          %s200 = sand.u32 %s36, 1
          %s201 = smul.addr %s200, 36
          %s202 = scalar_lea.vmem [#allocation3], %s201
          %204 = vsyncadd %s199, 0
          %s205 = smul.addr %s21, 18
          %s206 = smul.addr %s205, 2
          %s207 = scalar_lea.hbm %s0, %s206
          %s208 = sshll.u32 %s207, 4
          %s209 = int_to_ptr.hbm [resolvable:$true] %s208
          %s210 = sshll.u32 %s202, 4
          %s211 = int_to_ptr.vmem [resolvable:$true] %s210
          %216 = dma.hbm_to_vmem [thread:$0]  %s209, 576, %s211, %s199, 32, 32, 2
        $region32: #{tpu_custom_call.1} parent=27 // pred_fallthru
          _
        // Predicated region
        $region33: #{tpu_custom_call.1} parent=27 // pred_check
          %p217 = pneg %p135
        $region34: #{tpu_custom_call.1} parent=27 // pred_check_branch
          %219 = sbr.rel (%p217) target = $region36
        $region35: #{tpu_custom_call.1} parent=27 // pred_region
          %p220 = scmp.lt.s32.totalorder %s22, 1
          %s221 = scalar_select %p220, %s22, 1
          %s222 = smul.addr %s221, 8
          %s223 = scalar_lea.vmem %s4, %s222
        $region36: #{tpu_custom_call.1} parent=27 // pred_fallthru
          _
      $region28: #{tpu_custom_call.1} parent=5 // pred_fallthru
        _
      %p224 = scmp.le.s32.totalorder 1, %s14
      %p225 = scmp.lt.s32.totalorder %s14, 5
      %p226 = pnand %p224, %p225
      %p227 = pneg %p226
      // Predicated region
      $region37: #{tpu_custom_call.1} parent=5 // pred_check
        _
      $region38: #{tpu_custom_call.1} parent=5 // pred_check_branch
        %229 = sbr.rel (%p226) target = $region40
      $region39: #{tpu_custom_call.1} parent=5 // pred_region
        %s230 = ssub.s32 %s14, 1
        %s231 = sand.u32 %s39, 1
        %s232 = scalar_lea.sflag [#allocation4], %s231
        %s233 = sand.u32 %s39, 1
        %s234 = smul.addr %s233, 36
        %s235 = scalar_lea.vmem [#allocation3], %s234
        // Predicated region
        $region41: #{tpu_custom_call.1} parent=39 // pred_check
          %p236 = pneg %p52
        $region42: #{tpu_custom_call.1} parent=39 // pred_check_branch
          %238 = sbr.rel (%p236) target = $region44
        $region43: #{tpu_custom_call.1} parent=39 // pred_region
          %240 = dma.done %s232, 576
        $region44: #{tpu_custom_call.1} parent=39 // pred_fallthru
          _
        %s241 = sand.u32 %s39, 1
        %s242 = scalar_lea.sflag [#allocation4], %s241
        %s243 = sand.u32 %s39, 1
        %s244 = smul.addr %s243, 36
        %s245 = scalar_lea.vmem [#allocation3], %s244
        %p246 = pneg %p52
        %p247 = pneg %p49
        %p248 = pneg %p73
        %p249 = pneg %p70
        %p250 = pneg %p94
        %p251 = pneg %p91
        %p252 = pneg %p115
        %p253 = pneg %p112
        %p254 = scmp.lt.s32.totalorder %s24, 1
        %s255 = scalar_select %p254, %s24, 1
        %s256 = smul.addr %s255, 8
        %s257 = scalar_lea.vmem %s4, %s256
        %p258 = pneg %p141
        %p259 = pneg %p138
        %p260 = pneg %p167
        %p261 = pneg %p164
        %p262 = scmp.lt.s32.totalorder %s23, 1
        %s263 = scalar_select %p262, %s23, 1
        %s264 = smul.addr %s263, 4
        %s265 = smul.addr %s264, 8
        %s266 = scalar_lea.vmem %s5, %s265
        %p267 = scmp.lt.s32.totalorder %s24, 1
        %s268 = scalar_select %p267, %s24, 1
        %s269 = smul.addr %s268, 8
        %s270 = scalar_lea.vmem %s4, %s269
        %p271 = scmp.lt.s32.totalorder %s23, 1
        %s272 = scalar_select %p271, %s23, 1
        %s273 = smul.addr %s272, 4
        %s274 = smul.addr %s273, 8
        %s275 = scalar_lea.vmem %s5, %s274
        %p277 = scmp.eq.s32.totalorder %s24, 0
        // Predicated region
        $region45: #{tpu_custom_call.1} parent=39 // pred_check
          %p278 = pneg %p277
        $region46: #{tpu_custom_call.1} parent=39 // pred_check_branch
          %280 = sbr.rel (%p278) target = $region48
        $region47: #{tpu_custom_call.1} parent=39 // pred_region
          %vm281 = vcmask 7168
          %282 = vst.msk [vmem:[#allocation2] sm:$0xff] %vm281, 0.0
          %283 = vst.msk [vmem:[#allocation2 + $0x8] sm:$0xff] %vm281, 0.0
          %284 = vst.msk [vmem:[#allocation2 + $0x10] sm:$0xff] %vm281, 0.0
          %285 = vst.msk [vmem:[#allocation2 + $0x18] sm:$0xff] %vm281, 0.0
        $region48: #{tpu_custom_call.1} parent=39 // pred_fallthru
          _
        %s286 = smul.u32 %s24, 8
        %v287 = vld [vmem:[%s3] sm:$0xff]
        %v288 = vld [vmem:[%s3 + $0x8] sm:$0xff]
        %v289 = vld [vmem:[%s3 + $0x10] sm:$0xff]
        %v290 = vld [vmem:[%s3 + $0x18] sm:$0xff]
        %v291 = vld [vmem:[%s270] sm:$0xff]
        %v292 = vld [vmem:[%s2] sm:$0xff]
        %v293 = vld [vmem:[%s2 + $0x8] sm:$0xff]
        %v294 = vld [vmem:[%s2 + $0x10] sm:$0xff]
        %v295 = vld [vmem:[%s2 + $0x18] sm:$0xff]
        %v296 = vld [vmem:[%s2 + $0x20] sm:$0xff]
        %v297 = vld [vmem:[%s2 + $0x28] sm:$0xff]
        %v298 = vld [vmem:[%s2 + $0x30] sm:$0xff]
        %v299 = vld [vmem:[%s2 + $0x38] sm:$0xff]
        %v300 = vld [vmem:[%s2 + $0x40] sm:$0xff]
        %v301 = vld [vmem:[%s2 + $0x48] sm:$0xff]
        %v302 = vld [vmem:[%s2 + $0x50] sm:$0xff]
        %v303 = vld [vmem:[%s2 + $0x58] sm:$0xff]
        %v304 = vld [vmem:[%s2 + $0x60] sm:$0xff]
        %v305 = vld [vmem:[%s2 + $0x68] sm:$0xff]
        %v306 = vld [vmem:[%s2 + $0x70] sm:$0xff]
        %v307 = vld [vmem:[%s2 + $0x78] sm:$0xff]
        %s308 = smul.addr %s286, 2
        %s309 = scalar_lea.vmem %s235, %s308 [#allocation3]
        %v310 = vld [vmem:[%s309] sm:$0x3]
        %v311 = vld [vmem:[%s1] sm:$0xf]
        %v312 = vld [vmem:[%s1 + $0x4] sm:$0xf]
        %v313 = vld [vmem:[%s1 + $0x8] sm:$0xf]
        %v314 = vld [vmem:[%s1 + $0xc] sm:$0xf]
        %s315 = scalar_lea.vmem %s1, 16
        %v316 = vld [vmem:[%s315] sm:$0xf]
        %v317 = vld [vmem:[%s315 + $0x4] sm:$0xf]
        %v318 = vld [vmem:[%s315 + $0x8] sm:$0xf]
        %v319 = vld [vmem:[%s315 + $0xc] sm:$0xf]
        %s320 = scalar_lea.vmem %s1, 32
        %v321 = vld [vmem:[%s320] sm:$0xf]
        %v322 = vld [vmem:[%s320 + $0x4] sm:$0xf]
        %v323 = vld [vmem:[%s320 + $0x8] sm:$0xf]
        %v324 = vld [vmem:[%s320 + $0xc] sm:$0xf]
        %s325 = sadd.s32 %s286, 1
        %s326 = smul.addr %s325, 2
        %s327 = scalar_lea.vmem %s235, %s326 [#allocation3]
        %v328 = vld [vmem:[%s327] sm:$0x3]
        %s329 = scalar_lea.vmem %s1, 48
        %v330 = vld [vmem:[%s329] sm:$0xf]
        %v331 = vld [vmem:[%s329 + $0x4] sm:$0xf]
        %v332 = vld [vmem:[%s329 + $0x8] sm:$0xf]
        %v333 = vld [vmem:[%s329 + $0xc] sm:$0xf]
        %v338 = vunpack.c.l.b16 %v330
        %v339 = vunpack.c.l.b16 %v331
        %v340 = vunpack.c.l.b16 %v332
        %v341 = vunpack.c.l.b16 %v333
        %v342 = vpack.c.b16 %v339, %v338
        %v343 = vpack.c.b16 %v341, %v340
        %vm344 = vcmask 31744
        %v346 = vsel %vm344, %v342, 0
        %v349 = vsel %vm344, %v343, 0
        %vm351 = vcmask 1041408
        %v353 = vsel %vm351, %v328, 0
        %355 = vmatpush.bf16.msra.mxu0 0
        %356 = vmatpush.bf16.msra.mxu0 0
        %357 = vmatpush.bf16.msra.mxu0 0
        %358 = vmatpush.bf16.msra.mxu0 0
        %359 = vmatpush.bf16.msra.mxu0 0
        %360 = vmatpush.bf16.msra.mxu0 0
        %361 = vmatpush.bf16.msra.mxu0 0
        %362 = vmatpush.bf16.msra.mxu0 %v353
        %363 = vmatmul.bf16.gmra.mxu0 %v346
        %v364 = vpop.f32.mrf.mxu0
        %v365 = vadd.f32 0.0, %v364
        %v366 = vpop.f32.mrf.mxu0
        %v367 = vadd.f32 0.0, %v366
        %368 = vmatmul.bf16.gmra.mxu0 %v349
        %v369 = vpop.f32.mrf.mxu0
        %v370 = vadd.f32 0.0, %v369
        %v371 = vpop.f32.mrf.mxu0
        %v372 = vadd.f32 0.0, %v371
        %373 = vdwg.mxu0
        %v378 = vunpack.c.l.b16 %v311
        %v379 = vunpack.c.l.b16 %v312
        %v380 = vunpack.c.l.b16 %v313
        %v381 = vunpack.c.l.b16 %v314
        %v382 = vpack.c.b16 %v379, %v378
        %v383 = vpack.c.b16 %v381, %v380
        %v385 = vsel %vm344, %v382, 0
        %v388 = vsel %vm344, %v383, 0
        %v391 = vsel %vm351, %v310, 0
        %393 = vmatpush.bf16.msra.mxu0 0
        %394 = vmatpush.bf16.msra.mxu0 0
        %395 = vmatpush.bf16.msra.mxu0 0
        %396 = vmatpush.bf16.msra.mxu0 0
        %397 = vmatpush.bf16.msra.mxu0 0
        %398 = vmatpush.bf16.msra.mxu0 0
        %399 = vmatpush.bf16.msra.mxu0 0
        %400 = vmatpush.bf16.msra.mxu0 %v391
        %401 = vmatmul.bf16.gmra.mxu0 %v385
        %v402 = vpop.f32.mrf.mxu0
        %v403 = vadd.f32 %v365, %v402
        %v404 = vpop.f32.mrf.mxu0
        %v405 = vadd.f32 %v367, %v404
        %406 = vmatmul.bf16.gmra.mxu0 %v388
        %v407 = vpop.f32.mrf.mxu0
        %v408 = vadd.f32 %v370, %v407
        %v409 = vpop.f32.mrf.mxu0
        %v410 = vadd.f32 %v372, %v409
        %411 = vdwg.mxu0
        %s412 = scalar_lea.vmem %s1, 64
        %v413 = vld [vmem:[%s412] sm:$0xf]
        %v414 = vld [vmem:[%s412 + $0x4] sm:$0xf]
        %v415 = vld [vmem:[%s412 + $0x8] sm:$0xf]
        %v416 = vld [vmem:[%s412 + $0xc] sm:$0xf]
        %v421 = vunpack.c.l.b16 %v413
        %v422 = vunpack.c.l.b16 %v414
        %v423 = vunpack.c.l.b16 %v415
        %v424 = vunpack.c.l.b16 %v416
        %v425 = vpack.c.b16 %v422, %v421
        %v426 = vpack.c.b16 %v424, %v423
        %v428 = vsel %vm344, %v425, 0
        %v431 = vsel %vm344, %v426, 0
        %433 = vmatpush.bf16.msra.mxu0 0
        %434 = vmatpush.bf16.msra.mxu0 0
        %435 = vmatpush.bf16.msra.mxu0 0
        %436 = vmatpush.bf16.msra.mxu0 0
        %437 = vmatpush.bf16.msra.mxu0 0
        %438 = vmatpush.bf16.msra.mxu0 0
        %439 = vmatpush.bf16.msra.mxu0 0
        %440 = vmatpush.bf16.msra.mxu0 %v353
        %441 = vmatmul.bf16.gmra.mxu0 %v428
        %v442 = vpop.f32.mrf.mxu0
        %v443 = vadd.f32 0.0, %v442
        %v444 = vpop.f32.mrf.mxu0
        %v445 = vadd.f32 0.0, %v444
        %446 = vmatmul.bf16.gmra.mxu0 %v431
        %v447 = vpop.f32.mrf.mxu0
        %v448 = vadd.f32 0.0, %v447
        %v449 = vpop.f32.mrf.mxu0
        %v450 = vadd.f32 0.0, %v449
        %451 = vdwg.mxu0
        %v456 = vunpack.c.l.b16 %v316
        %v457 = vunpack.c.l.b16 %v317
        %v458 = vunpack.c.l.b16 %v318
        %v459 = vunpack.c.l.b16 %v319
        %v460 = vpack.c.b16 %v457, %v456
        %v461 = vpack.c.b16 %v459, %v458
        %v463 = vsel %vm344, %v460, 0
        %v466 = vsel %vm344, %v461, 0
        %468 = vmatpush.bf16.msra.mxu0 0
        %469 = vmatpush.bf16.msra.mxu0 0
        %470 = vmatpush.bf16.msra.mxu0 0
        %471 = vmatpush.bf16.msra.mxu0 0
        %472 = vmatpush.bf16.msra.mxu0 0
        %473 = vmatpush.bf16.msra.mxu0 0
        %474 = vmatpush.bf16.msra.mxu0 0
        %475 = vmatpush.bf16.msra.mxu0 %v391
        %476 = vmatmul.bf16.gmra.mxu0 %v463
        %v477 = vpop.f32.mrf.mxu0
        %v478 = vadd.f32 %v443, %v477
        %v479 = vpop.f32.mrf.mxu0
        %v480 = vadd.f32 %v445, %v479
        %481 = vmatmul.bf16.gmra.mxu0 %v466
        %v482 = vpop.f32.mrf.mxu0
        %v483 = vadd.f32 %v448, %v482
        %v484 = vpop.f32.mrf.mxu0
        %v485 = vadd.f32 %v450, %v484
        %486 = vdwg.mxu0
        %s487 = scalar_lea.vmem %s1, 80
        %v488 = vld [vmem:[%s487] sm:$0xf]
        %v489 = vld [vmem:[%s487 + $0x4] sm:$0xf]
        %v490 = vld [vmem:[%s487 + $0x8] sm:$0xf]
        %v491 = vld [vmem:[%s487 + $0xc] sm:$0xf]
        %v496 = vunpack.c.l.b16 %v488
        %v497 = vunpack.c.l.b16 %v489
        %v498 = vunpack.c.l.b16 %v490
        %v499 = vunpack.c.l.b16 %v491
        %v500 = vpack.c.b16 %v497, %v496
        %v501 = vpack.c.b16 %v499, %v498
        %v503 = vsel %vm344, %v500, 0
        %v506 = vsel %vm344, %v501, 0
        %508 = vmatpush.bf16.msra.mxu0 0
        %509 = vmatpush.bf16.msra.mxu0 0
        %510 = vmatpush.bf16.msra.mxu0 0
        %511 = vmatpush.bf16.msra.mxu0 0
        %512 = vmatpush.bf16.msra.mxu0 0
        %513 = vmatpush.bf16.msra.mxu0 0
        %514 = vmatpush.bf16.msra.mxu0 0
        %515 = vmatpush.bf16.msra.mxu0 %v353
        %516 = vmatmul.bf16.gmra.mxu0 %v503
        %v517 = vpop.f32.mrf.mxu0
        %v518 = vadd.f32 0.0, %v517
        %v519 = vpop.f32.mrf.mxu0
        %v520 = vadd.f32 0.0, %v519
        %521 = vmatmul.bf16.gmra.mxu0 %v506
        %v522 = vpop.f32.mrf.mxu0
        %v523 = vadd.f32 0.0, %v522
        %v524 = vpop.f32.mrf.mxu0
        %v525 = vadd.f32 0.0, %v524
        %526 = vdwg.mxu0
        %v531 = vunpack.c.l.b16 %v321
        %v532 = vunpack.c.l.b16 %v322
        %v533 = vunpack.c.l.b16 %v323
        %v534 = vunpack.c.l.b16 %v324
        %v535 = vpack.c.b16 %v532, %v531
        %v536 = vpack.c.b16 %v534, %v533
        %v538 = vsel %vm344, %v535, 0
        %v541 = vsel %vm344, %v536, 0
        %543 = vmatpush.bf16.msra.mxu0 0
        %544 = vmatpush.bf16.msra.mxu0 0
        %545 = vmatpush.bf16.msra.mxu0 0
        %546 = vmatpush.bf16.msra.mxu0 0
        %547 = vmatpush.bf16.msra.mxu0 0
        %548 = vmatpush.bf16.msra.mxu0 0
        %549 = vmatpush.bf16.msra.mxu0 0
        %550 = vmatpush.bf16.msra.mxu0 %v391
        %551 = vmatmul.bf16.gmra.mxu0 %v538
        %v552 = vpop.f32.mrf.mxu0
        %v553 = vadd.f32 %v518, %v552
        %v554 = vpop.f32.mrf.mxu0
        %v555 = vadd.f32 %v520, %v554
        %556 = vmatmul.bf16.gmra.mxu0 %v541
        %v557 = vpop.f32.mrf.mxu0
        %v558 = vadd.f32 %v523, %v557
        %v559 = vpop.f32.mrf.mxu0
        %v560 = vadd.f32 %v525, %v559
        %561 = vdwg.mxu0
        %s562 = sadd.s32 %s286, 2
        %s563 = smul.addr %s562, 2
        %s564 = scalar_lea.vmem %s235, %s563 [#allocation3]
        %v565 = vld [vmem:[%s564] sm:$0x3]
        %s566 = scalar_lea.vmem %s1, 96
        %v567 = vld [vmem:[%s566] sm:$0xf]
        %v568 = vld [vmem:[%s566 + $0x4] sm:$0xf]
        %v569 = vld [vmem:[%s566 + $0x8] sm:$0xf]
        %v570 = vld [vmem:[%s566 + $0xc] sm:$0xf]
        %v575 = vunpack.c.l.b16 %v567
        %v576 = vunpack.c.l.b16 %v568
        %v577 = vunpack.c.l.b16 %v569
        %v578 = vunpack.c.l.b16 %v570
        %v579 = vpack.c.b16 %v576, %v575
        %v580 = vpack.c.b16 %v578, %v577
        %v582 = vsel %vm344, %v579, 0
        %v585 = vsel %vm344, %v580, 0
        %v588 = vsel %vm351, %v565, 0
        %590 = vmatpush.bf16.msra.mxu0 0
        %591 = vmatpush.bf16.msra.mxu0 0
        %592 = vmatpush.bf16.msra.mxu0 0
        %593 = vmatpush.bf16.msra.mxu0 0
        %594 = vmatpush.bf16.msra.mxu0 0
        %595 = vmatpush.bf16.msra.mxu0 0
        %596 = vmatpush.bf16.msra.mxu0 0
        %597 = vmatpush.bf16.msra.mxu0 %v588
        %598 = vmatmul.bf16.gmra.mxu0 %v582
        %v599 = vpop.f32.mrf.mxu0
        %v600 = vadd.f32 0.0, %v599
        %v601 = vpop.f32.mrf.mxu0
        %v602 = vadd.f32 0.0, %v601
        %603 = vmatmul.bf16.gmra.mxu0 %v585
        %v604 = vpop.f32.mrf.mxu0
        %v605 = vadd.f32 0.0, %v604
        %v606 = vpop.f32.mrf.mxu0
        %v607 = vadd.f32 0.0, %v606
        %608 = vdwg.mxu0
        %v609 = vadd.f32 %v403, %v600
        %v610 = vadd.f32 %v405, %v602
        %v611 = vadd.f32 %v408, %v605
        %v612 = vadd.f32 %v410, %v607
        %s613 = scalar_lea.vmem %s1, 112
        %v614 = vld [vmem:[%s613] sm:$0xf]
        %v615 = vld [vmem:[%s613 + $0x4] sm:$0xf]
        %v616 = vld [vmem:[%s613 + $0x8] sm:$0xf]
        %v617 = vld [vmem:[%s613 + $0xc] sm:$0xf]
        %v622 = vunpack.c.l.b16 %v614
        %v623 = vunpack.c.l.b16 %v615
        %v624 = vunpack.c.l.b16 %v616
        %v625 = vunpack.c.l.b16 %v617
        %v626 = vpack.c.b16 %v623, %v622
        %v627 = vpack.c.b16 %v625, %v624
        %v629 = vsel %vm344, %v626, 0
        %v632 = vsel %vm344, %v627, 0
        %634 = vmatpush.bf16.msra.mxu0 0
        %635 = vmatpush.bf16.msra.mxu0 0
        %636 = vmatpush.bf16.msra.mxu0 0
        %637 = vmatpush.bf16.msra.mxu0 0
        %638 = vmatpush.bf16.msra.mxu0 0
        %639 = vmatpush.bf16.msra.mxu0 0
        %640 = vmatpush.bf16.msra.mxu0 0
        %641 = vmatpush.bf16.msra.mxu0 %v588
        %642 = vmatmul.bf16.gmra.mxu0 %v629
        %v643 = vpop.f32.mrf.mxu0
        %v644 = vadd.f32 0.0, %v643
        %v645 = vpop.f32.mrf.mxu0
        %v646 = vadd.f32 0.0, %v645
        %647 = vmatmul.bf16.gmra.mxu0 %v632
        %v648 = vpop.f32.mrf.mxu0
        %v649 = vadd.f32 0.0, %v648
        %v650 = vpop.f32.mrf.mxu0
        %v651 = vadd.f32 0.0, %v650
        %652 = vdwg.mxu0
        %v653 = vadd.f32 %v478, %v644
        %v654 = vadd.f32 %v480, %v646
        %v655 = vadd.f32 %v483, %v649
        %v656 = vadd.f32 %v485, %v651
        %s657 = scalar_lea.vmem %s1, 128
        %v658 = vld [vmem:[%s657] sm:$0xf]
        %v659 = vld [vmem:[%s657 + $0x4] sm:$0xf]
        %v660 = vld [vmem:[%s657 + $0x8] sm:$0xf]
        %v661 = vld [vmem:[%s657 + $0xc] sm:$0xf]
        %v666 = vunpack.c.l.b16 %v658
        %v667 = vunpack.c.l.b16 %v659
        %v668 = vunpack.c.l.b16 %v660
        %v669 = vunpack.c.l.b16 %v661
        %v670 = vpack.c.b16 %v667, %v666
        %v671 = vpack.c.b16 %v669, %v668
        %v673 = vsel %vm344, %v670, 0
        %v676 = vsel %vm344, %v671, 0
        %678 = vmatpush.bf16.msra.mxu0 0
        %679 = vmatpush.bf16.msra.mxu0 0
        %680 = vmatpush.bf16.msra.mxu0 0
        %681 = vmatpush.bf16.msra.mxu0 0
        %682 = vmatpush.bf16.msra.mxu0 0
        %683 = vmatpush.bf16.msra.mxu0 0
        %684 = vmatpush.bf16.msra.mxu0 0
        %685 = vmatpush.bf16.msra.mxu0 %v588
        %686 = vmatmul.bf16.gmra.mxu0 %v673
        %v687 = vpop.f32.mrf.mxu0
        %v688 = vadd.f32 0.0, %v687
        %v689 = vpop.f32.mrf.mxu0
        %v690 = vadd.f32 0.0, %v689
        %691 = vmatmul.bf16.gmra.mxu0 %v676
        %v692 = vpop.f32.mrf.mxu0
        %v693 = vadd.f32 0.0, %v692
        %v694 = vpop.f32.mrf.mxu0
        %v695 = vadd.f32 0.0, %v694
        %696 = vdwg.mxu0
        %v697 = vadd.f32 %v553, %v688
        %v698 = vadd.f32 %v555, %v690
        %v699 = vadd.f32 %v558, %v693
        %v700 = vadd.f32 %v560, %v695
        %701 = vmatpush.msra.mxu0 %v307
        %702 = vmatpush.msra.mxu0 %v306
        %703 = vmatpush.msra.mxu0 %v305
        %704 = vmatpush.msra.mxu0 %v304
        %705 = vmatpush.msra.mxu0 %v303
        %706 = vmatpush.msra.mxu0 %v302
        %707 = vmatpush.msra.mxu0 %v301
        %708 = vmatpush.msra.mxu0 %v300
        %709 = vmatpush.msra.mxu0 %v299
        %710 = vmatpush.msra.mxu0 %v298
        %711 = vmatpush.msra.mxu0 %v297
        %712 = vmatpush.msra.mxu0 %v296
        %713 = vmatpush.msra.mxu0 %v295
        %714 = vmatpush.msra.mxu0 %v294
        %715 = vmatpush.msra.mxu0 %v293
        %716 = vmatpush.msra.mxu0 %v292
        %717 = vmatmul.f32.gmra.mxu0 %v697
        %v718 = vpop.f32.mrf.mxu0
        %v719 = vadd.f32 0.0, %v718
        %720 = vmatmul.f32.gmra.mxu0 %v698
        %v721 = vpop.f32.mrf.mxu0
        %v722 = vadd.f32 0.0, %v721
        %723 = vmatmul.f32.gmra.mxu0 %v699
        %v724 = vpop.f32.mrf.mxu0
        %v725 = vadd.f32 0.0, %v724
        %726 = vmatmul.f32.gmra.mxu0 %v700
        %v727 = vpop.f32.mrf.mxu0
        %v728 = vadd.f32 0.0, %v727
        %729 = vdwg.mxu0
        %v730 = vadd.f32 %v653, %v719
        %v731 = vadd.f32 %v654, %v722
        %v732 = vadd.f32 %v655, %v725
        %v733 = vadd.f32 %v656, %v728
        %734 = vmatpush.msra.mxu0 %v307
        %735 = vmatpush.msra.mxu0 %v306
        %736 = vmatpush.msra.mxu0 %v305
        %737 = vmatpush.msra.mxu0 %v304
        %738 = vmatpush.msra.mxu0 %v303
        %739 = vmatpush.msra.mxu0 %v302
        %740 = vmatpush.msra.mxu0 %v301
        %741 = vmatpush.msra.mxu0 %v300
        %742 = vmatpush.msra.mxu0 %v299
        %743 = vmatpush.msra.mxu0 %v298
        %744 = vmatpush.msra.mxu0 %v297
        %745 = vmatpush.msra.mxu0 %v296
        %746 = vmatpush.msra.mxu0 %v295
        %747 = vmatpush.msra.mxu0 %v294
        %748 = vmatpush.msra.mxu0 %v293
        %749 = vmatpush.msra.mxu0 %v292
        %750 = vmatmul.f32.gmra.mxu0 %v730
        %v751 = vpop.f32.mrf.mxu0
        %v752 = vadd.f32 0.0, %v751
        %753 = vmatmul.f32.gmra.mxu0 %v731
        %v754 = vpop.f32.mrf.mxu0
        %v755 = vadd.f32 0.0, %v754
        %756 = vmatmul.f32.gmra.mxu0 %v732
        %v757 = vpop.f32.mrf.mxu0
        %v758 = vadd.f32 0.0, %v757
        %759 = vmatmul.f32.gmra.mxu0 %v733
        %v760 = vpop.f32.mrf.mxu0
        %v761 = vadd.f32 0.0, %v760
        %762 = vdwg.mxu0
        %v763 = vadd.f32 %v609, %v752
        %v764 = vadd.f32 %v610, %v755
        %v765 = vadd.f32 %v611, %v758
        %v766 = vadd.f32 %v612, %v761
        %768 = vset.pattern.permute.xlu0 0
        %769 = vperm.xlu0 %768, %v287
        %v770 = vpop.permute.xlu0 %769
        %773 = vset.pattern.permute.xlu0 0
        %774 = vperm.xlu0 %773, %v288
        %v775 = vpop.permute.xlu0 %774
        %778 = vset.pattern.permute.xlu0 0
        %779 = vperm.xlu0 %778, %v289
        %v780 = vpop.permute.xlu0 %779
        %783 = vset.pattern.permute.xlu0 0
        %784 = vperm.xlu0 %783, %v290
        %v785 = vpop.permute.xlu0 %784
        %v787 = vadd.f32 %v763, %v770
        %v788 = vadd.f32 %v764, %v775
        %v789 = vadd.f32 %v765, %v780
        %v790 = vadd.f32 %v766, %v785
        %v791 = vmax.f32 %v787, 0.0
        %v792 = vmax.f32 %v788, 0.0
        %v793 = vmax.f32 %v789, 0.0
        %v794 = vmax.f32 %v790, 0.0
        %v795 = vperm.slane %v291, 0
        %v796 = vmul.f32 %v791, %v795
        %v797 = vmul.f32 %v792, %v795
        %v798 = vmul.f32 %v793, %v795
        %v799 = vmul.f32 %v794, %v795
        %800 = vadd.xlane.f32.xlu0 %v796
        %v801 = vpop.xlane.xlu0 %800
        %802 = vadd.xlane.f32.xlu0 %v797
        %v803 = vpop.xlane.xlu0 %802
        %804 = vadd.xlane.f32.xlu0 %v798
        %v805 = vpop.xlane.xlu0 %804
        %806 = vadd.xlane.f32.xlu0 %v799
        %v807 = vpop.xlane.xlu0 %806
        %v808 = vadd.f32 %v801, 0.0
        %v809 = vadd.f32 %v803, 0.0
        %v810 = vadd.f32 %v805, 0.0
        %v811 = vadd.f32 %v807, 0.0
        %812 = vmatpush.bf16.msra.mxu0 0
        %813 = vmatpush.bf16.msra.mxu0 0
        %814 = vmatpush.bf16.msra.mxu0 0
        %815 = vmatpush.bf16.msra.mxu0 0
        %816 = vmatpush.bf16.msra.mxu0 0
        %817 = vmatpush.bf16.msra.mxu0 0
        %818 = vmatpush.bf16.msra.mxu0 0
        %819 = vmatpush.bf16.msra.mxu0 %v588
        %820 = vmatmul.bf16.gmra.mxu0 %v346
        %v821 = vpop.f32.mrf.mxu0
        %v822 = vadd.f32 0.0, %v821
        %v823 = vpop.f32.mrf.mxu0
        %v824 = vadd.f32 0.0, %v823
        %825 = vmatmul.bf16.gmra.mxu0 %v349
        %v826 = vpop.f32.mrf.mxu0
        %v827 = vadd.f32 0.0, %v826
        %v828 = vpop.f32.mrf.mxu0
        %v829 = vadd.f32 0.0, %v828
        %830 = vdwg.mxu0
        %831 = vmatpush.bf16.msra.mxu0 0
        %832 = vmatpush.bf16.msra.mxu0 0
        %833 = vmatpush.bf16.msra.mxu0 0
        %834 = vmatpush.bf16.msra.mxu0 0
        %835 = vmatpush.bf16.msra.mxu0 0
        %836 = vmatpush.bf16.msra.mxu0 0
        %837 = vmatpush.bf16.msra.mxu0 0
        %838 = vmatpush.bf16.msra.mxu0 %v353
        %839 = vmatmul.bf16.gmra.mxu0 %v385
        %v840 = vpop.f32.mrf.mxu0
        %v841 = vadd.f32 %v822, %v840
        %v842 = vpop.f32.mrf.mxu0
        %v843 = vadd.f32 %v824, %v842
        %844 = vmatmul.bf16.gmra.mxu0 %v388
        %v845 = vpop.f32.mrf.mxu0
        %v846 = vadd.f32 %v827, %v845
        %v847 = vpop.f32.mrf.mxu0
        %v848 = vadd.f32 %v829, %v847
        %849 = vdwg.mxu0
        %850 = vmatpush.bf16.msra.mxu0 0
        %851 = vmatpush.bf16.msra.mxu0 0
        %852 = vmatpush.bf16.msra.mxu0 0
        %853 = vmatpush.bf16.msra.mxu0 0
        %854 = vmatpush.bf16.msra.mxu0 0
        %855 = vmatpush.bf16.msra.mxu0 0
        %856 = vmatpush.bf16.msra.mxu0 0
        %857 = vmatpush.bf16.msra.mxu0 %v588
        %858 = vmatmul.bf16.gmra.mxu0 %v428
        %v859 = vpop.f32.mrf.mxu0
        %v860 = vadd.f32 0.0, %v859
        %v861 = vpop.f32.mrf.mxu0
        %v862 = vadd.f32 0.0, %v861
        %863 = vmatmul.bf16.gmra.mxu0 %v431
        %v864 = vpop.f32.mrf.mxu0
        %v865 = vadd.f32 0.0, %v864
        %v866 = vpop.f32.mrf.mxu0
        %v867 = vadd.f32 0.0, %v866
        %868 = vdwg.mxu0
        %869 = vmatpush.bf16.msra.mxu0 0
        %870 = vmatpush.bf16.msra.mxu0 0
        %871 = vmatpush.bf16.msra.mxu0 0
        %872 = vmatpush.bf16.msra.mxu0 0
        %873 = vmatpush.bf16.msra.mxu0 0
        %874 = vmatpush.bf16.msra.mxu0 0
        %875 = vmatpush.bf16.msra.mxu0 0
        %876 = vmatpush.bf16.msra.mxu0 %v353
        %877 = vmatmul.bf16.gmra.mxu0 %v463
        %v878 = vpop.f32.mrf.mxu0
        %v879 = vadd.f32 %v860, %v878
        %v880 = vpop.f32.mrf.mxu0
        %v881 = vadd.f32 %v862, %v880
        %882 = vmatmul.bf16.gmra.mxu0 %v466
        %v883 = vpop.f32.mrf.mxu0
        %v884 = vadd.f32 %v865, %v883
        %v885 = vpop.f32.mrf.mxu0
        %v886 = vadd.f32 %v867, %v885
        %887 = vdwg.mxu0
        %888 = vmatpush.bf16.msra.mxu0 0
        %889 = vmatpush.bf16.msra.mxu0 0
        %890 = vmatpush.bf16.msra.mxu0 0
        %891 = vmatpush.bf16.msra.mxu0 0
        %892 = vmatpush.bf16.msra.mxu0 0
        %893 = vmatpush.bf16.msra.mxu0 0
        %894 = vmatpush.bf16.msra.mxu0 0
        %895 = vmatpush.bf16.msra.mxu0 %v588
        %896 = vmatmul.bf16.gmra.mxu0 %v503
        %v897 = vpop.f32.mrf.mxu0
        %v898 = vadd.f32 0.0, %v897
        %v899 = vpop.f32.mrf.mxu0
        %v900 = vadd.f32 0.0, %v899
        %901 = vmatmul.bf16.gmra.mxu0 %v506
        %v902 = vpop.f32.mrf.mxu0
        %v903 = vadd.f32 0.0, %v902
        %v904 = vpop.f32.mrf.mxu0
        %v905 = vadd.f32 0.0, %v904
        %906 = vdwg.mxu0
        %907 = vmatpush.bf16.msra.mxu0 0
        %908 = vmatpush.bf16.msra.mxu0 0
        %909 = vmatpush.bf16.msra.mxu0 0
        %910 = vmatpush.bf16.msra.mxu0 0
        %911 = vmatpush.bf16.msra.mxu0 0
        %912 = vmatpush.bf16.msra.mxu0 0
        %913 = vmatpush.bf16.msra.mxu0 0
        %914 = vmatpush.bf16.msra.mxu0 %v353
        %915 = vmatmul.bf16.gmra.mxu0 %v538
        %v916 = vpop.f32.mrf.mxu0
        %v917 = vadd.f32 %v898, %v916
        %v918 = vpop.f32.mrf.mxu0
        %v919 = vadd.f32 %v900, %v918
        %920 = vmatmul.bf16.gmra.mxu0 %v541
        %v921 = vpop.f32.mrf.mxu0
        %v922 = vadd.f32 %v903, %v921
        %v923 = vpop.f32.mrf.mxu0
        %v924 = vadd.f32 %v905, %v923
        %925 = vdwg.mxu0
        %s926 = sadd.s32 %s286, 3
        %s927 = smul.addr %s926, 2
        %s928 = scalar_lea.vmem %s235, %s927 [#allocation3]
        %v929 = vld [vmem:[%s928] sm:$0x3]
        %v931 = vsel %vm351, %v929, 0
        %933 = vmatpush.bf16.msra.mxu0 0
        %934 = vmatpush.bf16.msra.mxu0 0
        %935 = vmatpush.bf16.msra.mxu0 0
        %936 = vmatpush.bf16.msra.mxu0 0
        %937 = vmatpush.bf16.msra.mxu0 0
        %938 = vmatpush.bf16.msra.mxu0 0
        %939 = vmatpush.bf16.msra.mxu0 0
        %940 = vmatpush.bf16.msra.mxu0 %v931
        %941 = vmatmul.bf16.gmra.mxu0 %v582
        %v942 = vpop.f32.mrf.mxu0
        %v943 = vadd.f32 0.0, %v942
        %v944 = vpop.f32.mrf.mxu0
        %v945 = vadd.f32 0.0, %v944
        %946 = vmatmul.bf16.gmra.mxu0 %v585
        %v947 = vpop.f32.mrf.mxu0
        %v948 = vadd.f32 0.0, %v947
        %v949 = vpop.f32.mrf.mxu0
        %v950 = vadd.f32 0.0, %v949
        %951 = vdwg.mxu0
        %v952 = vadd.f32 %v841, %v943
        %v953 = vadd.f32 %v843, %v945
        %v954 = vadd.f32 %v846, %v948
        %v955 = vadd.f32 %v848, %v950
        %956 = vmatpush.bf16.msra.mxu0 0
        %957 = vmatpush.bf16.msra.mxu0 0
        %958 = vmatpush.bf16.msra.mxu0 0
        %959 = vmatpush.bf16.msra.mxu0 0
        %960 = vmatpush.bf16.msra.mxu0 0
        %961 = vmatpush.bf16.msra.mxu0 0
        %962 = vmatpush.bf16.msra.mxu0 0
        %963 = vmatpush.bf16.msra.mxu0 %v931
        %964 = vmatmul.bf16.gmra.mxu0 %v629
        %v965 = vpop.f32.mrf.mxu0
        %v966 = vadd.f32 0.0, %v965
        %v967 = vpop.f32.mrf.mxu0
        %v968 = vadd.f32 0.0, %v967
        %969 = vmatmul.bf16.gmra.mxu0 %v632
        %v970 = vpop.f32.mrf.mxu0
        %v971 = vadd.f32 0.0, %v970
        %v972 = vpop.f32.mrf.mxu0
        %v973 = vadd.f32 0.0, %v972
        %974 = vdwg.mxu0
        %v975 = vadd.f32 %v879, %v966
        %v976 = vadd.f32 %v881, %v968
        %v977 = vadd.f32 %v884, %v971
        %v978 = vadd.f32 %v886, %v973
        %979 = vmatpush.bf16.msra.mxu0 0
        %980 = vmatpush.bf16.msra.mxu0 0
        %981 = vmatpush.bf16.msra.mxu0 0
        %982 = vmatpush.bf16.msra.mxu0 0
        %983 = vmatpush.bf16.msra.mxu0 0
        %984 = vmatpush.bf16.msra.mxu0 0
        %985 = vmatpush.bf16.msra.mxu0 0
        %986 = vmatpush.bf16.msra.mxu0 %v931
        %987 = vmatmul.bf16.gmra.mxu0 %v673
        %v988 = vpop.f32.mrf.mxu0
        %v989 = vadd.f32 0.0, %v988
        %v990 = vpop.f32.mrf.mxu0
        %v991 = vadd.f32 0.0, %v990
        %992 = vmatmul.bf16.gmra.mxu0 %v676
        %v993 = vpop.f32.mrf.mxu0
        %v994 = vadd.f32 0.0, %v993
        %v995 = vpop.f32.mrf.mxu0
        %v996 = vadd.f32 0.0, %v995
        %997 = vdwg.mxu0
        %v998 = vadd.f32 %v917, %v989
        %v999 = vadd.f32 %v919, %v991
        %v1000 = vadd.f32 %v922, %v994
        %v1001 = vadd.f32 %v924, %v996
        %1002 = vmatpush.msra.mxu0 %v307
        %1003 = vmatpush.msra.mxu0 %v306
        %1004 = vmatpush.msra.mxu0 %v305
        %1005 = vmatpush.msra.mxu0 %v304
        %1006 = vmatpush.msra.mxu0 %v303
        %1007 = vmatpush.msra.mxu0 %v302
        %1008 = vmatpush.msra.mxu0 %v301
        %1009 = vmatpush.msra.mxu0 %v300
        %1010 = vmatpush.msra.mxu0 %v299
        %1011 = vmatpush.msra.mxu0 %v298
        %1012 = vmatpush.msra.mxu0 %v297
        %1013 = vmatpush.msra.mxu0 %v296
        %1014 = vmatpush.msra.mxu0 %v295
        %1015 = vmatpush.msra.mxu0 %v294
        %1016 = vmatpush.msra.mxu0 %v293
        %1017 = vmatpush.msra.mxu0 %v292
        %1018 = vmatmul.f32.gmra.mxu0 %v998
        %v1019 = vpop.f32.mrf.mxu0
        %v1020 = vadd.f32 0.0, %v1019
        %1021 = vmatmul.f32.gmra.mxu0 %v999
        %v1022 = vpop.f32.mrf.mxu0
        %v1023 = vadd.f32 0.0, %v1022
        %1024 = vmatmul.f32.gmra.mxu0 %v1000
        %v1025 = vpop.f32.mrf.mxu0
        %v1026 = vadd.f32 0.0, %v1025
        %1027 = vmatmul.f32.gmra.mxu0 %v1001
        %v1028 = vpop.f32.mrf.mxu0
        %v1029 = vadd.f32 0.0, %v1028
        %1030 = vdwg.mxu0
        %v1031 = vadd.f32 %v975, %v1020
        %v1032 = vadd.f32 %v976, %v1023
        %v1033 = vadd.f32 %v977, %v1026
        %v1034 = vadd.f32 %v978, %v1029
        %1035 = vmatpush.msra.mxu0 %v307
        %1036 = vmatpush.msra.mxu0 %v306
        %1037 = vmatpush.msra.mxu0 %v305
        %1038 = vmatpush.msra.mxu0 %v304
        %1039 = vmatpush.msra.mxu0 %v303
        %1040 = vmatpush.msra.mxu0 %v302
        %1041 = vmatpush.msra.mxu0 %v301
        %1042 = vmatpush.msra.mxu0 %v300
        %1043 = vmatpush.msra.mxu0 %v299
        %1044 = vmatpush.msra.mxu0 %v298
        %1045 = vmatpush.msra.mxu0 %v297
        %1046 = vmatpush.msra.mxu0 %v296
        %1047 = vmatpush.msra.mxu0 %v295
        %1048 = vmatpush.msra.mxu0 %v294
        %1049 = vmatpush.msra.mxu0 %v293
        %1050 = vmatpush.msra.mxu0 %v292
        %1051 = vmatmul.f32.gmra.mxu0 %v1031
        %v1052 = vpop.f32.mrf.mxu0
        %v1053 = vadd.f32 0.0, %v1052
        %1054 = vmatmul.f32.gmra.mxu0 %v1032
        %v1055 = vpop.f32.mrf.mxu0
        %v1056 = vadd.f32 0.0, %v1055
        %1057 = vmatmul.f32.gmra.mxu0 %v1033
        %v1058 = vpop.f32.mrf.mxu0
        %v1059 = vadd.f32 0.0, %v1058
        %1060 = vmatmul.f32.gmra.mxu0 %v1034
        %v1061 = vpop.f32.mrf.mxu0
        %v1062 = vadd.f32 0.0, %v1061
        %1063 = vdwg.mxu0
        %v1064 = vadd.f32 %v952, %v1053
        %v1065 = vadd.f32 %v953, %v1056
        %v1066 = vadd.f32 %v954, %v1059
        %v1067 = vadd.f32 %v955, %v1062
        %v1068 = vadd.f32 %v1064, %v770
        %v1069 = vadd.f32 %v1065, %v775
        %v1070 = vadd.f32 %v1066, %v780
        %v1071 = vadd.f32 %v1067, %v785
        %v1072 = vmax.f32 %v1068, 0.0
        %v1073 = vmax.f32 %v1069, 0.0
        %v1074 = vmax.f32 %v1070, 0.0
        %v1075 = vmax.f32 %v1071, 0.0
        %v1076 = vperm.slane %v291, 1
        %v1077 = vmul.f32 %v1072, %v1076
        %v1078 = vmul.f32 %v1073, %v1076
        %v1079 = vmul.f32 %v1074, %v1076
        %v1080 = vmul.f32 %v1075, %v1076
        %1081 = vadd.xlane.f32.xlu0 %v1077
        %v1082 = vpop.xlane.xlu0 %1081
        %1083 = vadd.xlane.f32.xlu0 %v1078
        %v1084 = vpop.xlane.xlu0 %1083
        %1085 = vadd.xlane.f32.xlu0 %v1079
        %v1086 = vpop.xlane.xlu0 %1085
        %1087 = vadd.xlane.f32.xlu0 %v1080
        %v1088 = vpop.xlane.xlu0 %1087
        %v1089 = vadd.f32 %v808, %v1082
        %v1090 = vadd.f32 %v809, %v1084
        %v1091 = vadd.f32 %v810, %v1086
        %v1092 = vadd.f32 %v811, %v1088
        %1093 = vmatpush.bf16.msra.mxu0 0
        %1094 = vmatpush.bf16.msra.mxu0 0
        %1095 = vmatpush.bf16.msra.mxu0 0
        %1096 = vmatpush.bf16.msra.mxu0 0
        %1097 = vmatpush.bf16.msra.mxu0 0
        %1098 = vmatpush.bf16.msra.mxu0 0
        %1099 = vmatpush.bf16.msra.mxu0 0
        %1100 = vmatpush.bf16.msra.mxu0 %v931
        %1101 = vmatmul.bf16.gmra.mxu0 %v346
        %v1102 = vpop.f32.mrf.mxu0
        %v1103 = vadd.f32 0.0, %v1102
        %v1104 = vpop.f32.mrf.mxu0
        %v1105 = vadd.f32 0.0, %v1104
        %1106 = vmatmul.bf16.gmra.mxu0 %v349
        %v1107 = vpop.f32.mrf.mxu0
        %v1108 = vadd.f32 0.0, %v1107
        %v1109 = vpop.f32.mrf.mxu0
        %v1110 = vadd.f32 0.0, %v1109
        %1111 = vdwg.mxu0
        %1112 = vmatpush.bf16.msra.mxu0 0
        %1113 = vmatpush.bf16.msra.mxu0 0
        %1114 = vmatpush.bf16.msra.mxu0 0
        %1115 = vmatpush.bf16.msra.mxu0 0
        %1116 = vmatpush.bf16.msra.mxu0 0
        %1117 = vmatpush.bf16.msra.mxu0 0
        %1118 = vmatpush.bf16.msra.mxu0 0
        %1119 = vmatpush.bf16.msra.mxu0 %v588
        %1120 = vmatmul.bf16.gmra.mxu0 %v385
        %v1121 = vpop.f32.mrf.mxu0
        %v1122 = vadd.f32 %v1103, %v1121
        %v1123 = vpop.f32.mrf.mxu0
        %v1124 = vadd.f32 %v1105, %v1123
        %1125 = vmatmul.bf16.gmra.mxu0 %v388
        %v1126 = vpop.f32.mrf.mxu0
        %v1127 = vadd.f32 %v1108, %v1126
        %v1128 = vpop.f32.mrf.mxu0
        %v1129 = vadd.f32 %v1110, %v1128
        %1130 = vdwg.mxu0
        %1131 = vmatpush.bf16.msra.mxu0 0
        %1132 = vmatpush.bf16.msra.mxu0 0
        %1133 = vmatpush.bf16.msra.mxu0 0
        %1134 = vmatpush.bf16.msra.mxu0 0
        %1135 = vmatpush.bf16.msra.mxu0 0
        %1136 = vmatpush.bf16.msra.mxu0 0
        %1137 = vmatpush.bf16.msra.mxu0 0
        %1138 = vmatpush.bf16.msra.mxu0 %v931
        %1139 = vmatmul.bf16.gmra.mxu0 %v428
        %v1140 = vpop.f32.mrf.mxu0
        %v1141 = vadd.f32 0.0, %v1140
        %v1142 = vpop.f32.mrf.mxu0
        %v1143 = vadd.f32 0.0, %v1142
        %1144 = vmatmul.bf16.gmra.mxu0 %v431
        %v1145 = vpop.f32.mrf.mxu0
        %v1146 = vadd.f32 0.0, %v1145
        %v1147 = vpop.f32.mrf.mxu0
        %v1148 = vadd.f32 0.0, %v1147
        %1149 = vdwg.mxu0
        %1150 = vmatpush.bf16.msra.mxu0 0
        %1151 = vmatpush.bf16.msra.mxu0 0
        %1152 = vmatpush.bf16.msra.mxu0 0
        %1153 = vmatpush.bf16.msra.mxu0 0
        %1154 = vmatpush.bf16.msra.mxu0 0
        %1155 = vmatpush.bf16.msra.mxu0 0
        %1156 = vmatpush.bf16.msra.mxu0 0
        %1157 = vmatpush.bf16.msra.mxu0 %v588
        %1158 = vmatmul.bf16.gmra.mxu0 %v463
        %v1159 = vpop.f32.mrf.mxu0
        %v1160 = vadd.f32 %v1141, %v1159
        %v1161 = vpop.f32.mrf.mxu0
        %v1162 = vadd.f32 %v1143, %v1161
        %1163 = vmatmul.bf16.gmra.mxu0 %v466
        %v1164 = vpop.f32.mrf.mxu0
        %v1165 = vadd.f32 %v1146, %v1164
        %v1166 = vpop.f32.mrf.mxu0
        %v1167 = vadd.f32 %v1148, %v1166
        %1168 = vdwg.mxu0
        %1169 = vmatpush.bf16.msra.mxu0 0
        %1170 = vmatpush.bf16.msra.mxu0 0
        %1171 = vmatpush.bf16.msra.mxu0 0
        %1172 = vmatpush.bf16.msra.mxu0 0
        %1173 = vmatpush.bf16.msra.mxu0 0
        %1174 = vmatpush.bf16.msra.mxu0 0
        %1175 = vmatpush.bf16.msra.mxu0 0
        %1176 = vmatpush.bf16.msra.mxu0 %v931
        %1177 = vmatmul.bf16.gmra.mxu0 %v503
        %v1178 = vpop.f32.mrf.mxu0
        %v1179 = vadd.f32 0.0, %v1178
        %v1180 = vpop.f32.mrf.mxu0
        %v1181 = vadd.f32 0.0, %v1180
        %1182 = vmatmul.bf16.gmra.mxu0 %v506
        %v1183 = vpop.f32.mrf.mxu0
        %v1184 = vadd.f32 0.0, %v1183
        %v1185 = vpop.f32.mrf.mxu0
        %v1186 = vadd.f32 0.0, %v1185
        %1187 = vdwg.mxu0
        %1188 = vmatpush.bf16.msra.mxu0 0
        %1189 = vmatpush.bf16.msra.mxu0 0
        %1190 = vmatpush.bf16.msra.mxu0 0
        %1191 = vmatpush.bf16.msra.mxu0 0
        %1192 = vmatpush.bf16.msra.mxu0 0
        %1193 = vmatpush.bf16.msra.mxu0 0
        %1194 = vmatpush.bf16.msra.mxu0 0
        %1195 = vmatpush.bf16.msra.mxu0 %v588
        %1196 = vmatmul.bf16.gmra.mxu0 %v538
        %v1197 = vpop.f32.mrf.mxu0
        %v1198 = vadd.f32 %v1179, %v1197
        %v1199 = vpop.f32.mrf.mxu0
        %v1200 = vadd.f32 %v1181, %v1199
        %1201 = vmatmul.bf16.gmra.mxu0 %v541
        %v1202 = vpop.f32.mrf.mxu0
        %v1203 = vadd.f32 %v1184, %v1202
        %v1204 = vpop.f32.mrf.mxu0
        %v1205 = vadd.f32 %v1186, %v1204
        %1206 = vdwg.mxu0
        %s1207 = sadd.s32 %s286, 4
        %s1208 = smul.addr %s1207, 2
        %s1209 = scalar_lea.vmem %s235, %s1208 [#allocation3]
        %v1210 = vld [vmem:[%s1209] sm:$0x3]
        %v1212 = vsel %vm351, %v1210, 0
        %1214 = vmatpush.bf16.msra.mxu0 0
        %1215 = vmatpush.bf16.msra.mxu0 0
        %1216 = vmatpush.bf16.msra.mxu0 0
        %1217 = vmatpush.bf16.msra.mxu0 0
        %1218 = vmatpush.bf16.msra.mxu0 0
        %1219 = vmatpush.bf16.msra.mxu0 0
        %1220 = vmatpush.bf16.msra.mxu0 0
        %1221 = vmatpush.bf16.msra.mxu0 %v1212
        %1222 = vmatmul.bf16.gmra.mxu0 %v582
        %v1223 = vpop.f32.mrf.mxu0
        %v1224 = vadd.f32 0.0, %v1223
        %v1225 = vpop.f32.mrf.mxu0
        %v1226 = vadd.f32 0.0, %v1225
        %1227 = vmatmul.bf16.gmra.mxu0 %v585
        %v1228 = vpop.f32.mrf.mxu0
        %v1229 = vadd.f32 0.0, %v1228
        %v1230 = vpop.f32.mrf.mxu0
        %v1231 = vadd.f32 0.0, %v1230
        %1232 = vdwg.mxu0
        %v1233 = vadd.f32 %v1122, %v1224
        %v1234 = vadd.f32 %v1124, %v1226
        %v1235 = vadd.f32 %v1127, %v1229
        %v1236 = vadd.f32 %v1129, %v1231
        %1237 = vmatpush.bf16.msra.mxu0 0
        %1238 = vmatpush.bf16.msra.mxu0 0
        %1239 = vmatpush.bf16.msra.mxu0 0
        %1240 = vmatpush.bf16.msra.mxu0 0
        %1241 = vmatpush.bf16.msra.mxu0 0
        %1242 = vmatpush.bf16.msra.mxu0 0
        %1243 = vmatpush.bf16.msra.mxu0 0
        %1244 = vmatpush.bf16.msra.mxu0 %v1212
        %1245 = vmatmul.bf16.gmra.mxu0 %v629
        %v1246 = vpop.f32.mrf.mxu0
        %v1247 = vadd.f32 0.0, %v1246
        %v1248 = vpop.f32.mrf.mxu0
        %v1249 = vadd.f32 0.0, %v1248
        %1250 = vmatmul.bf16.gmra.mxu0 %v632
        %v1251 = vpop.f32.mrf.mxu0
        %v1252 = vadd.f32 0.0, %v1251
        %v1253 = vpop.f32.mrf.mxu0
        %v1254 = vadd.f32 0.0, %v1253
        %1255 = vdwg.mxu0
        %v1256 = vadd.f32 %v1160, %v1247
        %v1257 = vadd.f32 %v1162, %v1249
        %v1258 = vadd.f32 %v1165, %v1252
        %v1259 = vadd.f32 %v1167, %v1254
        %1260 = vmatpush.bf16.msra.mxu0 0
        %1261 = vmatpush.bf16.msra.mxu0 0
        %1262 = vmatpush.bf16.msra.mxu0 0
        %1263 = vmatpush.bf16.msra.mxu0 0
        %1264 = vmatpush.bf16.msra.mxu0 0
        %1265 = vmatpush.bf16.msra.mxu0 0
        %1266 = vmatpush.bf16.msra.mxu0 0
        %1267 = vmatpush.bf16.msra.mxu0 %v1212
        %1268 = vmatmul.bf16.gmra.mxu0 %v673
        %v1269 = vpop.f32.mrf.mxu0
        %v1270 = vadd.f32 0.0, %v1269
        %v1271 = vpop.f32.mrf.mxu0
        %v1272 = vadd.f32 0.0, %v1271
        %1273 = vmatmul.bf16.gmra.mxu0 %v676
        %v1274 = vpop.f32.mrf.mxu0
        %v1275 = vadd.f32 0.0, %v1274
        %v1276 = vpop.f32.mrf.mxu0
        %v1277 = vadd.f32 0.0, %v1276
        %1278 = vdwg.mxu0
        %v1279 = vadd.f32 %v1198, %v1270
        %v1280 = vadd.f32 %v1200, %v1272
        %v1281 = vadd.f32 %v1203, %v1275
        %v1282 = vadd.f32 %v1205, %v1277
        %1283 = vmatpush.msra.mxu0 %v307
        %1284 = vmatpush.msra.mxu0 %v306
        %1285 = vmatpush.msra.mxu0 %v305
        %1286 = vmatpush.msra.mxu0 %v304
        %1287 = vmatpush.msra.mxu0 %v303
        %1288 = vmatpush.msra.mxu0 %v302
        %1289 = vmatpush.msra.mxu0 %v301
        %1290 = vmatpush.msra.mxu0 %v300
        %1291 = vmatpush.msra.mxu0 %v299
        %1292 = vmatpush.msra.mxu0 %v298
        %1293 = vmatpush.msra.mxu0 %v297
        %1294 = vmatpush.msra.mxu0 %v296
        %1295 = vmatpush.msra.mxu0 %v295
        %1296 = vmatpush.msra.mxu0 %v294
        %1297 = vmatpush.msra.mxu0 %v293
        %1298 = vmatpush.msra.mxu0 %v292
        %1299 = vmatmul.f32.gmra.mxu0 %v1279
        %v1300 = vpop.f32.mrf.mxu0
        %v1301 = vadd.f32 0.0, %v1300
        %1302 = vmatmul.f32.gmra.mxu0 %v1280
        %v1303 = vpop.f32.mrf.mxu0
        %v1304 = vadd.f32 0.0, %v1303
        %1305 = vmatmul.f32.gmra.mxu0 %v1281
        %v1306 = vpop.f32.mrf.mxu0
        %v1307 = vadd.f32 0.0, %v1306
        %1308 = vmatmul.f32.gmra.mxu0 %v1282
        %v1309 = vpop.f32.mrf.mxu0
        %v1310 = vadd.f32 0.0, %v1309
        %1311 = vdwg.mxu0
        %v1312 = vadd.f32 %v1256, %v1301
        %v1313 = vadd.f32 %v1257, %v1304
        %v1314 = vadd.f32 %v1258, %v1307
        %v1315 = vadd.f32 %v1259, %v1310
        %1316 = vmatpush.msra.mxu0 %v307
        %1317 = vmatpush.msra.mxu0 %v306
        %1318 = vmatpush.msra.mxu0 %v305
        %1319 = vmatpush.msra.mxu0 %v304
        %1320 = vmatpush.msra.mxu0 %v303
        %1321 = vmatpush.msra.mxu0 %v302
        %1322 = vmatpush.msra.mxu0 %v301
        %1323 = vmatpush.msra.mxu0 %v300
        %1324 = vmatpush.msra.mxu0 %v299
        %1325 = vmatpush.msra.mxu0 %v298
        %1326 = vmatpush.msra.mxu0 %v297
        %1327 = vmatpush.msra.mxu0 %v296
        %1328 = vmatpush.msra.mxu0 %v295
        %1329 = vmatpush.msra.mxu0 %v294
        %1330 = vmatpush.msra.mxu0 %v293
        %1331 = vmatpush.msra.mxu0 %v292
        %1332 = vmatmul.f32.gmra.mxu0 %v1312
        %v1333 = vpop.f32.mrf.mxu0
        %v1334 = vadd.f32 0.0, %v1333
        %1335 = vmatmul.f32.gmra.mxu0 %v1313
        %v1336 = vpop.f32.mrf.mxu0
        %v1337 = vadd.f32 0.0, %v1336
        %1338 = vmatmul.f32.gmra.mxu0 %v1314
        %v1339 = vpop.f32.mrf.mxu0
        %v1340 = vadd.f32 0.0, %v1339
        %1341 = vmatmul.f32.gmra.mxu0 %v1315
        %v1342 = vpop.f32.mrf.mxu0
        %v1343 = vadd.f32 0.0, %v1342
        %1344 = vdwg.mxu0
        %v1345 = vadd.f32 %v1233, %v1334
        %v1346 = vadd.f32 %v1234, %v1337
        %v1347 = vadd.f32 %v1235, %v1340
        %v1348 = vadd.f32 %v1236, %v1343
        %v1349 = vadd.f32 %v1345, %v770
        %v1350 = vadd.f32 %v1346, %v775
        %v1351 = vadd.f32 %v1347, %v780
        %v1352 = vadd.f32 %v1348, %v785
        %v1353 = vmax.f32 %v1349, 0.0
        %v1354 = vmax.f32 %v1350, 0.0
        %v1355 = vmax.f32 %v1351, 0.0
        %v1356 = vmax.f32 %v1352, 0.0
        %v1357 = vperm.slane %v291, 2
        %v1358 = vmul.f32 %v1353, %v1357
        %v1359 = vmul.f32 %v1354, %v1357
        %v1360 = vmul.f32 %v1355, %v1357
        %v1361 = vmul.f32 %v1356, %v1357
        %1362 = vadd.xlane.f32.xlu0 %v1358
        %v1363 = vpop.xlane.xlu0 %1362
        %1364 = vadd.xlane.f32.xlu0 %v1359
        %v1365 = vpop.xlane.xlu0 %1364
        %1366 = vadd.xlane.f32.xlu0 %v1360
        %v1367 = vpop.xlane.xlu0 %1366
        %1368 = vadd.xlane.f32.xlu0 %v1361
        %v1369 = vpop.xlane.xlu0 %1368
        %v1370 = vadd.f32 %v1089, %v1363
        %v1371 = vadd.f32 %v1090, %v1365
        %v1372 = vadd.f32 %v1091, %v1367
        %v1373 = vadd.f32 %v1092, %v1369
        %1374 = vmatpush.bf16.msra.mxu0 0
        %1375 = vmatpush.bf16.msra.mxu0 0
        %1376 = vmatpush.bf16.msra.mxu0 0
        %1377 = vmatpush.bf16.msra.mxu0 0
        %1378 = vmatpush.bf16.msra.mxu0 0
        %1379 = vmatpush.bf16.msra.mxu0 0
        %1380 = vmatpush.bf16.msra.mxu0 0
        %1381 = vmatpush.bf16.msra.mxu0 %v1212
        %1382 = vmatmul.bf16.gmra.mxu0 %v346
        %v1383 = vpop.f32.mrf.mxu0
        %v1384 = vadd.f32 0.0, %v1383
        %v1385 = vpop.f32.mrf.mxu0
        %v1386 = vadd.f32 0.0, %v1385
        %1387 = vmatmul.bf16.gmra.mxu0 %v349
        %v1388 = vpop.f32.mrf.mxu0
        %v1389 = vadd.f32 0.0, %v1388
        %v1390 = vpop.f32.mrf.mxu0
        %v1391 = vadd.f32 0.0, %v1390
        %1392 = vdwg.mxu0
        %1393 = vmatpush.bf16.msra.mxu0 0
        %1394 = vmatpush.bf16.msra.mxu0 0
        %1395 = vmatpush.bf16.msra.mxu0 0
        %1396 = vmatpush.bf16.msra.mxu0 0
        %1397 = vmatpush.bf16.msra.mxu0 0
        %1398 = vmatpush.bf16.msra.mxu0 0
        %1399 = vmatpush.bf16.msra.mxu0 0
        %1400 = vmatpush.bf16.msra.mxu0 %v931
        %1401 = vmatmul.bf16.gmra.mxu0 %v385
        %v1402 = vpop.f32.mrf.mxu0
        %v1403 = vadd.f32 %v1384, %v1402
        %v1404 = vpop.f32.mrf.mxu0
        %v1405 = vadd.f32 %v1386, %v1404
        %1406 = vmatmul.bf16.gmra.mxu0 %v388
        %v1407 = vpop.f32.mrf.mxu0
        %v1408 = vadd.f32 %v1389, %v1407
        %v1409 = vpop.f32.mrf.mxu0
        %v1410 = vadd.f32 %v1391, %v1409
        %1411 = vdwg.mxu0
        %1412 = vmatpush.bf16.msra.mxu0 0
        %1413 = vmatpush.bf16.msra.mxu0 0
        %1414 = vmatpush.bf16.msra.mxu0 0
        %1415 = vmatpush.bf16.msra.mxu0 0
        %1416 = vmatpush.bf16.msra.mxu0 0
        %1417 = vmatpush.bf16.msra.mxu0 0
        %1418 = vmatpush.bf16.msra.mxu0 0
        %1419 = vmatpush.bf16.msra.mxu0 %v1212
        %1420 = vmatmul.bf16.gmra.mxu0 %v428
        %v1421 = vpop.f32.mrf.mxu0
        %v1422 = vadd.f32 0.0, %v1421
        %v1423 = vpop.f32.mrf.mxu0
        %v1424 = vadd.f32 0.0, %v1423
        %1425 = vmatmul.bf16.gmra.mxu0 %v431
        %v1426 = vpop.f32.mrf.mxu0
        %v1427 = vadd.f32 0.0, %v1426
        %v1428 = vpop.f32.mrf.mxu0
        %v1429 = vadd.f32 0.0, %v1428
        %1430 = vdwg.mxu0
        %1431 = vmatpush.bf16.msra.mxu0 0
        %1432 = vmatpush.bf16.msra.mxu0 0
        %1433 = vmatpush.bf16.msra.mxu0 0
        %1434 = vmatpush.bf16.msra.mxu0 0
        %1435 = vmatpush.bf16.msra.mxu0 0
        %1436 = vmatpush.bf16.msra.mxu0 0
        %1437 = vmatpush.bf16.msra.mxu0 0
        %1438 = vmatpush.bf16.msra.mxu0 %v931
        %1439 = vmatmul.bf16.gmra.mxu0 %v463
        %v1440 = vpop.f32.mrf.mxu0
        %v1441 = vadd.f32 %v1422, %v1440
        %v1442 = vpop.f32.mrf.mxu0
        %v1443 = vadd.f32 %v1424, %v1442
        %1444 = vmatmul.bf16.gmra.mxu0 %v466
        %v1445 = vpop.f32.mrf.mxu0
        %v1446 = vadd.f32 %v1427, %v1445
        %v1447 = vpop.f32.mrf.mxu0
        %v1448 = vadd.f32 %v1429, %v1447
        %1449 = vdwg.mxu0
        %1450 = vmatpush.bf16.msra.mxu0 0
        %1451 = vmatpush.bf16.msra.mxu0 0
        %1452 = vmatpush.bf16.msra.mxu0 0
        %1453 = vmatpush.bf16.msra.mxu0 0
        %1454 = vmatpush.bf16.msra.mxu0 0
        %1455 = vmatpush.bf16.msra.mxu0 0
        %1456 = vmatpush.bf16.msra.mxu0 0
        %1457 = vmatpush.bf16.msra.mxu0 %v1212
        %1458 = vmatmul.bf16.gmra.mxu0 %v503
        %v1459 = vpop.f32.mrf.mxu0
        %v1460 = vadd.f32 0.0, %v1459
        %v1461 = vpop.f32.mrf.mxu0
        %v1462 = vadd.f32 0.0, %v1461
        %1463 = vmatmul.bf16.gmra.mxu0 %v506
        %v1464 = vpop.f32.mrf.mxu0
        %v1465 = vadd.f32 0.0, %v1464
        %v1466 = vpop.f32.mrf.mxu0
        %v1467 = vadd.f32 0.0, %v1466
        %1468 = vdwg.mxu0
        %1469 = vmatpush.bf16.msra.mxu0 0
        %1470 = vmatpush.bf16.msra.mxu0 0
        %1471 = vmatpush.bf16.msra.mxu0 0
        %1472 = vmatpush.bf16.msra.mxu0 0
        %1473 = vmatpush.bf16.msra.mxu0 0
        %1474 = vmatpush.bf16.msra.mxu0 0
        %1475 = vmatpush.bf16.msra.mxu0 0
        %1476 = vmatpush.bf16.msra.mxu0 %v931
        %1477 = vmatmul.bf16.gmra.mxu0 %v538
        %v1478 = vpop.f32.mrf.mxu0
        %v1479 = vadd.f32 %v1460, %v1478
        %v1480 = vpop.f32.mrf.mxu0
        %v1481 = vadd.f32 %v1462, %v1480
        %1482 = vmatmul.bf16.gmra.mxu0 %v541
        %v1483 = vpop.f32.mrf.mxu0
        %v1484 = vadd.f32 %v1465, %v1483
        %v1485 = vpop.f32.mrf.mxu0
        %v1486 = vadd.f32 %v1467, %v1485
        %1487 = vdwg.mxu0
        %s1488 = sadd.s32 %s286, 5
        %s1489 = smul.addr %s1488, 2
        %s1490 = scalar_lea.vmem %s235, %s1489 [#allocation3]
        %v1491 = vld [vmem:[%s1490] sm:$0x3]
        %v1493 = vsel %vm351, %v1491, 0
        %1495 = vmatpush.bf16.msra.mxu0 0
        %1496 = vmatpush.bf16.msra.mxu0 0
        %1497 = vmatpush.bf16.msra.mxu0 0
        %1498 = vmatpush.bf16.msra.mxu0 0
        %1499 = vmatpush.bf16.msra.mxu0 0
        %1500 = vmatpush.bf16.msra.mxu0 0
        %1501 = vmatpush.bf16.msra.mxu0 0
        %1502 = vmatpush.bf16.msra.mxu0 %v1493
        %1503 = vmatmul.bf16.gmra.mxu0 %v582
        %v1504 = vpop.f32.mrf.mxu0
        %v1505 = vadd.f32 0.0, %v1504
        %v1506 = vpop.f32.mrf.mxu0
        %v1507 = vadd.f32 0.0, %v1506
        %1508 = vmatmul.bf16.gmra.mxu0 %v585
        %v1509 = vpop.f32.mrf.mxu0
        %v1510 = vadd.f32 0.0, %v1509
        %v1511 = vpop.f32.mrf.mxu0
        %v1512 = vadd.f32 0.0, %v1511
        %1513 = vdwg.mxu0
        %v1514 = vadd.f32 %v1403, %v1505
        %v1515 = vadd.f32 %v1405, %v1507
        %v1516 = vadd.f32 %v1408, %v1510
        %v1517 = vadd.f32 %v1410, %v1512
        %1518 = vmatpush.bf16.msra.mxu0 0
        %1519 = vmatpush.bf16.msra.mxu0 0
        %1520 = vmatpush.bf16.msra.mxu0 0
        %1521 = vmatpush.bf16.msra.mxu0 0
        %1522 = vmatpush.bf16.msra.mxu0 0
        %1523 = vmatpush.bf16.msra.mxu0 0
        %1524 = vmatpush.bf16.msra.mxu0 0
        %1525 = vmatpush.bf16.msra.mxu0 %v1493
        %1526 = vmatmul.bf16.gmra.mxu0 %v629
        %v1527 = vpop.f32.mrf.mxu0
        %v1528 = vadd.f32 0.0, %v1527
        %v1529 = vpop.f32.mrf.mxu0
        %v1530 = vadd.f32 0.0, %v1529
        %1531 = vmatmul.bf16.gmra.mxu0 %v632
        %v1532 = vpop.f32.mrf.mxu0
        %v1533 = vadd.f32 0.0, %v1532
        %v1534 = vpop.f32.mrf.mxu0
        %v1535 = vadd.f32 0.0, %v1534
        %1536 = vdwg.mxu0
        %v1537 = vadd.f32 %v1441, %v1528
        %v1538 = vadd.f32 %v1443, %v1530
        %v1539 = vadd.f32 %v1446, %v1533
        %v1540 = vadd.f32 %v1448, %v1535
        %1541 = vmatpush.bf16.msra.mxu0 0
        %1542 = vmatpush.bf16.msra.mxu0 0
        %1543 = vmatpush.bf16.msra.mxu0 0
        %1544 = vmatpush.bf16.msra.mxu0 0
        %1545 = vmatpush.bf16.msra.mxu0 0
        %1546 = vmatpush.bf16.msra.mxu0 0
        %1547 = vmatpush.bf16.msra.mxu0 0
        %1548 = vmatpush.bf16.msra.mxu0 %v1493
        %1549 = vmatmul.bf16.gmra.mxu0 %v673
        %v1550 = vpop.f32.mrf.mxu0
        %v1551 = vadd.f32 0.0, %v1550
        %v1552 = vpop.f32.mrf.mxu0
        %v1553 = vadd.f32 0.0, %v1552
        %1554 = vmatmul.bf16.gmra.mxu0 %v676
        %v1555 = vpop.f32.mrf.mxu0
        %v1556 = vadd.f32 0.0, %v1555
        %v1557 = vpop.f32.mrf.mxu0
        %v1558 = vadd.f32 0.0, %v1557
        %1559 = vdwg.mxu0
        %v1560 = vadd.f32 %v1479, %v1551
        %v1561 = vadd.f32 %v1481, %v1553
        %v1562 = vadd.f32 %v1484, %v1556
        %v1563 = vadd.f32 %v1486, %v1558
        %1564 = vmatpush.msra.mxu0 %v307
        %1565 = vmatpush.msra.mxu0 %v306
        %1566 = vmatpush.msra.mxu0 %v305
        %1567 = vmatpush.msra.mxu0 %v304
        %1568 = vmatpush.msra.mxu0 %v303
        %1569 = vmatpush.msra.mxu0 %v302
        %1570 = vmatpush.msra.mxu0 %v301
        %1571 = vmatpush.msra.mxu0 %v300
        %1572 = vmatpush.msra.mxu0 %v299
        %1573 = vmatpush.msra.mxu0 %v298
        %1574 = vmatpush.msra.mxu0 %v297
        %1575 = vmatpush.msra.mxu0 %v296
        %1576 = vmatpush.msra.mxu0 %v295
        %1577 = vmatpush.msra.mxu0 %v294
        %1578 = vmatpush.msra.mxu0 %v293
        %1579 = vmatpush.msra.mxu0 %v292
        %1580 = vmatmul.f32.gmra.mxu0 %v1560
        %v1581 = vpop.f32.mrf.mxu0
        %v1582 = vadd.f32 0.0, %v1581
        %1583 = vmatmul.f32.gmra.mxu0 %v1561
        %v1584 = vpop.f32.mrf.mxu0
        %v1585 = vadd.f32 0.0, %v1584
        %1586 = vmatmul.f32.gmra.mxu0 %v1562
        %v1587 = vpop.f32.mrf.mxu0
        %v1588 = vadd.f32 0.0, %v1587
        %1589 = vmatmul.f32.gmra.mxu0 %v1563
        %v1590 = vpop.f32.mrf.mxu0
        %v1591 = vadd.f32 0.0, %v1590
        %1592 = vdwg.mxu0
        %v1593 = vadd.f32 %v1537, %v1582
        %v1594 = vadd.f32 %v1538, %v1585
        %v1595 = vadd.f32 %v1539, %v1588
        %v1596 = vadd.f32 %v1540, %v1591
        %1597 = vmatpush.msra.mxu0 %v307
        %1598 = vmatpush.msra.mxu0 %v306
        %1599 = vmatpush.msra.mxu0 %v305
        %1600 = vmatpush.msra.mxu0 %v304
        %1601 = vmatpush.msra.mxu0 %v303
        %1602 = vmatpush.msra.mxu0 %v302
        %1603 = vmatpush.msra.mxu0 %v301
        %1604 = vmatpush.msra.mxu0 %v300
        %1605 = vmatpush.msra.mxu0 %v299
        %1606 = vmatpush.msra.mxu0 %v298
        %1607 = vmatpush.msra.mxu0 %v297
        %1608 = vmatpush.msra.mxu0 %v296
        %1609 = vmatpush.msra.mxu0 %v295
        %1610 = vmatpush.msra.mxu0 %v294
        %1611 = vmatpush.msra.mxu0 %v293
        %1612 = vmatpush.msra.mxu0 %v292
        %1613 = vmatmul.f32.gmra.mxu0 %v1593
        %v1614 = vpop.f32.mrf.mxu0
        %v1615 = vadd.f32 0.0, %v1614
        %1616 = vmatmul.f32.gmra.mxu0 %v1594
        %v1617 = vpop.f32.mrf.mxu0
        %v1618 = vadd.f32 0.0, %v1617
        %1619 = vmatmul.f32.gmra.mxu0 %v1595
        %v1620 = vpop.f32.mrf.mxu0
        %v1621 = vadd.f32 0.0, %v1620
        %1622 = vmatmul.f32.gmra.mxu0 %v1596
        %v1623 = vpop.f32.mrf.mxu0
        %v1624 = vadd.f32 0.0, %v1623
        %1625 = vdwg.mxu0
        %v1626 = vadd.f32 %v1514, %v1615
        %v1627 = vadd.f32 %v1515, %v1618
        %v1628 = vadd.f32 %v1516, %v1621
        %v1629 = vadd.f32 %v1517, %v1624
        %v1630 = vadd.f32 %v1626, %v770
        %v1631 = vadd.f32 %v1627, %v775
        %v1632 = vadd.f32 %v1628, %v780
        %v1633 = vadd.f32 %v1629, %v785
        %v1634 = vmax.f32 %v1630, 0.0
        %v1635 = vmax.f32 %v1631, 0.0
        %v1636 = vmax.f32 %v1632, 0.0
        %v1637 = vmax.f32 %v1633, 0.0
        %v1638 = vperm.slane %v291, 3
        %v1639 = vmul.f32 %v1634, %v1638
        %v1640 = vmul.f32 %v1635, %v1638
        %v1641 = vmul.f32 %v1636, %v1638
        %v1642 = vmul.f32 %v1637, %v1638
        %1643 = vadd.xlane.f32.xlu0 %v1639
        %v1644 = vpop.xlane.xlu0 %1643
        %1645 = vadd.xlane.f32.xlu0 %v1640
        %v1646 = vpop.xlane.xlu0 %1645
        %1647 = vadd.xlane.f32.xlu0 %v1641
        %v1648 = vpop.xlane.xlu0 %1647
        %1649 = vadd.xlane.f32.xlu0 %v1642
        %v1650 = vpop.xlane.xlu0 %1649
        %v1651 = vadd.f32 %v1370, %v1644
        %v1652 = vadd.f32 %v1371, %v1646
        %v1653 = vadd.f32 %v1372, %v1648
        %v1654 = vadd.f32 %v1373, %v1650
        %1655 = vmatpush.bf16.msra.mxu0 0
        %1656 = vmatpush.bf16.msra.mxu0 0
        %1657 = vmatpush.bf16.msra.mxu0 0
        %1658 = vmatpush.bf16.msra.mxu0 0
        %1659 = vmatpush.bf16.msra.mxu0 0
        %1660 = vmatpush.bf16.msra.mxu0 0
        %1661 = vmatpush.bf16.msra.mxu0 0
        %1662 = vmatpush.bf16.msra.mxu0 %v1493
        %1663 = vmatmul.bf16.gmra.mxu0 %v346
        %v1664 = vpop.f32.mrf.mxu0
        %v1665 = vadd.f32 0.0, %v1664
        %v1666 = vpop.f32.mrf.mxu0
        %v1667 = vadd.f32 0.0, %v1666
        %1668 = vmatmul.bf16.gmra.mxu0 %v349
        %v1669 = vpop.f32.mrf.mxu0
        %v1670 = vadd.f32 0.0, %v1669
        %v1671 = vpop.f32.mrf.mxu0
        %v1672 = vadd.f32 0.0, %v1671
        %1673 = vdwg.mxu0
        %1674 = vmatpush.bf16.msra.mxu0 0
        %1675 = vmatpush.bf16.msra.mxu0 0
        %1676 = vmatpush.bf16.msra.mxu0 0
        %1677 = vmatpush.bf16.msra.mxu0 0
        %1678 = vmatpush.bf16.msra.mxu0 0
        %1679 = vmatpush.bf16.msra.mxu0 0
        %1680 = vmatpush.bf16.msra.mxu0 0
        %1681 = vmatpush.bf16.msra.mxu0 %v1212
        %1682 = vmatmul.bf16.gmra.mxu0 %v385
        %v1683 = vpop.f32.mrf.mxu0
        %v1684 = vadd.f32 %v1665, %v1683
        %v1685 = vpop.f32.mrf.mxu0
        %v1686 = vadd.f32 %v1667, %v1685
        %1687 = vmatmul.bf16.gmra.mxu0 %v388
        %v1688 = vpop.f32.mrf.mxu0
        %v1689 = vadd.f32 %v1670, %v1688
        %v1690 = vpop.f32.mrf.mxu0
        %v1691 = vadd.f32 %v1672, %v1690
        %1692 = vdwg.mxu0
        %1693 = vmatpush.bf16.msra.mxu0 0
        %1694 = vmatpush.bf16.msra.mxu0 0
        %1695 = vmatpush.bf16.msra.mxu0 0
        %1696 = vmatpush.bf16.msra.mxu0 0
        %1697 = vmatpush.bf16.msra.mxu0 0
        %1698 = vmatpush.bf16.msra.mxu0 0
        %1699 = vmatpush.bf16.msra.mxu0 0
        %1700 = vmatpush.bf16.msra.mxu0 %v1493
        %1701 = vmatmul.bf16.gmra.mxu0 %v428
        %v1702 = vpop.f32.mrf.mxu0
        %v1703 = vadd.f32 0.0, %v1702
        %v1704 = vpop.f32.mrf.mxu0
        %v1705 = vadd.f32 0.0, %v1704
        %1706 = vmatmul.bf16.gmra.mxu0 %v431
        %v1707 = vpop.f32.mrf.mxu0
        %v1708 = vadd.f32 0.0, %v1707
        %v1709 = vpop.f32.mrf.mxu0
        %v1710 = vadd.f32 0.0, %v1709
        %1711 = vdwg.mxu0
        %1712 = vmatpush.bf16.msra.mxu0 0
        %1713 = vmatpush.bf16.msra.mxu0 0
        %1714 = vmatpush.bf16.msra.mxu0 0
        %1715 = vmatpush.bf16.msra.mxu0 0
        %1716 = vmatpush.bf16.msra.mxu0 0
        %1717 = vmatpush.bf16.msra.mxu0 0
        %1718 = vmatpush.bf16.msra.mxu0 0
        %1719 = vmatpush.bf16.msra.mxu0 %v1212
        %1720 = vmatmul.bf16.gmra.mxu0 %v463
        %v1721 = vpop.f32.mrf.mxu0
        %v1722 = vadd.f32 %v1703, %v1721
        %v1723 = vpop.f32.mrf.mxu0
        %v1724 = vadd.f32 %v1705, %v1723
        %1725 = vmatmul.bf16.gmra.mxu0 %v466
        %v1726 = vpop.f32.mrf.mxu0
        %v1727 = vadd.f32 %v1708, %v1726
        %v1728 = vpop.f32.mrf.mxu0
        %v1729 = vadd.f32 %v1710, %v1728
        %1730 = vdwg.mxu0
        %1731 = vmatpush.bf16.msra.mxu0 0
        %1732 = vmatpush.bf16.msra.mxu0 0
        %1733 = vmatpush.bf16.msra.mxu0 0
        %1734 = vmatpush.bf16.msra.mxu0 0
        %1735 = vmatpush.bf16.msra.mxu0 0
        %1736 = vmatpush.bf16.msra.mxu0 0
        %1737 = vmatpush.bf16.msra.mxu0 0
        %1738 = vmatpush.bf16.msra.mxu0 %v1493
        %1739 = vmatmul.bf16.gmra.mxu0 %v503
        %v1740 = vpop.f32.mrf.mxu0
        %v1741 = vadd.f32 0.0, %v1740
        %v1742 = vpop.f32.mrf.mxu0
        %v1743 = vadd.f32 0.0, %v1742
        %1744 = vmatmul.bf16.gmra.mxu0 %v506
        %v1745 = vpop.f32.mrf.mxu0
        %v1746 = vadd.f32 0.0, %v1745
        %v1747 = vpop.f32.mrf.mxu0
        %v1748 = vadd.f32 0.0, %v1747
        %1749 = vdwg.mxu0
        %1750 = vmatpush.bf16.msra.mxu0 0
        %1751 = vmatpush.bf16.msra.mxu0 0
        %1752 = vmatpush.bf16.msra.mxu0 0
        %1753 = vmatpush.bf16.msra.mxu0 0
        %1754 = vmatpush.bf16.msra.mxu0 0
        %1755 = vmatpush.bf16.msra.mxu0 0
        %1756 = vmatpush.bf16.msra.mxu0 0
        %1757 = vmatpush.bf16.msra.mxu0 %v1212
        %1758 = vmatmul.bf16.gmra.mxu0 %v538
        %v1759 = vpop.f32.mrf.mxu0
        %v1760 = vadd.f32 %v1741, %v1759
        %v1761 = vpop.f32.mrf.mxu0
        %v1762 = vadd.f32 %v1743, %v1761
        %1763 = vmatmul.bf16.gmra.mxu0 %v541
        %v1764 = vpop.f32.mrf.mxu0
        %v1765 = vadd.f32 %v1746, %v1764
        %v1766 = vpop.f32.mrf.mxu0
        %v1767 = vadd.f32 %v1748, %v1766
        %1768 = vdwg.mxu0
        %s1769 = sadd.s32 %s286, 6
        %s1770 = smul.addr %s1769, 2
        %s1771 = scalar_lea.vmem %s235, %s1770 [#allocation3]
        %v1772 = vld [vmem:[%s1771] sm:$0x3]
        %v1774 = vsel %vm351, %v1772, 0
        %1776 = vmatpush.bf16.msra.mxu0 0
        %1777 = vmatpush.bf16.msra.mxu0 0
        %1778 = vmatpush.bf16.msra.mxu0 0
        %1779 = vmatpush.bf16.msra.mxu0 0
        %1780 = vmatpush.bf16.msra.mxu0 0
        %1781 = vmatpush.bf16.msra.mxu0 0
        %1782 = vmatpush.bf16.msra.mxu0 0
        %1783 = vmatpush.bf16.msra.mxu0 %v1774
        %1784 = vmatmul.bf16.gmra.mxu0 %v582
        %v1785 = vpop.f32.mrf.mxu0
        %v1786 = vadd.f32 0.0, %v1785
        %v1787 = vpop.f32.mrf.mxu0
        %v1788 = vadd.f32 0.0, %v1787
        %1789 = vmatmul.bf16.gmra.mxu0 %v585
        %v1790 = vpop.f32.mrf.mxu0
        %v1791 = vadd.f32 0.0, %v1790
        %v1792 = vpop.f32.mrf.mxu0
        %v1793 = vadd.f32 0.0, %v1792
        %1794 = vdwg.mxu0
        %v1795 = vadd.f32 %v1684, %v1786
        %v1796 = vadd.f32 %v1686, %v1788
        %v1797 = vadd.f32 %v1689, %v1791
        %v1798 = vadd.f32 %v1691, %v1793
        %1799 = vmatpush.bf16.msra.mxu0 0
        %1800 = vmatpush.bf16.msra.mxu0 0
        %1801 = vmatpush.bf16.msra.mxu0 0
        %1802 = vmatpush.bf16.msra.mxu0 0
        %1803 = vmatpush.bf16.msra.mxu0 0
        %1804 = vmatpush.bf16.msra.mxu0 0
        %1805 = vmatpush.bf16.msra.mxu0 0
        %1806 = vmatpush.bf16.msra.mxu0 %v1774
        %1807 = vmatmul.bf16.gmra.mxu0 %v629
        %v1808 = vpop.f32.mrf.mxu0
        %v1809 = vadd.f32 0.0, %v1808
        %v1810 = vpop.f32.mrf.mxu0
        %v1811 = vadd.f32 0.0, %v1810
        %1812 = vmatmul.bf16.gmra.mxu0 %v632
        %v1813 = vpop.f32.mrf.mxu0
        %v1814 = vadd.f32 0.0, %v1813
        %v1815 = vpop.f32.mrf.mxu0
        %v1816 = vadd.f32 0.0, %v1815
        %1817 = vdwg.mxu0
        %v1818 = vadd.f32 %v1722, %v1809
        %v1819 = vadd.f32 %v1724, %v1811
        %v1820 = vadd.f32 %v1727, %v1814
        %v1821 = vadd.f32 %v1729, %v1816
        %1822 = vmatpush.bf16.msra.mxu0 0
        %1823 = vmatpush.bf16.msra.mxu0 0
        %1824 = vmatpush.bf16.msra.mxu0 0
        %1825 = vmatpush.bf16.msra.mxu0 0
        %1826 = vmatpush.bf16.msra.mxu0 0
        %1827 = vmatpush.bf16.msra.mxu0 0
        %1828 = vmatpush.bf16.msra.mxu0 0
        %1829 = vmatpush.bf16.msra.mxu0 %v1774
        %1830 = vmatmul.bf16.gmra.mxu0 %v673
        %v1831 = vpop.f32.mrf.mxu0
        %v1832 = vadd.f32 0.0, %v1831
        %v1833 = vpop.f32.mrf.mxu0
        %v1834 = vadd.f32 0.0, %v1833
        %1835 = vmatmul.bf16.gmra.mxu0 %v676
        %v1836 = vpop.f32.mrf.mxu0
        %v1837 = vadd.f32 0.0, %v1836
        %v1838 = vpop.f32.mrf.mxu0
        %v1839 = vadd.f32 0.0, %v1838
        %1840 = vdwg.mxu0
        %v1841 = vadd.f32 %v1760, %v1832
        %v1842 = vadd.f32 %v1762, %v1834
        %v1843 = vadd.f32 %v1765, %v1837
        %v1844 = vadd.f32 %v1767, %v1839
        %1845 = vmatpush.msra.mxu0 %v307
        %1846 = vmatpush.msra.mxu0 %v306
        %1847 = vmatpush.msra.mxu0 %v305
        %1848 = vmatpush.msra.mxu0 %v304
        %1849 = vmatpush.msra.mxu0 %v303
        %1850 = vmatpush.msra.mxu0 %v302
        %1851 = vmatpush.msra.mxu0 %v301
        %1852 = vmatpush.msra.mxu0 %v300
        %1853 = vmatpush.msra.mxu0 %v299
        %1854 = vmatpush.msra.mxu0 %v298
        %1855 = vmatpush.msra.mxu0 %v297
        %1856 = vmatpush.msra.mxu0 %v296
        %1857 = vmatpush.msra.mxu0 %v295
        %1858 = vmatpush.msra.mxu0 %v294
        %1859 = vmatpush.msra.mxu0 %v293
        %1860 = vmatpush.msra.mxu0 %v292
        %1861 = vmatmul.f32.gmra.mxu0 %v1841
        %v1862 = vpop.f32.mrf.mxu0
        %v1863 = vadd.f32 0.0, %v1862
        %1864 = vmatmul.f32.gmra.mxu0 %v1842
        %v1865 = vpop.f32.mrf.mxu0
        %v1866 = vadd.f32 0.0, %v1865
        %1867 = vmatmul.f32.gmra.mxu0 %v1843
        %v1868 = vpop.f32.mrf.mxu0
        %v1869 = vadd.f32 0.0, %v1868
        %1870 = vmatmul.f32.gmra.mxu0 %v1844
        %v1871 = vpop.f32.mrf.mxu0
        %v1872 = vadd.f32 0.0, %v1871
        %1873 = vdwg.mxu0
        %v1874 = vadd.f32 %v1818, %v1863
        %v1875 = vadd.f32 %v1819, %v1866
        %v1876 = vadd.f32 %v1820, %v1869
        %v1877 = vadd.f32 %v1821, %v1872
        %1878 = vmatpush.msra.mxu0 %v307
        %1879 = vmatpush.msra.mxu0 %v306
        %1880 = vmatpush.msra.mxu0 %v305
        %1881 = vmatpush.msra.mxu0 %v304
        %1882 = vmatpush.msra.mxu0 %v303
        %1883 = vmatpush.msra.mxu0 %v302
        %1884 = vmatpush.msra.mxu0 %v301
        %1885 = vmatpush.msra.mxu0 %v300
        %1886 = vmatpush.msra.mxu0 %v299
        %1887 = vmatpush.msra.mxu0 %v298
        %1888 = vmatpush.msra.mxu0 %v297
        %1889 = vmatpush.msra.mxu0 %v296
        %1890 = vmatpush.msra.mxu0 %v295
        %1891 = vmatpush.msra.mxu0 %v294
        %1892 = vmatpush.msra.mxu0 %v293
        %1893 = vmatpush.msra.mxu0 %v292
        %1894 = vmatmul.f32.gmra.mxu0 %v1874
        %v1895 = vpop.f32.mrf.mxu0
        %v1896 = vadd.f32 0.0, %v1895
        %1897 = vmatmul.f32.gmra.mxu0 %v1875
        %v1898 = vpop.f32.mrf.mxu0
        %v1899 = vadd.f32 0.0, %v1898
        %1900 = vmatmul.f32.gmra.mxu0 %v1876
        %v1901 = vpop.f32.mrf.mxu0
        %v1902 = vadd.f32 0.0, %v1901
        %1903 = vmatmul.f32.gmra.mxu0 %v1877
        %v1904 = vpop.f32.mrf.mxu0
        %v1905 = vadd.f32 0.0, %v1904
        %1906 = vdwg.mxu0
        %v1907 = vadd.f32 %v1795, %v1896
        %v1908 = vadd.f32 %v1796, %v1899
        %v1909 = vadd.f32 %v1797, %v1902
        %v1910 = vadd.f32 %v1798, %v1905
        %v1911 = vadd.f32 %v1907, %v770
        %v1912 = vadd.f32 %v1908, %v775
        %v1913 = vadd.f32 %v1909, %v780
        %v1914 = vadd.f32 %v1910, %v785
        %v1915 = vmax.f32 %v1911, 0.0
        %v1916 = vmax.f32 %v1912, 0.0
        %v1917 = vmax.f32 %v1913, 0.0
        %v1918 = vmax.f32 %v1914, 0.0
        %v1919 = vperm.slane %v291, 4
        %v1920 = vmul.f32 %v1915, %v1919
        %v1921 = vmul.f32 %v1916, %v1919
        %v1922 = vmul.f32 %v1917, %v1919
        %v1923 = vmul.f32 %v1918, %v1919
        %1924 = vadd.xlane.f32.xlu0 %v1920
        %v1925 = vpop.xlane.xlu0 %1924
        %1926 = vadd.xlane.f32.xlu0 %v1921
        %v1927 = vpop.xlane.xlu0 %1926
        %1928 = vadd.xlane.f32.xlu0 %v1922
        %v1929 = vpop.xlane.xlu0 %1928
        %1930 = vadd.xlane.f32.xlu0 %v1923
        %v1931 = vpop.xlane.xlu0 %1930
        %v1932 = vadd.f32 %v1651, %v1925
        %v1933 = vadd.f32 %v1652, %v1927
        %v1934 = vadd.f32 %v1653, %v1929
        %v1935 = vadd.f32 %v1654, %v1931
        %1936 = vmatpush.bf16.msra.mxu0 0
        %1937 = vmatpush.bf16.msra.mxu0 0
        %1938 = vmatpush.bf16.msra.mxu0 0
        %1939 = vmatpush.bf16.msra.mxu0 0
        %1940 = vmatpush.bf16.msra.mxu0 0
        %1941 = vmatpush.bf16.msra.mxu0 0
        %1942 = vmatpush.bf16.msra.mxu0 0
        %1943 = vmatpush.bf16.msra.mxu0 %v1774
        %1944 = vmatmul.bf16.gmra.mxu0 %v346
        %v1945 = vpop.f32.mrf.mxu0
        %v1946 = vadd.f32 0.0, %v1945
        %v1947 = vpop.f32.mrf.mxu0
        %v1948 = vadd.f32 0.0, %v1947
        %1949 = vmatmul.bf16.gmra.mxu0 %v349
        %v1950 = vpop.f32.mrf.mxu0
        %v1951 = vadd.f32 0.0, %v1950
        %v1952 = vpop.f32.mrf.mxu0
        %v1953 = vadd.f32 0.0, %v1952
        %1954 = vdwg.mxu0
        %1955 = vmatpush.bf16.msra.mxu0 0
        %1956 = vmatpush.bf16.msra.mxu0 0
        %1957 = vmatpush.bf16.msra.mxu0 0
        %1958 = vmatpush.bf16.msra.mxu0 0
        %1959 = vmatpush.bf16.msra.mxu0 0
        %1960 = vmatpush.bf16.msra.mxu0 0
        %1961 = vmatpush.bf16.msra.mxu0 0
        %1962 = vmatpush.bf16.msra.mxu0 %v1493
        %1963 = vmatmul.bf16.gmra.mxu0 %v385
        %v1964 = vpop.f32.mrf.mxu0
        %v1965 = vadd.f32 %v1946, %v1964
        %v1966 = vpop.f32.mrf.mxu0
        %v1967 = vadd.f32 %v1948, %v1966
        %1968 = vmatmul.bf16.gmra.mxu0 %v388
        %v1969 = vpop.f32.mrf.mxu0
        %v1970 = vadd.f32 %v1951, %v1969
        %v1971 = vpop.f32.mrf.mxu0
        %v1972 = vadd.f32 %v1953, %v1971
        %1973 = vdwg.mxu0
        %1974 = vmatpush.bf16.msra.mxu0 0
        %1975 = vmatpush.bf16.msra.mxu0 0
        %1976 = vmatpush.bf16.msra.mxu0 0
        %1977 = vmatpush.bf16.msra.mxu0 0
        %1978 = vmatpush.bf16.msra.mxu0 0
        %1979 = vmatpush.bf16.msra.mxu0 0
        %1980 = vmatpush.bf16.msra.mxu0 0
        %1981 = vmatpush.bf16.msra.mxu0 %v1774
        %1982 = vmatmul.bf16.gmra.mxu0 %v428
        %v1983 = vpop.f32.mrf.mxu0
        %v1984 = vadd.f32 0.0, %v1983
        %v1985 = vpop.f32.mrf.mxu0
        %v1986 = vadd.f32 0.0, %v1985
        %1987 = vmatmul.bf16.gmra.mxu0 %v431
        %v1988 = vpop.f32.mrf.mxu0
        %v1989 = vadd.f32 0.0, %v1988
        %v1990 = vpop.f32.mrf.mxu0
        %v1991 = vadd.f32 0.0, %v1990
        %1992 = vdwg.mxu0
        %1993 = vmatpush.bf16.msra.mxu0 0
        %1994 = vmatpush.bf16.msra.mxu0 0
        %1995 = vmatpush.bf16.msra.mxu0 0
        %1996 = vmatpush.bf16.msra.mxu0 0
        %1997 = vmatpush.bf16.msra.mxu0 0
        %1998 = vmatpush.bf16.msra.mxu0 0
        %1999 = vmatpush.bf16.msra.mxu0 0
        %2000 = vmatpush.bf16.msra.mxu0 %v1493
        %2001 = vmatmul.bf16.gmra.mxu0 %v463
        %v2002 = vpop.f32.mrf.mxu0
        %v2003 = vadd.f32 %v1984, %v2002
        %v2004 = vpop.f32.mrf.mxu0
        %v2005 = vadd.f32 %v1986, %v2004
        %2006 = vmatmul.bf16.gmra.mxu0 %v466
        %v2007 = vpop.f32.mrf.mxu0
        %v2008 = vadd.f32 %v1989, %v2007
        %v2009 = vpop.f32.mrf.mxu0
        %v2010 = vadd.f32 %v1991, %v2009
        %2011 = vdwg.mxu0
        %2012 = vmatpush.bf16.msra.mxu0 0
        %2013 = vmatpush.bf16.msra.mxu0 0
        %2014 = vmatpush.bf16.msra.mxu0 0
        %2015 = vmatpush.bf16.msra.mxu0 0
        %2016 = vmatpush.bf16.msra.mxu0 0
        %2017 = vmatpush.bf16.msra.mxu0 0
        %2018 = vmatpush.bf16.msra.mxu0 0
        %2019 = vmatpush.bf16.msra.mxu0 %v1774
        %2020 = vmatmul.bf16.gmra.mxu0 %v503
        %v2021 = vpop.f32.mrf.mxu0
        %v2022 = vadd.f32 0.0, %v2021
        %v2023 = vpop.f32.mrf.mxu0
        %v2024 = vadd.f32 0.0, %v2023
        %2025 = vmatmul.bf16.gmra.mxu0 %v506
        %v2026 = vpop.f32.mrf.mxu0
        %v2027 = vadd.f32 0.0, %v2026
        %v2028 = vpop.f32.mrf.mxu0
        %v2029 = vadd.f32 0.0, %v2028
        %2030 = vdwg.mxu0
        %2031 = vmatpush.bf16.msra.mxu0 0
        %2032 = vmatpush.bf16.msra.mxu0 0
        %2033 = vmatpush.bf16.msra.mxu0 0
        %2034 = vmatpush.bf16.msra.mxu0 0
        %2035 = vmatpush.bf16.msra.mxu0 0
        %2036 = vmatpush.bf16.msra.mxu0 0
        %2037 = vmatpush.bf16.msra.mxu0 0
        %2038 = vmatpush.bf16.msra.mxu0 %v1493
        %2039 = vmatmul.bf16.gmra.mxu0 %v538
        %v2040 = vpop.f32.mrf.mxu0
        %v2041 = vadd.f32 %v2022, %v2040
        %v2042 = vpop.f32.mrf.mxu0
        %v2043 = vadd.f32 %v2024, %v2042
        %2044 = vmatmul.bf16.gmra.mxu0 %v541
        %v2045 = vpop.f32.mrf.mxu0
        %v2046 = vadd.f32 %v2027, %v2045
        %v2047 = vpop.f32.mrf.mxu0
        %v2048 = vadd.f32 %v2029, %v2047
        %2049 = vdwg.mxu0
        %s2050 = sadd.s32 %s286, 7
        %s2051 = smul.addr %s2050, 2
        %s2052 = scalar_lea.vmem %s235, %s2051 [#allocation3]
        %v2053 = vld [vmem:[%s2052] sm:$0x3]
        %v2055 = vsel %vm351, %v2053, 0
        %2057 = vmatpush.bf16.msra.mxu0 0
        %2058 = vmatpush.bf16.msra.mxu0 0
        %2059 = vmatpush.bf16.msra.mxu0 0
        %2060 = vmatpush.bf16.msra.mxu0 0
        %2061 = vmatpush.bf16.msra.mxu0 0
        %2062 = vmatpush.bf16.msra.mxu0 0
        %2063 = vmatpush.bf16.msra.mxu0 0
        %2064 = vmatpush.bf16.msra.mxu0 %v2055
        %2065 = vmatmul.bf16.gmra.mxu0 %v582
        %v2066 = vpop.f32.mrf.mxu0
        %v2067 = vadd.f32 0.0, %v2066
        %v2068 = vpop.f32.mrf.mxu0
        %v2069 = vadd.f32 0.0, %v2068
        %2070 = vmatmul.bf16.gmra.mxu0 %v585
        %v2071 = vpop.f32.mrf.mxu0
        %v2072 = vadd.f32 0.0, %v2071
        %v2073 = vpop.f32.mrf.mxu0
        %v2074 = vadd.f32 0.0, %v2073
        %2075 = vdwg.mxu0
        %v2076 = vadd.f32 %v1965, %v2067
        %v2077 = vadd.f32 %v1967, %v2069
        %v2078 = vadd.f32 %v1970, %v2072
        %v2079 = vadd.f32 %v1972, %v2074
        %2080 = vmatpush.bf16.msra.mxu0 0
        %2081 = vmatpush.bf16.msra.mxu0 0
        %2082 = vmatpush.bf16.msra.mxu0 0
        %2083 = vmatpush.bf16.msra.mxu0 0
        %2084 = vmatpush.bf16.msra.mxu0 0
        %2085 = vmatpush.bf16.msra.mxu0 0
        %2086 = vmatpush.bf16.msra.mxu0 0
        %2087 = vmatpush.bf16.msra.mxu0 %v2055
        %2088 = vmatmul.bf16.gmra.mxu0 %v629
        %v2089 = vpop.f32.mrf.mxu0
        %v2090 = vadd.f32 0.0, %v2089
        %v2091 = vpop.f32.mrf.mxu0
        %v2092 = vadd.f32 0.0, %v2091
        %2093 = vmatmul.bf16.gmra.mxu0 %v632
        %v2094 = vpop.f32.mrf.mxu0
        %v2095 = vadd.f32 0.0, %v2094
        %v2096 = vpop.f32.mrf.mxu0
        %v2097 = vadd.f32 0.0, %v2096
        %2098 = vdwg.mxu0
        %v2099 = vadd.f32 %v2003, %v2090
        %v2100 = vadd.f32 %v2005, %v2092
        %v2101 = vadd.f32 %v2008, %v2095
        %v2102 = vadd.f32 %v2010, %v2097
        %2103 = vmatpush.bf16.msra.mxu0 0
        %2104 = vmatpush.bf16.msra.mxu0 0
        %2105 = vmatpush.bf16.msra.mxu0 0
        %2106 = vmatpush.bf16.msra.mxu0 0
        %2107 = vmatpush.bf16.msra.mxu0 0
        %2108 = vmatpush.bf16.msra.mxu0 0
        %2109 = vmatpush.bf16.msra.mxu0 0
        %2110 = vmatpush.bf16.msra.mxu0 %v2055
        %2111 = vmatmul.bf16.gmra.mxu0 %v673
        %v2112 = vpop.f32.mrf.mxu0
        %v2113 = vadd.f32 0.0, %v2112
        %v2114 = vpop.f32.mrf.mxu0
        %v2115 = vadd.f32 0.0, %v2114
        %2116 = vmatmul.bf16.gmra.mxu0 %v676
        %v2117 = vpop.f32.mrf.mxu0
        %v2118 = vadd.f32 0.0, %v2117
        %v2119 = vpop.f32.mrf.mxu0
        %v2120 = vadd.f32 0.0, %v2119
        %2121 = vdwg.mxu0
        %v2122 = vadd.f32 %v2041, %v2113
        %v2123 = vadd.f32 %v2043, %v2115
        %v2124 = vadd.f32 %v2046, %v2118
        %v2125 = vadd.f32 %v2048, %v2120
        %2126 = vmatpush.msra.mxu0 %v307
        %2127 = vmatpush.msra.mxu0 %v306
        %2128 = vmatpush.msra.mxu0 %v305
        %2129 = vmatpush.msra.mxu0 %v304
        %2130 = vmatpush.msra.mxu0 %v303
        %2131 = vmatpush.msra.mxu0 %v302
        %2132 = vmatpush.msra.mxu0 %v301
        %2133 = vmatpush.msra.mxu0 %v300
        %2134 = vmatpush.msra.mxu0 %v299
        %2135 = vmatpush.msra.mxu0 %v298
        %2136 = vmatpush.msra.mxu0 %v297
        %2137 = vmatpush.msra.mxu0 %v296
        %2138 = vmatpush.msra.mxu0 %v295
        %2139 = vmatpush.msra.mxu0 %v294
        %2140 = vmatpush.msra.mxu0 %v293
        %2141 = vmatpush.msra.mxu0 %v292
        %2142 = vmatmul.f32.gmra.mxu0 %v2122
        %v2143 = vpop.f32.mrf.mxu0
        %v2144 = vadd.f32 0.0, %v2143
        %2145 = vmatmul.f32.gmra.mxu0 %v2123
        %v2146 = vpop.f32.mrf.mxu0
        %v2147 = vadd.f32 0.0, %v2146
        %2148 = vmatmul.f32.gmra.mxu0 %v2124
        %v2149 = vpop.f32.mrf.mxu0
        %v2150 = vadd.f32 0.0, %v2149
        %2151 = vmatmul.f32.gmra.mxu0 %v2125
        %v2152 = vpop.f32.mrf.mxu0
        %v2153 = vadd.f32 0.0, %v2152
        %2154 = vdwg.mxu0
        %v2155 = vadd.f32 %v2099, %v2144
        %v2156 = vadd.f32 %v2100, %v2147
        %v2157 = vadd.f32 %v2101, %v2150
        %v2158 = vadd.f32 %v2102, %v2153
        %2159 = vmatpush.msra.mxu0 %v307
        %2160 = vmatpush.msra.mxu0 %v306
        %2161 = vmatpush.msra.mxu0 %v305
        %2162 = vmatpush.msra.mxu0 %v304
        %2163 = vmatpush.msra.mxu0 %v303
        %2164 = vmatpush.msra.mxu0 %v302
        %2165 = vmatpush.msra.mxu0 %v301
        %2166 = vmatpush.msra.mxu0 %v300
        %2167 = vmatpush.msra.mxu0 %v299
        %2168 = vmatpush.msra.mxu0 %v298
        %2169 = vmatpush.msra.mxu0 %v297
        %2170 = vmatpush.msra.mxu0 %v296
        %2171 = vmatpush.msra.mxu0 %v295
        %2172 = vmatpush.msra.mxu0 %v294
        %2173 = vmatpush.msra.mxu0 %v293
        %2174 = vmatpush.msra.mxu0 %v292
        %2175 = vmatmul.f32.gmra.mxu0 %v2155
        %v2176 = vpop.f32.mrf.mxu0
        %v2177 = vadd.f32 0.0, %v2176
        %2178 = vmatmul.f32.gmra.mxu0 %v2156
        %v2179 = vpop.f32.mrf.mxu0
        %v2180 = vadd.f32 0.0, %v2179
        %2181 = vmatmul.f32.gmra.mxu0 %v2157
        %v2182 = vpop.f32.mrf.mxu0
        %v2183 = vadd.f32 0.0, %v2182
        %2184 = vmatmul.f32.gmra.mxu0 %v2158
        %v2185 = vpop.f32.mrf.mxu0
        %v2186 = vadd.f32 0.0, %v2185
        %2187 = vdwg.mxu0
        %v2188 = vadd.f32 %v2076, %v2177
        %v2189 = vadd.f32 %v2077, %v2180
        %v2190 = vadd.f32 %v2078, %v2183
        %v2191 = vadd.f32 %v2079, %v2186
        %v2192 = vadd.f32 %v2188, %v770
        %v2193 = vadd.f32 %v2189, %v775
        %v2194 = vadd.f32 %v2190, %v780
        %v2195 = vadd.f32 %v2191, %v785
        %v2196 = vmax.f32 %v2192, 0.0
        %v2197 = vmax.f32 %v2193, 0.0
        %v2198 = vmax.f32 %v2194, 0.0
        %v2199 = vmax.f32 %v2195, 0.0
        %v2200 = vperm.slane %v291, 5
        %v2201 = vmul.f32 %v2196, %v2200
        %v2202 = vmul.f32 %v2197, %v2200
        %v2203 = vmul.f32 %v2198, %v2200
        %v2204 = vmul.f32 %v2199, %v2200
        %2205 = vadd.xlane.f32.xlu0 %v2201
        %v2206 = vpop.xlane.xlu0 %2205
        %2207 = vadd.xlane.f32.xlu0 %v2202
        %v2208 = vpop.xlane.xlu0 %2207
        %2209 = vadd.xlane.f32.xlu0 %v2203
        %v2210 = vpop.xlane.xlu0 %2209
        %2211 = vadd.xlane.f32.xlu0 %v2204
        %v2212 = vpop.xlane.xlu0 %2211
        %v2213 = vadd.f32 %v1932, %v2206
        %v2214 = vadd.f32 %v1933, %v2208
        %v2215 = vadd.f32 %v1934, %v2210
        %v2216 = vadd.f32 %v1935, %v2212
        %2217 = vmatpush.bf16.msra.mxu0 0
        %2218 = vmatpush.bf16.msra.mxu0 0
        %2219 = vmatpush.bf16.msra.mxu0 0
        %2220 = vmatpush.bf16.msra.mxu0 0
        %2221 = vmatpush.bf16.msra.mxu0 0
        %2222 = vmatpush.bf16.msra.mxu0 0
        %2223 = vmatpush.bf16.msra.mxu0 0
        %2224 = vmatpush.bf16.msra.mxu0 %v2055
        %2225 = vmatmul.bf16.gmra.mxu0 %v346
        %v2226 = vpop.f32.mrf.mxu0
        %v2227 = vadd.f32 0.0, %v2226
        %v2228 = vpop.f32.mrf.mxu0
        %v2229 = vadd.f32 0.0, %v2228
        %2230 = vmatmul.bf16.gmra.mxu0 %v349
        %v2231 = vpop.f32.mrf.mxu0
        %v2232 = vadd.f32 0.0, %v2231
        %v2233 = vpop.f32.mrf.mxu0
        %v2234 = vadd.f32 0.0, %v2233
        %2235 = vdwg.mxu0
        %2236 = vmatpush.bf16.msra.mxu0 0
        %2237 = vmatpush.bf16.msra.mxu0 0
        %2238 = vmatpush.bf16.msra.mxu0 0
        %2239 = vmatpush.bf16.msra.mxu0 0
        %2240 = vmatpush.bf16.msra.mxu0 0
        %2241 = vmatpush.bf16.msra.mxu0 0
        %2242 = vmatpush.bf16.msra.mxu0 0
        %2243 = vmatpush.bf16.msra.mxu0 %v1774
        %2244 = vmatmul.bf16.gmra.mxu0 %v385
        %v2245 = vpop.f32.mrf.mxu0
        %v2246 = vadd.f32 %v2227, %v2245
        %v2247 = vpop.f32.mrf.mxu0
        %v2248 = vadd.f32 %v2229, %v2247
        %2249 = vmatmul.bf16.gmra.mxu0 %v388
        %v2250 = vpop.f32.mrf.mxu0
        %v2251 = vadd.f32 %v2232, %v2250
        %v2252 = vpop.f32.mrf.mxu0
        %v2253 = vadd.f32 %v2234, %v2252
        %2254 = vdwg.mxu0
        %2255 = vmatpush.bf16.msra.mxu0 0
        %2256 = vmatpush.bf16.msra.mxu0 0
        %2257 = vmatpush.bf16.msra.mxu0 0
        %2258 = vmatpush.bf16.msra.mxu0 0
        %2259 = vmatpush.bf16.msra.mxu0 0
        %2260 = vmatpush.bf16.msra.mxu0 0
        %2261 = vmatpush.bf16.msra.mxu0 0
        %2262 = vmatpush.bf16.msra.mxu0 %v2055
        %2263 = vmatmul.bf16.gmra.mxu0 %v428
        %v2264 = vpop.f32.mrf.mxu0
        %v2265 = vadd.f32 0.0, %v2264
        %v2266 = vpop.f32.mrf.mxu0
        %v2267 = vadd.f32 0.0, %v2266
        %2268 = vmatmul.bf16.gmra.mxu0 %v431
        %v2269 = vpop.f32.mrf.mxu0
        %v2270 = vadd.f32 0.0, %v2269
        %v2271 = vpop.f32.mrf.mxu0
        %v2272 = vadd.f32 0.0, %v2271
        %2273 = vdwg.mxu0
        %2274 = vmatpush.bf16.msra.mxu0 0
        %2275 = vmatpush.bf16.msra.mxu0 0
        %2276 = vmatpush.bf16.msra.mxu0 0
        %2277 = vmatpush.bf16.msra.mxu0 0
        %2278 = vmatpush.bf16.msra.mxu0 0
        %2279 = vmatpush.bf16.msra.mxu0 0
        %2280 = vmatpush.bf16.msra.mxu0 0
        %2281 = vmatpush.bf16.msra.mxu0 %v1774
        %2282 = vmatmul.bf16.gmra.mxu0 %v463
        %v2283 = vpop.f32.mrf.mxu0
        %v2284 = vadd.f32 %v2265, %v2283
        %v2285 = vpop.f32.mrf.mxu0
        %v2286 = vadd.f32 %v2267, %v2285
        %2287 = vmatmul.bf16.gmra.mxu0 %v466
        %v2288 = vpop.f32.mrf.mxu0
        %v2289 = vadd.f32 %v2270, %v2288
        %v2290 = vpop.f32.mrf.mxu0
        %v2291 = vadd.f32 %v2272, %v2290
        %2292 = vdwg.mxu0
        %2293 = vmatpush.bf16.msra.mxu0 0
        %2294 = vmatpush.bf16.msra.mxu0 0
        %2295 = vmatpush.bf16.msra.mxu0 0
        %2296 = vmatpush.bf16.msra.mxu0 0
        %2297 = vmatpush.bf16.msra.mxu0 0
        %2298 = vmatpush.bf16.msra.mxu0 0
        %2299 = vmatpush.bf16.msra.mxu0 0
        %2300 = vmatpush.bf16.msra.mxu0 %v2055
        %2301 = vmatmul.bf16.gmra.mxu0 %v503
        %v2302 = vpop.f32.mrf.mxu0
        %v2303 = vadd.f32 0.0, %v2302
        %v2304 = vpop.f32.mrf.mxu0
        %v2305 = vadd.f32 0.0, %v2304
        %2306 = vmatmul.bf16.gmra.mxu0 %v506
        %v2307 = vpop.f32.mrf.mxu0
        %v2308 = vadd.f32 0.0, %v2307
        %v2309 = vpop.f32.mrf.mxu0
        %v2310 = vadd.f32 0.0, %v2309
        %2311 = vdwg.mxu0
        %2312 = vmatpush.bf16.msra.mxu0 0
        %2313 = vmatpush.bf16.msra.mxu0 0
        %2314 = vmatpush.bf16.msra.mxu0 0
        %2315 = vmatpush.bf16.msra.mxu0 0
        %2316 = vmatpush.bf16.msra.mxu0 0
        %2317 = vmatpush.bf16.msra.mxu0 0
        %2318 = vmatpush.bf16.msra.mxu0 0
        %2319 = vmatpush.bf16.msra.mxu0 %v1774
        %2320 = vmatmul.bf16.gmra.mxu0 %v538
        %v2321 = vpop.f32.mrf.mxu0
        %v2322 = vadd.f32 %v2303, %v2321
        %v2323 = vpop.f32.mrf.mxu0
        %v2324 = vadd.f32 %v2305, %v2323
        %2325 = vmatmul.bf16.gmra.mxu0 %v541
        %v2326 = vpop.f32.mrf.mxu0
        %v2327 = vadd.f32 %v2308, %v2326
        %v2328 = vpop.f32.mrf.mxu0
        %v2329 = vadd.f32 %v2310, %v2328
        %2330 = vdwg.mxu0
        %s2331 = sadd.s32 %s286, 8
        %s2332 = smul.addr %s2331, 2
        %s2333 = scalar_lea.vmem %s235, %s2332 [#allocation3]
        %v2334 = vld [vmem:[%s2333] sm:$0x3]
        %v2336 = vsel %vm351, %v2334, 0
        %2338 = vmatpush.bf16.msra.mxu0 0
        %2339 = vmatpush.bf16.msra.mxu0 0
        %2340 = vmatpush.bf16.msra.mxu0 0
        %2341 = vmatpush.bf16.msra.mxu0 0
        %2342 = vmatpush.bf16.msra.mxu0 0
        %2343 = vmatpush.bf16.msra.mxu0 0
        %2344 = vmatpush.bf16.msra.mxu0 0
        %2345 = vmatpush.bf16.msra.mxu0 %v2336
        %2346 = vmatmul.bf16.gmra.mxu0 %v582
        %v2347 = vpop.f32.mrf.mxu0
        %v2348 = vadd.f32 0.0, %v2347
        %v2349 = vpop.f32.mrf.mxu0
        %v2350 = vadd.f32 0.0, %v2349
        %2351 = vmatmul.bf16.gmra.mxu0 %v585
        %v2352 = vpop.f32.mrf.mxu0
        %v2353 = vadd.f32 0.0, %v2352
        %v2354 = vpop.f32.mrf.mxu0
        %v2355 = vadd.f32 0.0, %v2354
        %2356 = vdwg.mxu0
        %v2357 = vadd.f32 %v2246, %v2348
        %v2358 = vadd.f32 %v2248, %v2350
        %v2359 = vadd.f32 %v2251, %v2353
        %v2360 = vadd.f32 %v2253, %v2355
        %2361 = vmatpush.bf16.msra.mxu0 0
        %2362 = vmatpush.bf16.msra.mxu0 0
        %2363 = vmatpush.bf16.msra.mxu0 0
        %2364 = vmatpush.bf16.msra.mxu0 0
        %2365 = vmatpush.bf16.msra.mxu0 0
        %2366 = vmatpush.bf16.msra.mxu0 0
        %2367 = vmatpush.bf16.msra.mxu0 0
        %2368 = vmatpush.bf16.msra.mxu0 %v2336
        %2369 = vmatmul.bf16.gmra.mxu0 %v629
        %v2370 = vpop.f32.mrf.mxu0
        %v2371 = vadd.f32 0.0, %v2370
        %v2372 = vpop.f32.mrf.mxu0
        %v2373 = vadd.f32 0.0, %v2372
        %2374 = vmatmul.bf16.gmra.mxu0 %v632
        %v2375 = vpop.f32.mrf.mxu0
        %v2376 = vadd.f32 0.0, %v2375
        %v2377 = vpop.f32.mrf.mxu0
        %v2378 = vadd.f32 0.0, %v2377
        %2379 = vdwg.mxu0
        %v2380 = vadd.f32 %v2284, %v2371
        %v2381 = vadd.f32 %v2286, %v2373
        %v2382 = vadd.f32 %v2289, %v2376
        %v2383 = vadd.f32 %v2291, %v2378
        %2384 = vmatpush.bf16.msra.mxu0 0
        %2385 = vmatpush.bf16.msra.mxu0 0
        %2386 = vmatpush.bf16.msra.mxu0 0
        %2387 = vmatpush.bf16.msra.mxu0 0
        %2388 = vmatpush.bf16.msra.mxu0 0
        %2389 = vmatpush.bf16.msra.mxu0 0
        %2390 = vmatpush.bf16.msra.mxu0 0
        %2391 = vmatpush.bf16.msra.mxu0 %v2336
        %2392 = vmatmul.bf16.gmra.mxu0 %v673
        %v2393 = vpop.f32.mrf.mxu0
        %v2394 = vadd.f32 0.0, %v2393
        %v2395 = vpop.f32.mrf.mxu0
        %v2396 = vadd.f32 0.0, %v2395
        %2397 = vmatmul.bf16.gmra.mxu0 %v676
        %v2398 = vpop.f32.mrf.mxu0
        %v2399 = vadd.f32 0.0, %v2398
        %v2400 = vpop.f32.mrf.mxu0
        %v2401 = vadd.f32 0.0, %v2400
        %2402 = vdwg.mxu0
        %v2403 = vadd.f32 %v2322, %v2394
        %v2404 = vadd.f32 %v2324, %v2396
        %v2405 = vadd.f32 %v2327, %v2399
        %v2406 = vadd.f32 %v2329, %v2401
        %2407 = vmatpush.msra.mxu0 %v307
        %2408 = vmatpush.msra.mxu0 %v306
        %2409 = vmatpush.msra.mxu0 %v305
        %2410 = vmatpush.msra.mxu0 %v304
        %2411 = vmatpush.msra.mxu0 %v303
        %2412 = vmatpush.msra.mxu0 %v302
        %2413 = vmatpush.msra.mxu0 %v301
        %2414 = vmatpush.msra.mxu0 %v300
        %2415 = vmatpush.msra.mxu0 %v299
        %2416 = vmatpush.msra.mxu0 %v298
        %2417 = vmatpush.msra.mxu0 %v297
        %2418 = vmatpush.msra.mxu0 %v296
        %2419 = vmatpush.msra.mxu0 %v295
        %2420 = vmatpush.msra.mxu0 %v294
        %2421 = vmatpush.msra.mxu0 %v293
        %2422 = vmatpush.msra.mxu0 %v292
        %2423 = vmatmul.f32.gmra.mxu0 %v2403
        %v2424 = vpop.f32.mrf.mxu0
        %v2425 = vadd.f32 0.0, %v2424
        %2426 = vmatmul.f32.gmra.mxu0 %v2404
        %v2427 = vpop.f32.mrf.mxu0
        %v2428 = vadd.f32 0.0, %v2427
        %2429 = vmatmul.f32.gmra.mxu0 %v2405
        %v2430 = vpop.f32.mrf.mxu0
        %v2431 = vadd.f32 0.0, %v2430
        %2432 = vmatmul.f32.gmra.mxu0 %v2406
        %v2433 = vpop.f32.mrf.mxu0
        %v2434 = vadd.f32 0.0, %v2433
        %2435 = vdwg.mxu0
        %v2436 = vadd.f32 %v2380, %v2425
        %v2437 = vadd.f32 %v2381, %v2428
        %v2438 = vadd.f32 %v2382, %v2431
        %v2439 = vadd.f32 %v2383, %v2434
        %2440 = vmatpush.msra.mxu0 %v307
        %2441 = vmatpush.msra.mxu0 %v306
        %2442 = vmatpush.msra.mxu0 %v305
        %2443 = vmatpush.msra.mxu0 %v304
        %2444 = vmatpush.msra.mxu0 %v303
        %2445 = vmatpush.msra.mxu0 %v302
        %2446 = vmatpush.msra.mxu0 %v301
        %2447 = vmatpush.msra.mxu0 %v300
        %2448 = vmatpush.msra.mxu0 %v299
        %2449 = vmatpush.msra.mxu0 %v298
        %2450 = vmatpush.msra.mxu0 %v297
        %2451 = vmatpush.msra.mxu0 %v296
        %2452 = vmatpush.msra.mxu0 %v295
        %2453 = vmatpush.msra.mxu0 %v294
        %2454 = vmatpush.msra.mxu0 %v293
        %2455 = vmatpush.msra.mxu0 %v292
        %2456 = vmatmul.f32.gmra.mxu0 %v2436
        %v2457 = vpop.f32.mrf.mxu0
        %v2458 = vadd.f32 0.0, %v2457
        %2459 = vmatmul.f32.gmra.mxu0 %v2437
        %v2460 = vpop.f32.mrf.mxu0
        %v2461 = vadd.f32 0.0, %v2460
        %2462 = vmatmul.f32.gmra.mxu0 %v2438
        %v2463 = vpop.f32.mrf.mxu0
        %v2464 = vadd.f32 0.0, %v2463
        %2465 = vmatmul.f32.gmra.mxu0 %v2439
        %v2466 = vpop.f32.mrf.mxu0
        %v2467 = vadd.f32 0.0, %v2466
        %2468 = vdwg.mxu0
        %v2469 = vadd.f32 %v2357, %v2458
        %v2470 = vadd.f32 %v2358, %v2461
        %v2471 = vadd.f32 %v2359, %v2464
        %v2472 = vadd.f32 %v2360, %v2467
        %v2473 = vadd.f32 %v2469, %v770
        %v2474 = vadd.f32 %v2470, %v775
        %v2475 = vadd.f32 %v2471, %v780
        %v2476 = vadd.f32 %v2472, %v785
        %v2477 = vmax.f32 %v2473, 0.0
        %v2478 = vmax.f32 %v2474, 0.0
        %v2479 = vmax.f32 %v2475, 0.0
        %v2480 = vmax.f32 %v2476, 0.0
        %v2481 = vperm.slane %v291, 6
        %v2482 = vmul.f32 %v2477, %v2481
        %v2483 = vmul.f32 %v2478, %v2481
        %v2484 = vmul.f32 %v2479, %v2481
        %v2485 = vmul.f32 %v2480, %v2481
        %2486 = vadd.xlane.f32.xlu0 %v2482
        %v2487 = vpop.xlane.xlu0 %2486
        %2488 = vadd.xlane.f32.xlu0 %v2483
        %v2489 = vpop.xlane.xlu0 %2488
        %2490 = vadd.xlane.f32.xlu0 %v2484
        %v2491 = vpop.xlane.xlu0 %2490
        %2492 = vadd.xlane.f32.xlu0 %v2485
        %v2493 = vpop.xlane.xlu0 %2492
        %v2494 = vadd.f32 %v2213, %v2487
        %v2495 = vadd.f32 %v2214, %v2489
        %v2496 = vadd.f32 %v2215, %v2491
        %v2497 = vadd.f32 %v2216, %v2493
        %2498 = vmatpush.bf16.msra.mxu0 0
        %2499 = vmatpush.bf16.msra.mxu0 0
        %2500 = vmatpush.bf16.msra.mxu0 0
        %2501 = vmatpush.bf16.msra.mxu0 0
        %2502 = vmatpush.bf16.msra.mxu0 0
        %2503 = vmatpush.bf16.msra.mxu0 0
        %2504 = vmatpush.bf16.msra.mxu0 0
        %2505 = vmatpush.bf16.msra.mxu0 %v2336
        %2506 = vmatmul.bf16.gmra.mxu0 %v346
        %v2507 = vpop.f32.mrf.mxu0
        %v2508 = vadd.f32 0.0, %v2507
        %v2509 = vpop.f32.mrf.mxu0
        %v2510 = vadd.f32 0.0, %v2509
        %2511 = vmatmul.bf16.gmra.mxu0 %v349
        %v2512 = vpop.f32.mrf.mxu0
        %v2513 = vadd.f32 0.0, %v2512
        %v2514 = vpop.f32.mrf.mxu0
        %v2515 = vadd.f32 0.0, %v2514
        %2516 = vdwg.mxu0
        %2517 = vmatpush.bf16.msra.mxu0 0
        %2518 = vmatpush.bf16.msra.mxu0 0
        %2519 = vmatpush.bf16.msra.mxu0 0
        %2520 = vmatpush.bf16.msra.mxu0 0
        %2521 = vmatpush.bf16.msra.mxu0 0
        %2522 = vmatpush.bf16.msra.mxu0 0
        %2523 = vmatpush.bf16.msra.mxu0 0
        %2524 = vmatpush.bf16.msra.mxu0 %v2055
        %2525 = vmatmul.bf16.gmra.mxu0 %v385
        %v2526 = vpop.f32.mrf.mxu0
        %v2527 = vadd.f32 %v2508, %v2526
        %v2528 = vpop.f32.mrf.mxu0
        %v2529 = vadd.f32 %v2510, %v2528
        %2530 = vmatmul.bf16.gmra.mxu0 %v388
        %v2531 = vpop.f32.mrf.mxu0
        %v2532 = vadd.f32 %v2513, %v2531
        %v2533 = vpop.f32.mrf.mxu0
        %v2534 = vadd.f32 %v2515, %v2533
        %2535 = vdwg.mxu0
        %2536 = vmatpush.bf16.msra.mxu0 0
        %2537 = vmatpush.bf16.msra.mxu0 0
        %2538 = vmatpush.bf16.msra.mxu0 0
        %2539 = vmatpush.bf16.msra.mxu0 0
        %2540 = vmatpush.bf16.msra.mxu0 0
        %2541 = vmatpush.bf16.msra.mxu0 0
        %2542 = vmatpush.bf16.msra.mxu0 0
        %2543 = vmatpush.bf16.msra.mxu0 %v2336
        %2544 = vmatmul.bf16.gmra.mxu0 %v428
        %v2545 = vpop.f32.mrf.mxu0
        %v2546 = vadd.f32 0.0, %v2545
        %v2547 = vpop.f32.mrf.mxu0
        %v2548 = vadd.f32 0.0, %v2547
        %2549 = vmatmul.bf16.gmra.mxu0 %v431
        %v2550 = vpop.f32.mrf.mxu0
        %v2551 = vadd.f32 0.0, %v2550
        %v2552 = vpop.f32.mrf.mxu0
        %v2553 = vadd.f32 0.0, %v2552
        %2554 = vdwg.mxu0
        %2555 = vmatpush.bf16.msra.mxu0 0
        %2556 = vmatpush.bf16.msra.mxu0 0
        %2557 = vmatpush.bf16.msra.mxu0 0
        %2558 = vmatpush.bf16.msra.mxu0 0
        %2559 = vmatpush.bf16.msra.mxu0 0
        %2560 = vmatpush.bf16.msra.mxu0 0
        %2561 = vmatpush.bf16.msra.mxu0 0
        %2562 = vmatpush.bf16.msra.mxu0 %v2055
        %2563 = vmatmul.bf16.gmra.mxu0 %v463
        %v2564 = vpop.f32.mrf.mxu0
        %v2565 = vadd.f32 %v2546, %v2564
        %v2566 = vpop.f32.mrf.mxu0
        %v2567 = vadd.f32 %v2548, %v2566
        %2568 = vmatmul.bf16.gmra.mxu0 %v466
        %v2569 = vpop.f32.mrf.mxu0
        %v2570 = vadd.f32 %v2551, %v2569
        %v2571 = vpop.f32.mrf.mxu0
        %v2572 = vadd.f32 %v2553, %v2571
        %2573 = vdwg.mxu0
        %2574 = vmatpush.bf16.msra.mxu0 0
        %2575 = vmatpush.bf16.msra.mxu0 0
        %2576 = vmatpush.bf16.msra.mxu0 0
        %2577 = vmatpush.bf16.msra.mxu0 0
        %2578 = vmatpush.bf16.msra.mxu0 0
        %2579 = vmatpush.bf16.msra.mxu0 0
        %2580 = vmatpush.bf16.msra.mxu0 0
        %2581 = vmatpush.bf16.msra.mxu0 %v2336
        %2582 = vmatmul.bf16.gmra.mxu0 %v503
        %v2583 = vpop.f32.mrf.mxu0
        %v2584 = vadd.f32 0.0, %v2583
        %v2585 = vpop.f32.mrf.mxu0
        %v2586 = vadd.f32 0.0, %v2585
        %2587 = vmatmul.bf16.gmra.mxu0 %v506
        %v2588 = vpop.f32.mrf.mxu0
        %v2589 = vadd.f32 0.0, %v2588
        %v2590 = vpop.f32.mrf.mxu0
        %v2591 = vadd.f32 0.0, %v2590
        %2592 = vdwg.mxu0
        %2593 = vmatpush.bf16.msra.mxu0 0
        %2594 = vmatpush.bf16.msra.mxu0 0
        %2595 = vmatpush.bf16.msra.mxu0 0
        %2596 = vmatpush.bf16.msra.mxu0 0
        %2597 = vmatpush.bf16.msra.mxu0 0
        %2598 = vmatpush.bf16.msra.mxu0 0
        %2599 = vmatpush.bf16.msra.mxu0 0
        %2600 = vmatpush.bf16.msra.mxu0 %v2055
        %2601 = vmatmul.bf16.gmra.mxu0 %v538
        %v2602 = vpop.f32.mrf.mxu0
        %v2603 = vadd.f32 %v2584, %v2602
        %v2604 = vpop.f32.mrf.mxu0
        %v2605 = vadd.f32 %v2586, %v2604
        %2606 = vmatmul.bf16.gmra.mxu0 %v541
        %v2607 = vpop.f32.mrf.mxu0
        %v2608 = vadd.f32 %v2589, %v2607
        %v2609 = vpop.f32.mrf.mxu0
        %v2610 = vadd.f32 %v2591, %v2609
        %2611 = vdwg.mxu0
        %s2612 = sadd.s32 %s286, 9
        %s2613 = smul.addr %s2612, 2
        %s2614 = scalar_lea.vmem %s235, %s2613 [#allocation3]
        %v2615 = vld [vmem:[%s2614] sm:$0x3]
        %v2617 = vsel %vm351, %v2615, 0
        %2619 = vmatpush.bf16.msra.mxu0 0
        %2620 = vmatpush.bf16.msra.mxu0 0
        %2621 = vmatpush.bf16.msra.mxu0 0
        %2622 = vmatpush.bf16.msra.mxu0 0
        %2623 = vmatpush.bf16.msra.mxu0 0
        %2624 = vmatpush.bf16.msra.mxu0 0
        %2625 = vmatpush.bf16.msra.mxu0 0
        %2626 = vmatpush.bf16.msra.mxu0 %v2617
        %2627 = vmatmul.bf16.gmra.mxu0 %v582
        %v2628 = vpop.f32.mrf.mxu0
        %v2629 = vadd.f32 0.0, %v2628
        %v2630 = vpop.f32.mrf.mxu0
        %v2631 = vadd.f32 0.0, %v2630
        %2632 = vmatmul.bf16.gmra.mxu0 %v585
        %v2633 = vpop.f32.mrf.mxu0
        %v2634 = vadd.f32 0.0, %v2633
        %v2635 = vpop.f32.mrf.mxu0
        %v2636 = vadd.f32 0.0, %v2635
        %2637 = vdwg.mxu0
        %v2638 = vadd.f32 %v2527, %v2629
        %v2639 = vadd.f32 %v2529, %v2631
        %v2640 = vadd.f32 %v2532, %v2634
        %v2641 = vadd.f32 %v2534, %v2636
        %2642 = vmatpush.bf16.msra.mxu0 0
        %2643 = vmatpush.bf16.msra.mxu0 0
        %2644 = vmatpush.bf16.msra.mxu0 0
        %2645 = vmatpush.bf16.msra.mxu0 0
        %2646 = vmatpush.bf16.msra.mxu0 0
        %2647 = vmatpush.bf16.msra.mxu0 0
        %2648 = vmatpush.bf16.msra.mxu0 0
        %2649 = vmatpush.bf16.msra.mxu0 %v2617
        %2650 = vmatmul.bf16.gmra.mxu0 %v629
        %v2651 = vpop.f32.mrf.mxu0
        %v2652 = vadd.f32 0.0, %v2651
        %v2653 = vpop.f32.mrf.mxu0
        %v2654 = vadd.f32 0.0, %v2653
        %2655 = vmatmul.bf16.gmra.mxu0 %v632
        %v2656 = vpop.f32.mrf.mxu0
        %v2657 = vadd.f32 0.0, %v2656
        %v2658 = vpop.f32.mrf.mxu0
        %v2659 = vadd.f32 0.0, %v2658
        %2660 = vdwg.mxu0
        %v2661 = vadd.f32 %v2565, %v2652
        %v2662 = vadd.f32 %v2567, %v2654
        %v2663 = vadd.f32 %v2570, %v2657
        %v2664 = vadd.f32 %v2572, %v2659
        %2665 = vmatpush.bf16.msra.mxu0 0
        %2666 = vmatpush.bf16.msra.mxu0 0
        %2667 = vmatpush.bf16.msra.mxu0 0
        %2668 = vmatpush.bf16.msra.mxu0 0
        %2669 = vmatpush.bf16.msra.mxu0 0
        %2670 = vmatpush.bf16.msra.mxu0 0
        %2671 = vmatpush.bf16.msra.mxu0 0
        %2672 = vmatpush.bf16.msra.mxu0 %v2617
        %2673 = vmatmul.bf16.gmra.mxu0 %v673
        %v2674 = vpop.f32.mrf.mxu0
        %v2675 = vadd.f32 0.0, %v2674
        %v2676 = vpop.f32.mrf.mxu0
        %v2677 = vadd.f32 0.0, %v2676
        %2678 = vmatmul.bf16.gmra.mxu0 %v676
        %v2679 = vpop.f32.mrf.mxu0
        %v2680 = vadd.f32 0.0, %v2679
        %v2681 = vpop.f32.mrf.mxu0
        %v2682 = vadd.f32 0.0, %v2681
        %2683 = vdwg.mxu0
        %v2684 = vadd.f32 %v2603, %v2675
        %v2685 = vadd.f32 %v2605, %v2677
        %v2686 = vadd.f32 %v2608, %v2680
        %v2687 = vadd.f32 %v2610, %v2682
        %2688 = vmatpush.msra.mxu0 %v307
        %2689 = vmatpush.msra.mxu0 %v306
        %2690 = vmatpush.msra.mxu0 %v305
        %2691 = vmatpush.msra.mxu0 %v304
        %2692 = vmatpush.msra.mxu0 %v303
        %2693 = vmatpush.msra.mxu0 %v302
        %2694 = vmatpush.msra.mxu0 %v301
        %2695 = vmatpush.msra.mxu0 %v300
        %2696 = vmatpush.msra.mxu0 %v299
        %2697 = vmatpush.msra.mxu0 %v298
        %2698 = vmatpush.msra.mxu0 %v297
        %2699 = vmatpush.msra.mxu0 %v296
        %2700 = vmatpush.msra.mxu0 %v295
        %2701 = vmatpush.msra.mxu0 %v294
        %2702 = vmatpush.msra.mxu0 %v293
        %2703 = vmatpush.msra.mxu0 %v292
        %2704 = vmatmul.f32.gmra.mxu0 %v2684
        %v2705 = vpop.f32.mrf.mxu0
        %v2706 = vadd.f32 0.0, %v2705
        %2707 = vmatmul.f32.gmra.mxu0 %v2685
        %v2708 = vpop.f32.mrf.mxu0
        %v2709 = vadd.f32 0.0, %v2708
        %2710 = vmatmul.f32.gmra.mxu0 %v2686
        %v2711 = vpop.f32.mrf.mxu0
        %v2712 = vadd.f32 0.0, %v2711
        %2713 = vmatmul.f32.gmra.mxu0 %v2687
        %v2714 = vpop.f32.mrf.mxu0
        %v2715 = vadd.f32 0.0, %v2714
        %2716 = vdwg.mxu0
        %v2717 = vadd.f32 %v2661, %v2706
        %v2718 = vadd.f32 %v2662, %v2709
        %v2719 = vadd.f32 %v2663, %v2712
        %v2720 = vadd.f32 %v2664, %v2715
        %2721 = vmatpush.msra.mxu0 %v307
        %2722 = vmatpush.msra.mxu0 %v306
        %2723 = vmatpush.msra.mxu0 %v305
        %2724 = vmatpush.msra.mxu0 %v304
        %2725 = vmatpush.msra.mxu0 %v303
        %2726 = vmatpush.msra.mxu0 %v302
        %2727 = vmatpush.msra.mxu0 %v301
        %2728 = vmatpush.msra.mxu0 %v300
        %2729 = vmatpush.msra.mxu0 %v299
        %2730 = vmatpush.msra.mxu0 %v298
        %2731 = vmatpush.msra.mxu0 %v297
        %2732 = vmatpush.msra.mxu0 %v296
        %2733 = vmatpush.msra.mxu0 %v295
        %2734 = vmatpush.msra.mxu0 %v294
        %2735 = vmatpush.msra.mxu0 %v293
        %2736 = vmatpush.msra.mxu0 %v292
        %2737 = vmatmul.f32.gmra.mxu0 %v2717
        %v2738 = vpop.f32.mrf.mxu0
        %v2739 = vadd.f32 0.0, %v2738
        %2740 = vmatmul.f32.gmra.mxu0 %v2718
        %v2741 = vpop.f32.mrf.mxu0
        %v2742 = vadd.f32 0.0, %v2741
        %2743 = vmatmul.f32.gmra.mxu0 %v2719
        %v2744 = vpop.f32.mrf.mxu0
        %v2745 = vadd.f32 0.0, %v2744
        %2746 = vmatmul.f32.gmra.mxu0 %v2720
        %v2747 = vpop.f32.mrf.mxu0
        %v2748 = vadd.f32 0.0, %v2747
        %2749 = vdwg.mxu0
        %v2750 = vadd.f32 %v2638, %v2739
        %v2751 = vadd.f32 %v2639, %v2742
        %v2752 = vadd.f32 %v2640, %v2745
        %v2753 = vadd.f32 %v2641, %v2748
        %v2754 = vadd.f32 %v2750, %v770
        %v2755 = vadd.f32 %v2751, %v775
        %v2756 = vadd.f32 %v2752, %v780
        %v2757 = vadd.f32 %v2753, %v785
        %v2758 = vmax.f32 %v2754, 0.0
        %v2759 = vmax.f32 %v2755, 0.0
        %v2760 = vmax.f32 %v2756, 0.0
        %v2761 = vmax.f32 %v2757, 0.0
        %v2762 = vperm.slane %v291, 7
        %v2763 = vmul.f32 %v2758, %v2762
        %v2764 = vmul.f32 %v2759, %v2762
        %v2765 = vmul.f32 %v2760, %v2762
        %v2766 = vmul.f32 %v2761, %v2762
        %2767 = vadd.xlane.f32.xlu0 %v2763
        %v2768 = vpop.xlane.xlu0 %2767
        %2769 = vadd.xlane.f32.xlu0 %v2764
        %v2770 = vpop.xlane.xlu0 %2769
        %2771 = vadd.xlane.f32.xlu0 %v2765
        %v2772 = vpop.xlane.xlu0 %2771
        %2773 = vadd.xlane.f32.xlu0 %v2766
        %v2774 = vpop.xlane.xlu0 %2773
        %v2775 = vadd.f32 %v2494, %v2768
        %v2776 = vadd.f32 %v2495, %v2770
        %v2777 = vadd.f32 %v2496, %v2772
        %v2778 = vadd.f32 %v2497, %v2774
        %v2779 = vld [vmem:[#allocation2] sm:$0xff]
        %v2780 = vld [vmem:[#allocation2 + $0x8] sm:$0xff]
        %v2781 = vld [vmem:[#allocation2 + $0x10] sm:$0xff]
        %v2782 = vld [vmem:[#allocation2 + $0x18] sm:$0xff]
        %v2783 = vadd.f32 %v2779, %v2775
        %v2784 = vadd.f32 %v2780, %v2776
        %v2785 = vadd.f32 %v2781, %v2777
        %v2786 = vadd.f32 %v2782, %v2778
        %vm2787 = vcmask 7168
        %2788 = vst.msk [vmem:[#allocation2] sm:$0xff] %vm2787, %v2783
        %2789 = vst.msk [vmem:[#allocation2 + $0x8] sm:$0xff] %vm2787, %v2784
        %2790 = vst.msk [vmem:[#allocation2 + $0x10] sm:$0xff] %vm2787, %v2785
        %2791 = vst.msk [vmem:[#allocation2 + $0x18] sm:$0xff] %vm2787, %v2786
        %p2792 = scmp.eq.s32.totalorder %s24, 1
        // Predicated region
        $region49: #{tpu_custom_call.1} parent=39 // pred_check
          %p2793 = pneg %p2792
        $region50: #{tpu_custom_call.1} parent=39 // pred_check_branch
          %2795 = sbr.rel (%p2793) target = $region52
        $region51: #{tpu_custom_call.1} parent=39 // pred_region
          %v2796 = vld [vmem:[#allocation2] sm:$0xff]
          %v2797 = vld [vmem:[#allocation2 + $0x8] sm:$0xff]
          %v2798 = vld [vmem:[#allocation2 + $0x10] sm:$0xff]
          %v2799 = vld [vmem:[#allocation2 + $0x18] sm:$0xff]
          %v2800 = vmul.f32 %v2796, 0.00390625
          %v2801 = vmul.f32 %v2797, 0.00390625
          %v2802 = vmul.f32 %v2798, 0.00390625
          %v2803 = vmul.f32 %v2799, 0.00390625
          %2804 = vst.msk [vmem:[%s275] sm:$0xff] %vm2787, %v2800
          %2805 = vst.msk [vmem:[%s275 + $0x8] sm:$0xff] %vm2787, %v2801
          %2806 = vst.msk [vmem:[%s275 + $0x10] sm:$0xff] %vm2787, %v2802
          %2807 = vst.msk [vmem:[%s275 + $0x18] sm:$0xff] %vm2787, %v2803
        $region52: #{tpu_custom_call.1} parent=39 // pred_fallthru
          _
        %p2808 = scmp.lt.s32.totalorder %s23, 1
        %s2809 = scalar_select %p2808, %s23, 1
        %s2810 = smul.addr %s2809, 4
        %s2811 = smul.addr %s2810, 8
        %s2812 = scalar_lea.vmem %s5, %s2811
        // Predicated region
        $region53: #{tpu_custom_call.1} parent=39 // pred_check
          %p2813 = pneg %p164
        $region54: #{tpu_custom_call.1} parent=39 // pred_check_branch
          %2815 = sbr.rel (%p2813) target = $region56
        $region55: #{tpu_custom_call.1} parent=39 // pred_region
          _
        $region56: #{tpu_custom_call.1} parent=39 // pred_fallthru
          _
      $region40: #{tpu_custom_call.1} parent=5 // pred_fallthru
        _
      %p2816 = scmp.le.s32.totalorder 2, %s14
      // Predicated region
      $region57: #{tpu_custom_call.1} parent=5 // pred_check
        %p2817 = pneg %p2816
      $region58: #{tpu_custom_call.1} parent=5 // pred_check_branch
        %2819 = sbr.rel (%p2817) target = $region60
      $region59: #{tpu_custom_call.1} parent=5 // pred_region
        %s2820 = ssub.s32 %s14, 2
        // Predicated region
        $region61: #{tpu_custom_call.1} parent=59 // pred_check
          %p2821 = pneg %p170
        $region62: #{tpu_custom_call.1} parent=59 // pred_check_branch
          %2823 = sbr.rel (%p2821) target = $region64
        $region63: #{tpu_custom_call.1} parent=59 // pred_region
          %p2824 = scmp.lt.s32.totalorder %s25, 1
          %s2825 = scalar_select %p2824, %s25, 1
          %s2826 = smul.addr %s2825, 4
          %s2827 = smul.addr %s2826, 8
          %s2828 = scalar_lea.vmem %s5, %s2827
        $region64: #{tpu_custom_call.1} parent=59 // pred_fallthru
          _
      $region60: #{tpu_custom_call.1} parent=5 // pred_fallthru
        _
    $region6: #{tpu_custom_call.1} parent=1 // loop_footer
      %s18 = sadd.s32 1, %s14
    $region7: #{tpu_custom_call.1} parent=1 // loop_footer_branch
      %13 = sbr.rel target = $region3
    $region8: #{tpu_custom_call.1} parent=1 // loop_exit
      _
    %2829 = vsyncpa [#allocation4], 1
    %s2830 = scalar_lea.sflag [#allocation4], 1
    %2831 = vsyncpa %s2830, 1

</llo_original>
